<compile_context>
chip_gen: v6e
topology: v6e:2x2x1
jax: 0.10.0
libtpu: 0.0.40
codegen_flags: <defaults>
</compile_context>

<pallas_src>
import math
from functools import partial

import jax
import jax.numpy as jnp
from jax import lax
from jax.experimental import pallas as pl
from jax.experimental.pallas import tpu as pltpu

D_MODEL = 32
N_HEADS = 4
D_HEAD = D_MODEL // N_HEADS
D_FF = 64
N_LAYERS = 2
VOCAB = 64
VOCAB_PAD = 128          # lane-dense generator output; padded columns get a -1e9 bias
EPS = 1e-6
NEG_INF = -1e9


# ------------------------------ fused kernel ---------------------------------

def _layernorm(x, g, b):
    # Annotated-transformer LayerNorm: a*(x-mean)/(std+eps)+b, unbiased std (torch default).
    mu = jnp.mean(x, axis=-1, keepdims=True)
    var = jnp.sum(jnp.square(x - mu), axis=-1, keepdims=True) / (x.shape[-1] - 1)
    inv = pl.reciprocal(jnp.sqrt(var) + EPS, approx=True)      # EUP, frees VALU slots
    return (x - mu) * inv * g + b


def _fwd_kernel(tok_ref, emb_ref, pe_ref, mask_ref,
                ln1g_ref, ln1b_ref, ln2g_ref, ln2b_ref,
                wqkv_ref, bqkv_ref, wo_ref, bo_ref,
                w1_ref, b1_ref, w2_ref, b2_ref,
                lnfg_ref, lnfb_ref, wgen_ref, bgen_ref,
                out_ref, *, rows):
    R = rows

    # ---- tgt_embed: lane-dense (R, VOCAB) one-hot @ (VOCAB, D) on the MXU ----
    tok = tok_ref[...]                                             # (R, 1) int32
    onehot = (lax.broadcasted_iota(jnp.int32, (R, VOCAB), 1) == tok).astype(jnp.float32)
    x = jnp.dot(onehot, emb_ref[...], preferred_element_type=jnp.float32)   # (R, D)
    x = x * jnp.float32(math.sqrt(D_MODEL)) + pe_ref[...]

    mask_add = mask_ref[...]                                       # (R, R) block-diag causal mask

    for l in range(N_LAYERS):                                      # static unroll
        # ---- sublayer 1: pre-norm fused-QKV MHSA + residual (1/sqrt(d_k) folded into Q) ----
        h = _layernorm(x, ln1g_ref[l], ln1b_ref[l])
        qkv = jnp.dot(h, wqkv_ref[l], preferred_element_type=jnp.float32) + bqkv_ref[l]
        heads = []
        for hh in range(N_HEADS):                                  # static unroll, in-kernel heads
            q = qkv[:, hh * D_HEAD:(hh + 1) * D_HEAD]
            k = qkv[:, D_MODEL + hh * D_HEAD:D_MODEL + (hh + 1) * D_HEAD]
            v = qkv[:, 2 * D_MODEL + hh * D_HEAD:2 * D_MODEL + (hh + 1) * D_HEAD]
            scores = lax.dot_general(q, k, (((1,), (1,)), ((), ())),
                                     preferred_element_type=jnp.float32) + mask_add
            m = jnp.max(scores, axis=-1, keepdims=True)
            p = jnp.exp(scores - m)
            denom = jnp.sum(p, axis=-1, keepdims=True)
            oh = jnp.dot(p, v, preferred_element_type=jnp.float32)
            heads.append(oh * pl.reciprocal(denom, approx=True))   # normalize after PV matmul (EUP)
        o = jnp.concatenate(heads, axis=-1)                        # (R, D_MODEL)
        x = x + jnp.dot(o, wo_ref[l], preferred_element_type=jnp.float32) + bo_ref[l]

        # ---- sublayer 2: pre-norm position-wise feed-forward + residual ----
        h = _layernorm(x, ln2g_ref[l], ln2b_ref[l])
        ff = jnp.maximum(jnp.dot(h, w1_ref[l], preferred_element_type=jnp.float32) + b1_ref[l], 0.0)
        x = x + jnp.dot(ff, w2_ref[l], preferred_element_type=jnp.float32) + b2_ref[l]

    # ---- final LayerNorm + generator (Linear + log_softmax), vocab padded to 128 lanes ----
    xf = _layernorm(x, lnfg_ref[...], lnfb_ref[...])
    logits = jnp.dot(xf, wgen_ref[...], preferred_element_type=jnp.float32) + bgen_ref[...]
    m = jnp.max(logits, axis=-1, keepdims=True)
    s = logits - m
    lse = jnp.log(jnp.sum(jnp.exp(s), axis=-1, keepdims=True))
    out_ref[...] = s - lse


# ------------------------------ parameters -----------------------------------

def init_params(key):
    keys = iter(jax.random.split(key, 64))

    def lin(k, din, dout):
        kw, kb = jax.random.split(k)
        bound = 1.0 / math.sqrt(din)
        w = jax.random.uniform(kw, (din, dout), jnp.float32, -bound, bound)
        b = jax.random.uniform(kb, (dout,), jnp.float32, -bound, bound)
        return w, b

    params = {
        "embed": jax.random.normal(next(keys), (VOCAB, D_MODEL), jnp.float32),
        "layers": [],
        "lnf_g": jnp.ones((D_MODEL,), jnp.float32),
        "lnf_b": jnp.zeros((D_MODEL,), jnp.float32),
    }
    for _ in range(N_LAYERS):
        params["layers"].append({
            "ln1_g": jnp.ones((D_MODEL,), jnp.float32),
            "ln1_b": jnp.zeros((D_MODEL,), jnp.float32),
            "ln2_g": jnp.ones((D_MODEL,), jnp.float32),
            "ln2_b": jnp.zeros((D_MODEL,), jnp.float32),
            "wq": lin(next(keys), D_MODEL, D_MODEL),
            "wk": lin(next(keys), D_MODEL, D_MODEL),
            "wv": lin(next(keys), D_MODEL, D_MODEL),
            "wo": lin(next(keys), D_MODEL, D_MODEL),
            "w1": lin(next(keys), D_MODEL, D_FF),
            "w2": lin(next(keys), D_FF, D_MODEL),
        })
    params["gen"] = lin(next(keys), D_MODEL, VOCAB)
    return params


def pack_params(params):
    """Stack per-layer weights, fuse QKV (scale folded into Q), pad generator to 128 lanes."""
    Ls = params["layers"]
    scale = 1.0 / math.sqrt(D_HEAD)                     # folded into Q weights/bias at pack time
    stack = lambda f: jnp.stack([f(L) for L in Ls])
    packed = {
        "emb": params["embed"],
        "ln1_g": stack(lambda L: L["ln1_g"][None, :]),
        "ln1_b": stack(lambda L: L["ln1_b"][None, :]),
        "ln2_g": stack(lambda L: L["ln2_g"][None, :]),
        "ln2_b": stack(lambda L: L["ln2_b"][None, :]),
        "wqkv": stack(lambda L: jnp.concatenate(
            [L["wq"][0] * scale, L["wk"][0], L["wv"][0]], axis=1)),
        "bqkv": stack(lambda L: jnp.concatenate(
            [L["wq"][1] * scale, L["wk"][1], L["wv"][1]])[None, :]),
        "wo": stack(lambda L: L["wo"][0]),
        "bo": stack(lambda L: L["wo"][1][None, :]),
        "w1": stack(lambda L: L["w1"][0]),
        "b1": stack(lambda L: L["w1"][1][None, :]),
        "w2": stack(lambda L: L["w2"][0]),
        "b2": stack(lambda L: L["w2"][1][None, :]),
        "lnf_g": params["lnf_g"][None, :],
        "lnf_b": params["lnf_b"][None, :],
    }
    wg, bg = params["gen"]
    packed["wgen"] = jnp.zeros((D_MODEL, VOCAB_PAD), jnp.float32).at[:, :VOCAB].set(wg)
    packed["bgen"] = jnp.full((1, VOCAB_PAD), NEG_INF, jnp.float32).at[0, :VOCAB].set(bg)
    return packed


def positional_encoding(seq, d):
    pos = jnp.arange(seq, dtype=jnp.float32)[:, None]
    div = jnp.exp(jnp.arange(0, d, 2, dtype=jnp.float32) * (-math.log(10000.0) / d))
    pe = jnp.zeros((seq, d), jnp.float32)
    pe = pe.at[:, 0::2].set(jnp.sin(pos * div))
    pe = pe.at[:, 1::2].set(jnp.cos(pos * div))
    return pe


# ------------------------------ forward pass ----------------------------------

@jax.jit
def forward(packed, tgt, tgt_mask):
    """Returns lane-padded log-probs of shape (B, S, VOCAB_PAD); consumer slices [:VOCAB] lazily."""
    B, S = tgt.shape
    # Flatten BLOCK_B batch elements into the row dim per grid step; keep a 2-way grid so
    # both v7x TensorCores get work (on v5e/v6e the grid is serial, so fewer steps = less overhead).
    num_blocks = 2 if (B >= 2 and B % 2 == 0) else 1
    block_b = B // num_blocks
    R = block_b * S

    # Constants (folded under jit): positional encoding tiled per batch element in the block,
    # block-diagonal additive mask honoring the provided tgt_mask (0 keep / -1e9 drop).
    pe_block = jnp.tile(positional_encoding(S, D_MODEL), (block_b, 1))         # (R, D)
    base = jnp.where(tgt_mask > 0, 0.0, NEG_INF).astype(jnp.float32)           # (S, S)
    same = jnp.eye(block_b, dtype=bool)
    mask_block = jnp.where(same[:, None, :, None], base[None, :, None, :],
                           NEG_INF).reshape(R, R).astype(jnp.float32)          # (R, R)

    tok_col = tgt.astype(jnp.int32).reshape(B * S, 1)                          # rows = batch-major

    def _full_spec(a):
        zeros = (0,) * a.ndim
        return pl.BlockSpec(a.shape, lambda b: zeros)          # resident, DMA'd once

    operands = (tok_col, packed["emb"], pe_block, mask_block,
                packed["ln1_g"], packed["ln1_b"], packed["ln2_g"], packed["ln2_b"],
                packed["wqkv"], packed["bqkv"], packed["wo"], packed["bo"],
                packed["w1"], packed["b1"], packed["w2"], packed["b2"],
                packed["lnf_g"], packed["lnf_b"], packed["wgen"], packed["bgen"])

    in_specs = [pl.BlockSpec((R, 1), lambda b: (b, 0))] + \
               [_full_spec(a) for a in operands[1:]]

    out_flat = pl.pallas_call(
        partial(_fwd_kernel, rows=R),
        out_shape=jax.ShapeDtypeStruct((B * S, VOCAB_PAD), jnp.float32),
        grid=(num_blocks,),
        in_specs=in_specs,
        out_specs=pl.BlockSpec((R, VOCAB_PAD), lambda b: (b, 0)),
        compiler_params=pltpu.CompilerParams(dimension_semantics=("parallel",)),
    )(*operands)
    return out_flat.reshape(B, S, VOCAB_PAD)


# ---------------------------------- main ---------------------------------------

if __name__ == "__main__":
    key = jax.random.PRNGKey(0)
    kp, kt = jax.random.split(key)
    params = init_params(kp)
    packed = pack_params(params)

    B, S = 4, 8
    tgt = jax.random.randint(kt, (B, S), 0, VOCAB, dtype=jnp.int32)
    tgt_mask = jnp.tril(jnp.ones((S, S), dtype=jnp.int32))     # causal / subsequent mask

    out_pad = forward(packed, tgt, tgt_mask)                   # (B, S, 128) lane-padded log-probs
    jax.block_until_ready(out_pad)

    # Lazy consumer-side slice back to the real vocab (outside the hot jitted path).
    log_probs = out_pad[..., :VOCAB]
    assert out_pad.shape == (B, S, VOCAB_PAD) and out_pad.dtype == jnp.float32
    assert log_probs.shape == (B, S, VOCAB)
    assert bool(jnp.all(jnp.isfinite(log_probs)))
    print("KERNEL_OK")
</pallas_src>

<mosaic_0001>
module attributes {stable_mosaic.version = 11 : i64} {
  func.func @_fwd_kernel(%arg0: i32, %arg1: memref<16x1xi32, #tpu.memory_space<vmem>>, %arg2: memref<64x32xf32, #tpu.memory_space<vmem>>, %arg3: memref<16x32xf32, #tpu.memory_space<vmem>>, %arg4: memref<16x16xf32, #tpu.memory_space<vmem>>, %arg5: memref<2x1x32xf32, #tpu.memory_space<vmem>>, %arg6: memref<2x1x32xf32, #tpu.memory_space<vmem>>, %arg7: memref<2x1x32xf32, #tpu.memory_space<vmem>>, %arg8: memref<2x1x32xf32, #tpu.memory_space<vmem>>, %arg9: memref<2x32x96xf32, #tpu.memory_space<vmem>>, %arg10: memref<2x1x96xf32, #tpu.memory_space<vmem>>, %arg11: memref<2x32x32xf32, #tpu.memory_space<vmem>>, %arg12: memref<2x1x32xf32, #tpu.memory_space<vmem>>, %arg13: memref<2x32x64xf32, #tpu.memory_space<vmem>>, %arg14: memref<2x1x64xf32, #tpu.memory_space<vmem>>, %arg15: memref<2x64x32xf32, #tpu.memory_space<vmem>>, %arg16: memref<2x1x32xf32, #tpu.memory_space<vmem>>, %arg17: memref<1x32xf32, #tpu.memory_space<vmem>>, %arg18: memref<1x32xf32, #tpu.memory_space<vmem>>, %arg19: memref<32x128xf32, #tpu.memory_space<vmem>>, %arg20: memref<1x128xf32, #tpu.memory_space<vmem>>, %arg21: memref<16x128xf32, #tpu.memory_space<vmem>>) attributes {dimension_semantics = [#tpu.dimension_semantics<parallel>], iteration_bounds = array<i64: 2>, scalar_prefetch = 0 : i64, scratch_operands = 0 : i64, tpu.core_type = #tpu.core_type<tc>, window_params = [{transform_indices = @transform_0, window_bounds = array<i64: 16, 1>}, {pipeline_mode = #tpu.pipeline_mode<synchronous>, transform_indices = @transform_1, window_bounds = array<i64: 64, 32>}, {pipeline_mode = #tpu.pipeline_mode<synchronous>, transform_indices = @transform_2, window_bounds = array<i64: 16, 32>}, {pipeline_mode = #tpu.pipeline_mode<synchronous>, transform_indices = @transform_3, window_bounds = array<i64: 16, 16>}, {pipeline_mode = #tpu.pipeline_mode<synchronous>, transform_indices = @transform_4, window_bounds = array<i64: 2, 1, 32>}, {pipeline_mode = #tpu.pipeline_mode<synchronous>, transform_indices = @transform_5, window_bounds = array<i64: 2, 1, 32>}, {pipeline_mode = #tpu.pipeline_mode<synchronous>, transform_indices = @transform_6, window_bounds = array<i64: 2, 1, 32>}, {pipeline_mode = #tpu.pipeline_mode<synchronous>, transform_indices = @transform_7, window_bounds = array<i64: 2, 1, 32>}, {pipeline_mode = #tpu.pipeline_mode<synchronous>, transform_indices = @transform_8, window_bounds = array<i64: 2, 32, 96>}, {pipeline_mode = #tpu.pipeline_mode<synchronous>, transform_indices = @transform_9, window_bounds = array<i64: 2, 1, 96>}, {pipeline_mode = #tpu.pipeline_mode<synchronous>, transform_indices = @transform_10, window_bounds = array<i64: 2, 32, 32>}, {pipeline_mode = #tpu.pipeline_mode<synchronous>, transform_indices = @transform_11, window_bounds = array<i64: 2, 1, 32>}, {pipeline_mode = #tpu.pipeline_mode<synchronous>, transform_indices = @transform_12, window_bounds = array<i64: 2, 32, 64>}, {pipeline_mode = #tpu.pipeline_mode<synchronous>, transform_indices = @transform_13, window_bounds = array<i64: 2, 1, 64>}, {pipeline_mode = #tpu.pipeline_mode<synchronous>, transform_indices = @transform_14, window_bounds = array<i64: 2, 64, 32>}, {pipeline_mode = #tpu.pipeline_mode<synchronous>, transform_indices = @transform_15, window_bounds = array<i64: 2, 1, 32>}, {pipeline_mode = #tpu.pipeline_mode<synchronous>, transform_indices = @transform_16, window_bounds = array<i64: 1, 32>}, {pipeline_mode = #tpu.pipeline_mode<synchronous>, transform_indices = @transform_17, window_bounds = array<i64: 1, 32>}, {pipeline_mode = #tpu.pipeline_mode<synchronous>, transform_indices = @transform_18, window_bounds = array<i64: 32, 128>}, {pipeline_mode = #tpu.pipeline_mode<synchronous>, transform_indices = @transform_19, window_bounds = array<i64: 1, 128>}, {transform_indices = @transform_20, window_bounds = array<i64: 16, 128>}]} {
    %c0 = arith.constant 0 : index
    %c0_0 = arith.constant 0 : index
    %0 = vector.load %arg1[%c0, %c0_0] : memref<16x1xi32, #tpu.memory_space<vmem>>, vector<16x1xi32>
    %1 = tpu.iota {dimensions = array<i32: 1>} : vector<16x64xi32>
    %2 = vector.broadcast %0 : vector<16x1xi32> to vector<16x64xi32>
    %3 = arith.cmpi eq, %1, %2 : vector<16x64xi32>
    %4 = arith.extui %3 : vector<16x64xi1> to vector<16x64xi32>
    %5 = arith.sitofp %4 : vector<16x64xi32> to vector<16x64xf32>
    %c0_1 = arith.constant 0 : index
    %c0_2 = arith.constant 0 : index
    %6 = vector.load %arg2[%c0_1, %c0_2] : memref<64x32xf32, #tpu.memory_space<vmem>>, vector<64x32xf32>
    %cst = arith.constant dense<0.000000e+00> : vector<16x32xf32>
    %7 = tpu.matmul %5, %6, %cst {dimension_numbers = #tpu.dot_dimension_numbers<[1], [0], [0], [1], [0, 0, 1, 1], [], []>} : vector<16x64xf32>, vector<64x32xf32>, vector<16x32xf32> -> vector<16x32xf32>
    %cst_3 = arith.constant 5.65685415 : f32
    %8 = vector.broadcast %cst_3 : f32 to vector<16x32xf32>
    %9 = arith.mulf %7, %8 : vector<16x32xf32>
    %c0_4 = arith.constant 0 : index
    %c0_5 = arith.constant 0 : index
    %10 = vector.load %arg3[%c0_4, %c0_5] : memref<16x32xf32, #tpu.memory_space<vmem>>, vector<16x32xf32>
    %11 = arith.addf %9, %10 : vector<16x32xf32>
    %c0_6 = arith.constant 0 : index
    %c0_7 = arith.constant 0 : index
    %12 = vector.load %arg4[%c0_6, %c0_7] : memref<16x16xf32, #tpu.memory_space<vmem>>, vector<16x16xf32>
    %c0_8 = arith.constant 0 : index
    %c0_9 = arith.constant 0 : index
    %c0_10 = arith.constant 0 : index
    %13 = vector.load %arg5[%c0_8, %c0_9, %c0_10] : memref<2x1x32xf32, #tpu.memory_space<vmem>>, vector<1x1x32xf32>
    %14 = vector.shape_cast %13 : vector<1x1x32xf32> to vector<1x32xf32>
    %c0_11 = arith.constant 0 : index
    %c0_12 = arith.constant 0 : index
    %c0_13 = arith.constant 0 : index
    %15 = vector.load %arg6[%c0_11, %c0_12, %c0_13] : memref<2x1x32xf32, #tpu.memory_space<vmem>>, vector<1x1x32xf32>
    %16 = vector.shape_cast %15 : vector<1x1x32xf32> to vector<1x32xf32>
    %cst_14 = arith.constant dense<0.000000e+00> : vector<16xf32>
    %17 = vector.multi_reduction <add>, %11, %cst_14 [1] : vector<16x32xf32> to vector<16xf32>
    %18 = vector.shape_cast %17 : vector<16xf32> to vector<16x1xf32>
    %cst_15 = arith.constant 3.200000e+01 : f32
    %19 = vector.broadcast %cst_15 : f32 to vector<16x1xf32>
    %20 = arith.divf %18, %19 : vector<16x1xf32>
    %21 = vector.broadcast %20 : vector<16x1xf32> to vector<16x32xf32>
    %22 = arith.subf %11, %21 : vector<16x32xf32>
    %23 = arith.mulf %22, %22 : vector<16x32xf32>
    %cst_16 = arith.constant dense<0.000000e+00> : vector<16xf32>
    %24 = vector.multi_reduction <add>, %23, %cst_16 [1] : vector<16x32xf32> to vector<16xf32>
    %25 = vector.shape_cast %24 : vector<16xf32> to vector<16x1xf32>
    %cst_17 = arith.constant 3.100000e+01 : f32
    %26 = vector.broadcast %cst_17 : f32 to vector<16x1xf32>
    %27 = arith.divf %25, %26 : vector<16x1xf32>
    %28 = math.sqrt %27 : vector<16x1xf32>
    %cst_18 = arith.constant 9.99999997E-7 : f32
    %29 = vector.broadcast %cst_18 : f32 to vector<16x1xf32>
    %30 = arith.addf %28, %29 : vector<16x1xf32>
    %31 = tpu.reciprocal %30 {approx = true} : vector<16x1xf32> -> vector<16x1xf32>
    %32 = vector.broadcast %20 : vector<16x1xf32> to vector<16x32xf32>
    %33 = arith.subf %11, %32 : vector<16x32xf32>
    %34 = vector.broadcast %31 : vector<16x1xf32> to vector<16x32xf32>
    %35 = arith.mulf %33, %34 : vector<16x32xf32>
    %36 = vector.broadcast %14 : vector<1x32xf32> to vector<16x32xf32>
    %37 = arith.mulf %35, %36 : vector<16x32xf32>
    %38 = vector.broadcast %16 : vector<1x32xf32> to vector<16x32xf32>
    %39 = arith.addf %37, %38 : vector<16x32xf32>
    %c0_19 = arith.constant 0 : index
    %c0_20 = arith.constant 0 : index
    %c0_21 = arith.constant 0 : index
    %40 = vector.load %arg9[%c0_19, %c0_20, %c0_21] : memref<2x32x96xf32, #tpu.memory_space<vmem>>, vector<1x32x96xf32>
    %41 = vector.shape_cast %40 : vector<1x32x96xf32> to vector<32x96xf32>
    %cst_22 = arith.constant dense<0.000000e+00> : vector<16x96xf32>
    %42 = tpu.matmul %39, %41, %cst_22 {dimension_numbers = #tpu.dot_dimension_numbers<[1], [0], [0], [1], [0, 0, 1, 1], [], []>} : vector<16x32xf32>, vector<32x96xf32>, vector<16x96xf32> -> vector<16x96xf32>
    %c0_23 = arith.constant 0 : index
    %c0_24 = arith.constant 0 : index
    %c0_25 = arith.constant 0 : index
    %43 = vector.load %arg10[%c0_23, %c0_24, %c0_25] : memref<2x1x96xf32, #tpu.memory_space<vmem>>, vector<1x1x96xf32>
    %44 = vector.shape_cast %43 : vector<1x1x96xf32> to vector<1x96xf32>
    %45 = vector.broadcast %44 : vector<1x96xf32> to vector<16x96xf32>
    %46 = arith.addf %42, %45 : vector<16x96xf32>
    %47 = vector.extract_strided_slice %46 {offsets = [0, 0], sizes = [16, 8], strides = [1, 1]} : vector<16x96xf32> to vector<16x8xf32>
    %48 = vector.extract_strided_slice %46 {offsets = [0, 32], sizes = [16, 8], strides = [1, 1]} : vector<16x96xf32> to vector<16x8xf32>
    %49 = vector.extract_strided_slice %46 {offsets = [0, 64], sizes = [16, 8], strides = [1, 1]} : vector<16x96xf32> to vector<16x8xf32>
    %cst_26 = arith.constant dense<0.000000e+00> : vector<16x16xf32>
    %50 = tpu.matmul %47, %48, %cst_26 {dimension_numbers = #tpu.dot_dimension_numbers<[1], [1], [0], [0], [0, 0, 1, 0], [], []>} : vector<16x8xf32>, vector<16x8xf32>, vector<16x16xf32> -> vector<16x16xf32>
    %51 = arith.addf %50, %12 : vector<16x16xf32>
    %cst_27 = arith.constant dense<0xFF800000> : vector<16xf32>
    %52 = vector.multi_reduction <maximumf>, %51, %cst_27 [1] : vector<16x16xf32> to vector<16xf32>
    %53 = vector.shape_cast %52 : vector<16xf32> to vector<16x1xf32>
    %54 = vector.broadcast %53 : vector<16x1xf32> to vector<16x16xf32>
    %55 = arith.subf %51, %54 : vector<16x16xf32>
    %56 = math.exp %55 : vector<16x16xf32>
    %cst_28 = arith.constant dense<0.000000e+00> : vector<16xf32>
    %57 = vector.multi_reduction <add>, %56, %cst_28 [1] : vector<16x16xf32> to vector<16xf32>
    %58 = vector.shape_cast %57 : vector<16xf32> to vector<16x1xf32>
    %cst_29 = arith.constant dense<0.000000e+00> : vector<16x8xf32>
    %59 = tpu.matmul %56, %49, %cst_29 {dimension_numbers = #tpu.dot_dimension_numbers<[1], [0], [0], [1], [0, 0, 1, 1], [], []>} : vector<16x16xf32>, vector<16x8xf32>, vector<16x8xf32> -> vector<16x8xf32>
    %60 = tpu.reciprocal %58 {approx = true} : vector<16x1xf32> -> vector<16x1xf32>
    %61 = vector.broadcast %60 : vector<16x1xf32> to vector<16x8xf32>
    %62 = arith.mulf %59, %61 : vector<16x8xf32>
    %63 = vector.extract_strided_slice %46 {offsets = [0, 8], sizes = [16, 8], strides = [1, 1]} : vector<16x96xf32> to vector<16x8xf32>
    %64 = vector.extract_strided_slice %46 {offsets = [0, 40], sizes = [16, 8], strides = [1, 1]} : vector<16x96xf32> to vector<16x8xf32>
    %65 = vector.extract_strided_slice %46 {offsets = [0, 72], sizes = [16, 8], strides = [1, 1]} : vector<16x96xf32> to vector<16x8xf32>
    %cst_30 = arith.constant dense<0.000000e+00> : vector<16x16xf32>
    %66 = tpu.matmul %63, %64, %cst_30 {dimension_numbers = #tpu.dot_dimension_numbers<[1], [1], [0], [0], [0, 0, 1, 0], [], []>} : vector<16x8xf32>, vector<16x8xf32>, vector<16x16xf32> -> vector<16x16xf32>
    %67 = arith.addf %66, %12 : vector<16x16xf32>
    %cst_31 = arith.constant dense<0xFF800000> : vector<16xf32>
    %68 = vector.multi_reduction <maximumf>, %67, %cst_31 [1] : vector<16x16xf32> to vector<16xf32>
    %69 = vector.shape_cast %68 : vector<16xf32> to vector<16x1xf32>
    %70 = vector.broadcast %69 : vector<16x1xf32> to vector<16x16xf32>
    %71 = arith.subf %67, %70 : vector<16x16xf32>
    %72 = math.exp %71 : vector<16x16xf32>
    %cst_32 = arith.constant dense<0.000000e+00> : vector<16xf32>
    %73 = vector.multi_reduction <add>, %72, %cst_32 [1] : vector<16x16xf32> to vector<16xf32>
    %74 = vector.shape_cast %73 : vector<16xf32> to vector<16x1xf32>
    %cst_33 = arith.constant dense<0.000000e+00> : vector<16x8xf32>
    %75 = tpu.matmul %72, %65, %cst_33 {dimension_numbers = #tpu.dot_dimension_numbers<[1], [0], [0], [1], [0, 0, 1, 1], [], []>} : vector<16x16xf32>, vector<16x8xf32>, vector<16x8xf32> -> vector<16x8xf32>
    %76 = tpu.reciprocal %74 {approx = true} : vector<16x1xf32> -> vector<16x1xf32>
    %77 = vector.broadcast %76 : vector<16x1xf32> to vector<16x8xf32>
    %78 = arith.mulf %75, %77 : vector<16x8xf32>
    %79 = vector.extract_strided_slice %46 {offsets = [0, 16], sizes = [16, 8], strides = [1, 1]} : vector<16x96xf32> to vector<16x8xf32>
    %80 = vector.extract_strided_slice %46 {offsets = [0, 48], sizes = [16, 8], strides = [1, 1]} : vector<16x96xf32> to vector<16x8xf32>
    %81 = vector.extract_strided_slice %46 {offsets = [0, 80], sizes = [16, 8], strides = [1, 1]} : vector<16x96xf32> to vector<16x8xf32>
    %cst_34 = arith.constant dense<0.000000e+00> : vector<16x16xf32>
    %82 = tpu.matmul %79, %80, %cst_34 {dimension_numbers = #tpu.dot_dimension_numbers<[1], [1], [0], [0], [0, 0, 1, 0], [], []>} : vector<16x8xf32>, vector<16x8xf32>, vector<16x16xf32> -> vector<16x16xf32>
    %83 = arith.addf %82, %12 : vector<16x16xf32>
    %cst_35 = arith.constant dense<0xFF800000> : vector<16xf32>
    %84 = vector.multi_reduction <maximumf>, %83, %cst_35 [1] : vector<16x16xf32> to vector<16xf32>
    %85 = vector.shape_cast %84 : vector<16xf32> to vector<16x1xf32>
    %86 = vector.broadcast %85 : vector<16x1xf32> to vector<16x16xf32>
    %87 = arith.subf %83, %86 : vector<16x16xf32>
    %88 = math.exp %87 : vector<16x16xf32>
    %cst_36 = arith.constant dense<0.000000e+00> : vector<16xf32>
    %89 = vector.multi_reduction <add>, %88, %cst_36 [1] : vector<16x16xf32> to vector<16xf32>
    %90 = vector.shape_cast %89 : vector<16xf32> to vector<16x1xf32>
    %cst_37 = arith.constant dense<0.000000e+00> : vector<16x8xf32>
    %91 = tpu.matmul %88, %81, %cst_37 {dimension_numbers = #tpu.dot_dimension_numbers<[1], [0], [0], [1], [0, 0, 1, 1], [], []>} : vector<16x16xf32>, vector<16x8xf32>, vector<16x8xf32> -> vector<16x8xf32>
    %92 = tpu.reciprocal %90 {approx = true} : vector<16x1xf32> -> vector<16x1xf32>
    %93 = vector.broadcast %92 : vector<16x1xf32> to vector<16x8xf32>
    %94 = arith.mulf %91, %93 : vector<16x8xf32>
    %95 = vector.extract_strided_slice %46 {offsets = [0, 24], sizes = [16, 8], strides = [1, 1]} : vector<16x96xf32> to vector<16x8xf32>
    %96 = vector.extract_strided_slice %46 {offsets = [0, 56], sizes = [16, 8], strides = [1, 1]} : vector<16x96xf32> to vector<16x8xf32>
    %97 = vector.extract_strided_slice %46 {offsets = [0, 88], sizes = [16, 8], strides = [1, 1]} : vector<16x96xf32> to vector<16x8xf32>
    %cst_38 = arith.constant dense<0.000000e+00> : vector<16x16xf32>
    %98 = tpu.matmul %95, %96, %cst_38 {dimension_numbers = #tpu.dot_dimension_numbers<[1], [1], [0], [0], [0, 0, 1, 0], [], []>} : vector<16x8xf32>, vector<16x8xf32>, vector<16x16xf32> -> vector<16x16xf32>
    %99 = arith.addf %98, %12 : vector<16x16xf32>
    %cst_39 = arith.constant dense<0xFF800000> : vector<16xf32>
    %100 = vector.multi_reduction <maximumf>, %99, %cst_39 [1] : vector<16x16xf32> to vector<16xf32>
    %101 = vector.shape_cast %100 : vector<16xf32> to vector<16x1xf32>
    %102 = vector.broadcast %101 : vector<16x1xf32> to vector<16x16xf32>
    %103 = arith.subf %99, %102 : vector<16x16xf32>
    %104 = math.exp %103 : vector<16x16xf32>
    %cst_40 = arith.constant dense<0.000000e+00> : vector<16xf32>
    %105 = vector.multi_reduction <add>, %104, %cst_40 [1] : vector<16x16xf32> to vector<16xf32>
    %106 = vector.shape_cast %105 : vector<16xf32> to vector<16x1xf32>
    %cst_41 = arith.constant dense<0.000000e+00> : vector<16x8xf32>
    %107 = tpu.matmul %104, %97, %cst_41 {dimension_numbers = #tpu.dot_dimension_numbers<[1], [0], [0], [1], [0, 0, 1, 1], [], []>} : vector<16x16xf32>, vector<16x8xf32>, vector<16x8xf32> -> vector<16x8xf32>
    %108 = tpu.reciprocal %106 {approx = true} : vector<16x1xf32> -> vector<16x1xf32>
    %109 = vector.broadcast %108 : vector<16x1xf32> to vector<16x8xf32>
    %110 = arith.mulf %107, %109 : vector<16x8xf32>
    %111 = tpu.concatenate %62, %78, %94, %110 in 1 : vector<16x8xf32>, vector<16x8xf32>, vector<16x8xf32>, vector<16x8xf32> -> vector<16x32xf32>
    %c0_42 = arith.constant 0 : index
    %c0_43 = arith.constant 0 : index
    %c0_44 = arith.constant 0 : index
    %112 = vector.load %arg11[%c0_42, %c0_43, %c0_44] : memref<2x32x32xf32, #tpu.memory_space<vmem>>, vector<1x32x32xf32>
    %113 = vector.shape_cast %112 : vector<1x32x32xf32> to vector<32x32xf32>
    %cst_45 = arith.constant dense<0.000000e+00> : vector<16x32xf32>
    %114 = tpu.matmul %111, %113, %cst_45 {dimension_numbers = #tpu.dot_dimension_numbers<[1], [0], [0], [1], [0, 0, 1, 1], [], []>} : vector<16x32xf32>, vector<32x32xf32>, vector<16x32xf32> -> vector<16x32xf32>
    %115 = arith.addf %11, %114 : vector<16x32xf32>
    %c0_46 = arith.constant 0 : index
    %c0_47 = arith.constant 0 : index
    %c0_48 = arith.constant 0 : index
    %116 = vector.load %arg12[%c0_46, %c0_47, %c0_48] : memref<2x1x32xf32, #tpu.memory_space<vmem>>, vector<1x1x32xf32>
    %117 = vector.shape_cast %116 : vector<1x1x32xf32> to vector<1x32xf32>
    %118 = vector.broadcast %117 : vector<1x32xf32> to vector<16x32xf32>
    %119 = arith.addf %115, %118 : vector<16x32xf32>
    %c0_49 = arith.constant 0 : index
    %c0_50 = arith.constant 0 : index
    %c0_51 = arith.constant 0 : index
    %120 = vector.load %arg7[%c0_49, %c0_50, %c0_51] : memref<2x1x32xf32, #tpu.memory_space<vmem>>, vector<1x1x32xf32>
    %121 = vector.shape_cast %120 : vector<1x1x32xf32> to vector<1x32xf32>
    %c0_52 = arith.constant 0 : index
    %c0_53 = arith.constant 0 : index
    %c0_54 = arith.constant 0 : index
    %122 = vector.load %arg8[%c0_52, %c0_53, %c0_54] : memref<2x1x32xf32, #tpu.memory_space<vmem>>, vector<1x1x32xf32>
    %123 = vector.shape_cast %122 : vector<1x1x32xf32> to vector<1x32xf32>
    %cst_55 = arith.constant dense<0.000000e+00> : vector<16xf32>
    %124 = vector.multi_reduction <add>, %119, %cst_55 [1] : vector<16x32xf32> to vector<16xf32>
    %125 = vector.shape_cast %124 : vector<16xf32> to vector<16x1xf32>
    %cst_56 = arith.constant 3.200000e+01 : f32
    %126 = vector.broadcast %cst_56 : f32 to vector<16x1xf32>
    %127 = arith.divf %125, %126 : vector<16x1xf32>
    %128 = vector.broadcast %127 : vector<16x1xf32> to vector<16x32xf32>
    %129 = arith.subf %119, %128 : vector<16x32xf32>
    %130 = arith.mulf %129, %129 : vector<16x32xf32>
    %cst_57 = arith.constant dense<0.000000e+00> : vector<16xf32>
    %131 = vector.multi_reduction <add>, %130, %cst_57 [1] : vector<16x32xf32> to vector<16xf32>
    %132 = vector.shape_cast %131 : vector<16xf32> to vector<16x1xf32>
    %cst_58 = arith.constant 3.100000e+01 : f32
    %133 = vector.broadcast %cst_58 : f32 to vector<16x1xf32>
    %134 = arith.divf %132, %133 : vector<16x1xf32>
    %135 = math.sqrt %134 : vector<16x1xf32>
    %cst_59 = arith.constant 9.99999997E-7 : f32
    %136 = vector.broadcast %cst_59 : f32 to vector<16x1xf32>
    %137 = arith.addf %135, %136 : vector<16x1xf32>
    %138 = tpu.reciprocal %137 {approx = true} : vector<16x1xf32> -> vector<16x1xf32>
    %139 = vector.broadcast %127 : vector<16x1xf32> to vector<16x32xf32>
    %140 = arith.subf %119, %139 : vector<16x32xf32>
    %141 = vector.broadcast %138 : vector<16x1xf32> to vector<16x32xf32>
    %142 = arith.mulf %140, %141 : vector<16x32xf32>
    %143 = vector.broadcast %121 : vector<1x32xf32> to vector<16x32xf32>
    %144 = arith.mulf %142, %143 : vector<16x32xf32>
    %145 = vector.broadcast %123 : vector<1x32xf32> to vector<16x32xf32>
    %146 = arith.addf %144, %145 : vector<16x32xf32>
    %c0_60 = arith.constant 0 : index
    %c0_61 = arith.constant 0 : index
    %c0_62 = arith.constant 0 : index
    %147 = vector.load %arg13[%c0_60, %c0_61, %c0_62] : memref<2x32x64xf32, #tpu.memory_space<vmem>>, vector<1x32x64xf32>
    %148 = vector.shape_cast %147 : vector<1x32x64xf32> to vector<32x64xf32>
    %cst_63 = arith.constant dense<0.000000e+00> : vector<16x64xf32>
    %149 = tpu.matmul %146, %148, %cst_63 {dimension_numbers = #tpu.dot_dimension_numbers<[1], [0], [0], [1], [0, 0, 1, 1], [], []>} : vector<16x32xf32>, vector<32x64xf32>, vector<16x64xf32> -> vector<16x64xf32>
    %c0_64 = arith.constant 0 : index
    %c0_65 = arith.constant 0 : index
    %c0_66 = arith.constant 0 : index
    %150 = vector.load %arg14[%c0_64, %c0_65, %c0_66] : memref<2x1x64xf32, #tpu.memory_space<vmem>>, vector<1x1x64xf32>
    %151 = vector.shape_cast %150 : vector<1x1x64xf32> to vector<1x64xf32>
    %152 = vector.broadcast %151 : vector<1x64xf32> to vector<16x64xf32>
    %153 = arith.addf %149, %152 : vector<16x64xf32>
    %cst_67 = arith.constant 0.000000e+00 : f32
    %154 = vector.broadcast %cst_67 : f32 to vector<16x64xf32>
    %155 = arith.maximumf %153, %154 : vector<16x64xf32>
    %c0_68 = arith.constant 0 : index
    %c0_69 = arith.constant 0 : index
    %c0_70 = arith.constant 0 : index
    %156 = vector.load %arg15[%c0_68, %c0_69, %c0_70] : memref<2x64x32xf32, #tpu.memory_space<vmem>>, vector<1x64x32xf32>
    %157 = vector.shape_cast %156 : vector<1x64x32xf32> to vector<64x32xf32>
    %cst_71 = arith.constant dense<0.000000e+00> : vector<16x32xf32>
    %158 = tpu.matmul %155, %157, %cst_71 {dimension_numbers = #tpu.dot_dimension_numbers<[1], [0], [0], [1], [0, 0, 1, 1], [], []>} : vector<16x64xf32>, vector<64x32xf32>, vector<16x32xf32> -> vector<16x32xf32>
    %159 = arith.addf %119, %158 : vector<16x32xf32>
    %c0_72 = arith.constant 0 : index
    %c0_73 = arith.constant 0 : index
    %c0_74 = arith.constant 0 : index
    %160 = vector.load %arg16[%c0_72, %c0_73, %c0_74] : memref<2x1x32xf32, #tpu.memory_space<vmem>>, vector<1x1x32xf32>
    %161 = vector.shape_cast %160 : vector<1x1x32xf32> to vector<1x32xf32>
    %162 = vector.broadcast %161 : vector<1x32xf32> to vector<16x32xf32>
    %163 = arith.addf %159, %162 : vector<16x32xf32>
    %c1 = arith.constant 1 : index
    %c0_75 = arith.constant 0 : index
    %c0_76 = arith.constant 0 : index
    %164 = vector.load %arg5[%c1, %c0_75, %c0_76] : memref<2x1x32xf32, #tpu.memory_space<vmem>>, vector<1x1x32xf32>
    %165 = vector.shape_cast %164 : vector<1x1x32xf32> to vector<1x32xf32>
    %c1_77 = arith.constant 1 : index
    %c0_78 = arith.constant 0 : index
    %c0_79 = arith.constant 0 : index
    %166 = vector.load %arg6[%c1_77, %c0_78, %c0_79] : memref<2x1x32xf32, #tpu.memory_space<vmem>>, vector<1x1x32xf32>
    %167 = vector.shape_cast %166 : vector<1x1x32xf32> to vector<1x32xf32>
    %cst_80 = arith.constant dense<0.000000e+00> : vector<16xf32>
    %168 = vector.multi_reduction <add>, %163, %cst_80 [1] : vector<16x32xf32> to vector<16xf32>
    %169 = vector.shape_cast %168 : vector<16xf32> to vector<16x1xf32>
    %cst_81 = arith.constant 3.200000e+01 : f32
    %170 = vector.broadcast %cst_81 : f32 to vector<16x1xf32>
    %171 = arith.divf %169, %170 : vector<16x1xf32>
    %172 = vector.broadcast %171 : vector<16x1xf32> to vector<16x32xf32>
    %173 = arith.subf %163, %172 : vector<16x32xf32>
    %174 = arith.mulf %173, %173 : vector<16x32xf32>
    %cst_82 = arith.constant dense<0.000000e+00> : vector<16xf32>
    %175 = vector.multi_reduction <add>, %174, %cst_82 [1] : vector<16x32xf32> to vector<16xf32>
    %176 = vector.shape_cast %175 : vector<16xf32> to vector<16x1xf32>
    %cst_83 = arith.constant 3.100000e+01 : f32
    %177 = vector.broadcast %cst_83 : f32 to vector<16x1xf32>
    %178 = arith.divf %176, %177 : vector<16x1xf32>
    %179 = math.sqrt %178 : vector<16x1xf32>
    %cst_84 = arith.constant 9.99999997E-7 : f32
    %180 = vector.broadcast %cst_84 : f32 to vector<16x1xf32>
    %181 = arith.addf %179, %180 : vector<16x1xf32>
    %182 = tpu.reciprocal %181 {approx = true} : vector<16x1xf32> -> vector<16x1xf32>
    %183 = vector.broadcast %171 : vector<16x1xf32> to vector<16x32xf32>
    %184 = arith.subf %163, %183 : vector<16x32xf32>
    %185 = vector.broadcast %182 : vector<16x1xf32> to vector<16x32xf32>
    %186 = arith.mulf %184, %185 : vector<16x32xf32>
    %187 = vector.broadcast %165 : vector<1x32xf32> to vector<16x32xf32>
    %188 = arith.mulf %186, %187 : vector<16x32xf32>
    %189 = vector.broadcast %167 : vector<1x32xf32> to vector<16x32xf32>
    %190 = arith.addf %188, %189 : vector<16x32xf32>
    %c1_85 = arith.constant 1 : index
    %c0_86 = arith.constant 0 : index
    %c0_87 = arith.constant 0 : index
    %191 = vector.load %arg9[%c1_85, %c0_86, %c0_87] : memref<2x32x96xf32, #tpu.memory_space<vmem>>, vector<1x32x96xf32>
    %192 = vector.shape_cast %191 : vector<1x32x96xf32> to vector<32x96xf32>
    %cst_88 = arith.constant dense<0.000000e+00> : vector<16x96xf32>
    %193 = tpu.matmul %190, %192, %cst_88 {dimension_numbers = #tpu.dot_dimension_numbers<[1], [0], [0], [1], [0, 0, 1, 1], [], []>} : vector<16x32xf32>, vector<32x96xf32>, vector<16x96xf32> -> vector<16x96xf32>
    %c1_89 = arith.constant 1 : index
    %c0_90 = arith.constant 0 : index
    %c0_91 = arith.constant 0 : index
    %194 = vector.load %arg10[%c1_89, %c0_90, %c0_91] : memref<2x1x96xf32, #tpu.memory_space<vmem>>, vector<1x1x96xf32>
    %195 = vector.shape_cast %194 : vector<1x1x96xf32> to vector<1x96xf32>
    %196 = vector.broadcast %195 : vector<1x96xf32> to vector<16x96xf32>
    %197 = arith.addf %193, %196 : vector<16x96xf32>
    %198 = vector.extract_strided_slice %197 {offsets = [0, 0], sizes = [16, 8], strides = [1, 1]} : vector<16x96xf32> to vector<16x8xf32>
    %199 = vector.extract_strided_slice %197 {offsets = [0, 32], sizes = [16, 8], strides = [1, 1]} : vector<16x96xf32> to vector<16x8xf32>
    %200 = vector.extract_strided_slice %197 {offsets = [0, 64], sizes = [16, 8], strides = [1, 1]} : vector<16x96xf32> to vector<16x8xf32>
    %cst_92 = arith.constant dense<0.000000e+00> : vector<16x16xf32>
    %201 = tpu.matmul %198, %199, %cst_92 {dimension_numbers = #tpu.dot_dimension_numbers<[1], [1], [0], [0], [0, 0, 1, 0], [], []>} : vector<16x8xf32>, vector<16x8xf32>, vector<16x16xf32> -> vector<16x16xf32>
    %202 = arith.addf %201, %12 : vector<16x16xf32>
    %cst_93 = arith.constant dense<0xFF800000> : vector<16xf32>
    %203 = vector.multi_reduction <maximumf>, %202, %cst_93 [1] : vector<16x16xf32> to vector<16xf32>
    %204 = vector.shape_cast %203 : vector<16xf32> to vector<16x1xf32>
    %205 = vector.broadcast %204 : vector<16x1xf32> to vector<16x16xf32>
    %206 = arith.subf %202, %205 : vector<16x16xf32>
    %207 = math.exp %206 : vector<16x16xf32>
    %cst_94 = arith.constant dense<0.000000e+00> : vector<16xf32>
    %208 = vector.multi_reduction <add>, %207, %cst_94 [1] : vector<16x16xf32> to vector<16xf32>
    %209 = vector.shape_cast %208 : vector<16xf32> to vector<16x1xf32>
    %cst_95 = arith.constant dense<0.000000e+00> : vector<16x8xf32>
    %210 = tpu.matmul %207, %200, %cst_95 {dimension_numbers = #tpu.dot_dimension_numbers<[1], [0], [0], [1], [0, 0, 1, 1], [], []>} : vector<16x16xf32>, vector<16x8xf32>, vector<16x8xf32> -> vector<16x8xf32>
    %211 = tpu.reciprocal %209 {approx = true} : vector<16x1xf32> -> vector<16x1xf32>
    %212 = vector.broadcast %211 : vector<16x1xf32> to vector<16x8xf32>
    %213 = arith.mulf %210, %212 : vector<16x8xf32>
    %214 = vector.extract_strided_slice %197 {offsets = [0, 8], sizes = [16, 8], strides = [1, 1]} : vector<16x96xf32> to vector<16x8xf32>
    %215 = vector.extract_strided_slice %197 {offsets = [0, 40], sizes = [16, 8], strides = [1, 1]} : vector<16x96xf32> to vector<16x8xf32>
    %216 = vector.extract_strided_slice %197 {offsets = [0, 72], sizes = [16, 8], strides = [1, 1]} : vector<16x96xf32> to vector<16x8xf32>
    %cst_96 = arith.constant dense<0.000000e+00> : vector<16x16xf32>
    %217 = tpu.matmul %214, %215, %cst_96 {dimension_numbers = #tpu.dot_dimension_numbers<[1], [1], [0], [0], [0, 0, 1, 0], [], []>} : vector<16x8xf32>, vector<16x8xf32>, vector<16x16xf32> -> vector<16x16xf32>
    %218 = arith.addf %217, %12 : vector<16x16xf32>
    %cst_97 = arith.constant dense<0xFF800000> : vector<16xf32>
    %219 = vector.multi_reduction <maximumf>, %218, %cst_97 [1] : vector<16x16xf32> to vector<16xf32>
    %220 = vector.shape_cast %219 : vector<16xf32> to vector<16x1xf32>
    %221 = vector.broadcast %220 : vector<16x1xf32> to vector<16x16xf32>
    %222 = arith.subf %218, %221 : vector<16x16xf32>
    %223 = math.exp %222 : vector<16x16xf32>
    %cst_98 = arith.constant dense<0.000000e+00> : vector<16xf32>
    %224 = vector.multi_reduction <add>, %223, %cst_98 [1] : vector<16x16xf32> to vector<16xf32>
    %225 = vector.shape_cast %224 : vector<16xf32> to vector<16x1xf32>
    %cst_99 = arith.constant dense<0.000000e+00> : vector<16x8xf32>
    %226 = tpu.matmul %223, %216, %cst_99 {dimension_numbers = #tpu.dot_dimension_numbers<[1], [0], [0], [1], [0, 0, 1, 1], [], []>} : vector<16x16xf32>, vector<16x8xf32>, vector<16x8xf32> -> vector<16x8xf32>
    %227 = tpu.reciprocal %225 {approx = true} : vector<16x1xf32> -> vector<16x1xf32>
    %228 = vector.broadcast %227 : vector<16x1xf32> to vector<16x8xf32>
    %229 = arith.mulf %226, %228 : vector<16x8xf32>
    %230 = vector.extract_strided_slice %197 {offsets = [0, 16], sizes = [16, 8], strides = [1, 1]} : vector<16x96xf32> to vector<16x8xf32>
    %231 = vector.extract_strided_slice %197 {offsets = [0, 48], sizes = [16, 8], strides = [1, 1]} : vector<16x96xf32> to vector<16x8xf32>
    %232 = vector.extract_strided_slice %197 {offsets = [0, 80], sizes = [16, 8], strides = [1, 1]} : vector<16x96xf32> to vector<16x8xf32>
    %cst_100 = arith.constant dense<0.000000e+00> : vector<16x16xf32>
    %233 = tpu.matmul %230, %231, %cst_100 {dimension_numbers = #tpu.dot_dimension_numbers<[1], [1], [0], [0], [0, 0, 1, 0], [], []>} : vector<16x8xf32>, vector<16x8xf32>, vector<16x16xf32> -> vector<16x16xf32>
    %234 = arith.addf %233, %12 : vector<16x16xf32>
    %cst_101 = arith.constant dense<0xFF800000> : vector<16xf32>
    %235 = vector.multi_reduction <maximumf>, %234, %cst_101 [1] : vector<16x16xf32> to vector<16xf32>
    %236 = vector.shape_cast %235 : vector<16xf32> to vector<16x1xf32>
    %237 = vector.broadcast %236 : vector<16x1xf32> to vector<16x16xf32>
    %238 = arith.subf %234, %237 : vector<16x16xf32>
    %239 = math.exp %238 : vector<16x16xf32>
    %cst_102 = arith.constant dense<0.000000e+00> : vector<16xf32>
    %240 = vector.multi_reduction <add>, %239, %cst_102 [1] : vector<16x16xf32> to vector<16xf32>
    %241 = vector.shape_cast %240 : vector<16xf32> to vector<16x1xf32>
    %cst_103 = arith.constant dense<0.000000e+00> : vector<16x8xf32>
    %242 = tpu.matmul %239, %232, %cst_103 {dimension_numbers = #tpu.dot_dimension_numbers<[1], [0], [0], [1], [0, 0, 1, 1], [], []>} : vector<16x16xf32>, vector<16x8xf32>, vector<16x8xf32> -> vector<16x8xf32>
    %243 = tpu.reciprocal %241 {approx = true} : vector<16x1xf32> -> vector<16x1xf32>
    %244 = vector.broadcast %243 : vector<16x1xf32> to vector<16x8xf32>
    %245 = arith.mulf %242, %244 : vector<16x8xf32>
    %246 = vector.extract_strided_slice %197 {offsets = [0, 24], sizes = [16, 8], strides = [1, 1]} : vector<16x96xf32> to vector<16x8xf32>
    %247 = vector.extract_strided_slice %197 {offsets = [0, 56], sizes = [16, 8], strides = [1, 1]} : vector<16x96xf32> to vector<16x8xf32>
    %248 = vector.extract_strided_slice %197 {offsets = [0, 88], sizes = [16, 8], strides = [1, 1]} : vector<16x96xf32> to vector<16x8xf32>
    %cst_104 = arith.constant dense<0.000000e+00> : vector<16x16xf32>
    %249 = tpu.matmul %246, %247, %cst_104 {dimension_numbers = #tpu.dot_dimension_numbers<[1], [1], [0], [0], [0, 0, 1, 0], [], []>} : vector<16x8xf32>, vector<16x8xf32>, vector<16x16xf32> -> vector<16x16xf32>
    %250 = arith.addf %249, %12 : vector<16x16xf32>
    %cst_105 = arith.constant dense<0xFF800000> : vector<16xf32>
    %251 = vector.multi_reduction <maximumf>, %250, %cst_105 [1] : vector<16x16xf32> to vector<16xf32>
    %252 = vector.shape_cast %251 : vector<16xf32> to vector<16x1xf32>
    %253 = vector.broadcast %252 : vector<16x1xf32> to vector<16x16xf32>
    %254 = arith.subf %250, %253 : vector<16x16xf32>
    %255 = math.exp %254 : vector<16x16xf32>
    %cst_106 = arith.constant dense<0.000000e+00> : vector<16xf32>
    %256 = vector.multi_reduction <add>, %255, %cst_106 [1] : vector<16x16xf32> to vector<16xf32>
    %257 = vector.shape_cast %256 : vector<16xf32> to vector<16x1xf32>
    %cst_107 = arith.constant dense<0.000000e+00> : vector<16x8xf32>
    %258 = tpu.matmul %255, %248, %cst_107 {dimension_numbers = #tpu.dot_dimension_numbers<[1], [0], [0], [1], [0, 0, 1, 1], [], []>} : vector<16x16xf32>, vector<16x8xf32>, vector<16x8xf32> -> vector<16x8xf32>
    %259 = tpu.reciprocal %257 {approx = true} : vector<16x1xf32> -> vector<16x1xf32>
    %260 = vector.broadcast %259 : vector<16x1xf32> to vector<16x8xf32>
    %261 = arith.mulf %258, %260 : vector<16x8xf32>
    %262 = tpu.concatenate %213, %229, %245, %261 in 1 : vector<16x8xf32>, vector<16x8xf32>, vector<16x8xf32>, vector<16x8xf32> -> vector<16x32xf32>
    %c1_108 = arith.constant 1 : index
    %c0_109 = arith.constant 0 : index
    %c0_110 = arith.constant 0 : index
    %263 = vector.load %arg11[%c1_108, %c0_109, %c0_110] : memref<2x32x32xf32, #tpu.memory_space<vmem>>, vector<1x32x32xf32>
    %264 = vector.shape_cast %263 : vector<1x32x32xf32> to vector<32x32xf32>
    %cst_111 = arith.constant dense<0.000000e+00> : vector<16x32xf32>
    %265 = tpu.matmul %262, %264, %cst_111 {dimension_numbers = #tpu.dot_dimension_numbers<[1], [0], [0], [1], [0, 0, 1, 1], [], []>} : vector<16x32xf32>, vector<32x32xf32>, vector<16x32xf32> -> vector<16x32xf32>
    %266 = arith.addf %163, %265 : vector<16x32xf32>
    %c1_112 = arith.constant 1 : index
    %c0_113 = arith.constant 0 : index
    %c0_114 = arith.constant 0 : index
    %267 = vector.load %arg12[%c1_112, %c0_113, %c0_114] : memref<2x1x32xf32, #tpu.memory_space<vmem>>, vector<1x1x32xf32>
    %268 = vector.shape_cast %267 : vector<1x1x32xf32> to vector<1x32xf32>
    %269 = vector.broadcast %268 : vector<1x32xf32> to vector<16x32xf32>
    %270 = arith.addf %266, %269 : vector<16x32xf32>
    %c1_115 = arith.constant 1 : index
    %c0_116 = arith.constant 0 : index
    %c0_117 = arith.constant 0 : index
    %271 = vector.load %arg7[%c1_115, %c0_116, %c0_117] : memref<2x1x32xf32, #tpu.memory_space<vmem>>, vector<1x1x32xf32>
    %272 = vector.shape_cast %271 : vector<1x1x32xf32> to vector<1x32xf32>
    %c1_118 = arith.constant 1 : index
    %c0_119 = arith.constant 0 : index
    %c0_120 = arith.constant 0 : index
    %273 = vector.load %arg8[%c1_118, %c0_119, %c0_120] : memref<2x1x32xf32, #tpu.memory_space<vmem>>, vector<1x1x32xf32>
    %274 = vector.shape_cast %273 : vector<1x1x32xf32> to vector<1x32xf32>
    %cst_121 = arith.constant dense<0.000000e+00> : vector<16xf32>
    %275 = vector.multi_reduction <add>, %270, %cst_121 [1] : vector<16x32xf32> to vector<16xf32>
    %276 = vector.shape_cast %275 : vector<16xf32> to vector<16x1xf32>
    %cst_122 = arith.constant 3.200000e+01 : f32
    %277 = vector.broadcast %cst_122 : f32 to vector<16x1xf32>
    %278 = arith.divf %276, %277 : vector<16x1xf32>
    %279 = vector.broadcast %278 : vector<16x1xf32> to vector<16x32xf32>
    %280 = arith.subf %270, %279 : vector<16x32xf32>
    %281 = arith.mulf %280, %280 : vector<16x32xf32>
    %cst_123 = arith.constant dense<0.000000e+00> : vector<16xf32>
    %282 = vector.multi_reduction <add>, %281, %cst_123 [1] : vector<16x32xf32> to vector<16xf32>
    %283 = vector.shape_cast %282 : vector<16xf32> to vector<16x1xf32>
    %cst_124 = arith.constant 3.100000e+01 : f32
    %284 = vector.broadcast %cst_124 : f32 to vector<16x1xf32>
    %285 = arith.divf %283, %284 : vector<16x1xf32>
    %286 = math.sqrt %285 : vector<16x1xf32>
    %cst_125 = arith.constant 9.99999997E-7 : f32
    %287 = vector.broadcast %cst_125 : f32 to vector<16x1xf32>
    %288 = arith.addf %286, %287 : vector<16x1xf32>
    %289 = tpu.reciprocal %288 {approx = true} : vector<16x1xf32> -> vector<16x1xf32>
    %290 = vector.broadcast %278 : vector<16x1xf32> to vector<16x32xf32>
    %291 = arith.subf %270, %290 : vector<16x32xf32>
    %292 = vector.broadcast %289 : vector<16x1xf32> to vector<16x32xf32>
    %293 = arith.mulf %291, %292 : vector<16x32xf32>
    %294 = vector.broadcast %272 : vector<1x32xf32> to vector<16x32xf32>
    %295 = arith.mulf %293, %294 : vector<16x32xf32>
    %296 = vector.broadcast %274 : vector<1x32xf32> to vector<16x32xf32>
    %297 = arith.addf %295, %296 : vector<16x32xf32>
    %c1_126 = arith.constant 1 : index
    %c0_127 = arith.constant 0 : index
    %c0_128 = arith.constant 0 : index
    %298 = vector.load %arg13[%c1_126, %c0_127, %c0_128] : memref<2x32x64xf32, #tpu.memory_space<vmem>>, vector<1x32x64xf32>
    %299 = vector.shape_cast %298 : vector<1x32x64xf32> to vector<32x64xf32>
    %cst_129 = arith.constant dense<0.000000e+00> : vector<16x64xf32>
    %300 = tpu.matmul %297, %299, %cst_129 {dimension_numbers = #tpu.dot_dimension_numbers<[1], [0], [0], [1], [0, 0, 1, 1], [], []>} : vector<16x32xf32>, vector<32x64xf32>, vector<16x64xf32> -> vector<16x64xf32>
    %c1_130 = arith.constant 1 : index
    %c0_131 = arith.constant 0 : index
    %c0_132 = arith.constant 0 : index
    %301 = vector.load %arg14[%c1_130, %c0_131, %c0_132] : memref<2x1x64xf32, #tpu.memory_space<vmem>>, vector<1x1x64xf32>
    %302 = vector.shape_cast %301 : vector<1x1x64xf32> to vector<1x64xf32>
    %303 = vector.broadcast %302 : vector<1x64xf32> to vector<16x64xf32>
    %304 = arith.addf %300, %303 : vector<16x64xf32>
    %cst_133 = arith.constant 0.000000e+00 : f32
    %305 = vector.broadcast %cst_133 : f32 to vector<16x64xf32>
    %306 = arith.maximumf %304, %305 : vector<16x64xf32>
    %c1_134 = arith.constant 1 : index
    %c0_135 = arith.constant 0 : index
    %c0_136 = arith.constant 0 : index
    %307 = vector.load %arg15[%c1_134, %c0_135, %c0_136] : memref<2x64x32xf32, #tpu.memory_space<vmem>>, vector<1x64x32xf32>
    %308 = vector.shape_cast %307 : vector<1x64x32xf32> to vector<64x32xf32>
    %cst_137 = arith.constant dense<0.000000e+00> : vector<16x32xf32>
    %309 = tpu.matmul %306, %308, %cst_137 {dimension_numbers = #tpu.dot_dimension_numbers<[1], [0], [0], [1], [0, 0, 1, 1], [], []>} : vector<16x64xf32>, vector<64x32xf32>, vector<16x32xf32> -> vector<16x32xf32>
    %310 = arith.addf %270, %309 : vector<16x32xf32>
    %c1_138 = arith.constant 1 : index
    %c0_139 = arith.constant 0 : index
    %c0_140 = arith.constant 0 : index
    %311 = vector.load %arg16[%c1_138, %c0_139, %c0_140] : memref<2x1x32xf32, #tpu.memory_space<vmem>>, vector<1x1x32xf32>
    %312 = vector.shape_cast %311 : vector<1x1x32xf32> to vector<1x32xf32>
    %313 = vector.broadcast %312 : vector<1x32xf32> to vector<16x32xf32>
    %314 = arith.addf %310, %313 : vector<16x32xf32>
    %c0_141 = arith.constant 0 : index
    %c0_142 = arith.constant 0 : index
    %315 = vector.load %arg17[%c0_141, %c0_142] : memref<1x32xf32, #tpu.memory_space<vmem>>, vector<1x32xf32>
    %c0_143 = arith.constant 0 : index
    %c0_144 = arith.constant 0 : index
    %316 = vector.load %arg18[%c0_143, %c0_144] : memref<1x32xf32, #tpu.memory_space<vmem>>, vector<1x32xf32>
    %cst_145 = arith.constant dense<0.000000e+00> : vector<16xf32>
    %317 = vector.multi_reduction <add>, %314, %cst_145 [1] : vector<16x32xf32> to vector<16xf32>
    %318 = vector.shape_cast %317 : vector<16xf32> to vector<16x1xf32>
    %cst_146 = arith.constant 3.200000e+01 : f32
    %319 = vector.broadcast %cst_146 : f32 to vector<16x1xf32>
    %320 = arith.divf %318, %319 : vector<16x1xf32>
    %321 = vector.broadcast %320 : vector<16x1xf32> to vector<16x32xf32>
    %322 = arith.subf %314, %321 : vector<16x32xf32>
    %323 = arith.mulf %322, %322 : vector<16x32xf32>
    %cst_147 = arith.constant dense<0.000000e+00> : vector<16xf32>
    %324 = vector.multi_reduction <add>, %323, %cst_147 [1] : vector<16x32xf32> to vector<16xf32>
    %325 = vector.shape_cast %324 : vector<16xf32> to vector<16x1xf32>
    %cst_148 = arith.constant 3.100000e+01 : f32
    %326 = vector.broadcast %cst_148 : f32 to vector<16x1xf32>
    %327 = arith.divf %325, %326 : vector<16x1xf32>
    %328 = math.sqrt %327 : vector<16x1xf32>
    %cst_149 = arith.constant 9.99999997E-7 : f32
    %329 = vector.broadcast %cst_149 : f32 to vector<16x1xf32>
    %330 = arith.addf %328, %329 : vector<16x1xf32>
    %331 = tpu.reciprocal %330 {approx = true} : vector<16x1xf32> -> vector<16x1xf32>
    %332 = vector.broadcast %320 : vector<16x1xf32> to vector<16x32xf32>
    %333 = arith.subf %314, %332 : vector<16x32xf32>
    %334 = vector.broadcast %331 : vector<16x1xf32> to vector<16x32xf32>
    %335 = arith.mulf %333, %334 : vector<16x32xf32>
    %336 = vector.broadcast %315 : vector<1x32xf32> to vector<16x32xf32>
    %337 = arith.mulf %335, %336 : vector<16x32xf32>
    %338 = vector.broadcast %316 : vector<1x32xf32> to vector<16x32xf32>
    %339 = arith.addf %337, %338 : vector<16x32xf32>
    %c0_150 = arith.constant 0 : index
    %c0_151 = arith.constant 0 : index
    %340 = vector.load %arg19[%c0_150, %c0_151] : memref<32x128xf32, #tpu.memory_space<vmem>>, vector<32x128xf32>
    %cst_152 = arith.constant dense<0.000000e+00> : vector<16x128xf32>
    %341 = tpu.matmul %339, %340, %cst_152 {dimension_numbers = #tpu.dot_dimension_numbers<[1], [0], [0], [1], [0, 0, 1, 1], [], []>} : vector<16x32xf32>, vector<32x128xf32>, vector<16x128xf32> -> vector<16x128xf32>
    %c0_153 = arith.constant 0 : index
    %c0_154 = arith.constant 0 : index
    %342 = vector.load %arg20[%c0_153, %c0_154] : memref<1x128xf32, #tpu.memory_space<vmem>>, vector<1x128xf32>
    %343 = vector.broadcast %342 : vector<1x128xf32> to vector<16x128xf32>
    %344 = arith.addf %341, %343 : vector<16x128xf32>
    %cst_155 = arith.constant dense<0xFF800000> : vector<16xf32>
    %345 = vector.multi_reduction <maximumf>, %344, %cst_155 [1] : vector<16x128xf32> to vector<16xf32>
    %346 = vector.shape_cast %345 : vector<16xf32> to vector<16x1xf32>
    %347 = vector.broadcast %346 : vector<16x1xf32> to vector<16x128xf32>
    %348 = arith.subf %344, %347 : vector<16x128xf32>
    %349 = math.exp %348 : vector<16x128xf32>
    %cst_156 = arith.constant dense<0.000000e+00> : vector<16xf32>
    %350 = vector.multi_reduction <add>, %349, %cst_156 [1] : vector<16x128xf32> to vector<16xf32>
    %351 = vector.shape_cast %350 : vector<16xf32> to vector<16x1xf32>
    %352 = math.log %351 : vector<16x1xf32>
    %353 = vector.broadcast %352 : vector<16x1xf32> to vector<16x128xf32>
    %354 = arith.subf %348, %353 : vector<16x128xf32>
    %c0_157 = arith.constant 0 : index
    %c0_158 = arith.constant 0 : index
    %355 = vector.load %arg21[%c0_157, %c0_158] : memref<16x128xf32, #tpu.memory_space<vmem>>, vector<16x128xf32>
    tpu.vector_store %arg21[%c0_157, %c0_158], %354 {strides = array<i32>} : memref<16x128xf32, #tpu.memory_space<vmem>>, vector<16x128xf32>,
    return
  }
  func.func @transform_0(%arg0: i32) -> (i32, i32) {
    %c0_i32 = arith.constant 0 : i32
    %c0_i32_0 = arith.constant 0 : i32
    return %arg0, %c0_i32 : i32, i32
  }
  func.func @transform_1(%arg0: i32) -> (i32, i32) {
    %c0_i32 = arith.constant 0 : i32
    %c0_i32_0 = arith.constant 0 : i32
    %c0_i32_1 = arith.constant 0 : i32
    return %c0_i32, %c0_i32_0 : i32, i32
  }
  func.func @transform_2(%arg0: i32) -> (i32, i32) {
    %c0_i32 = arith.constant 0 : i32
    %c0_i32_0 = arith.constant 0 : i32
    %c0_i32_1 = arith.constant 0 : i32
    return %c0_i32, %c0_i32_0 : i32, i32
  }
  func.func @transform_3(%arg0: i32) -> (i32, i32) {
    %c0_i32 = arith.constant 0 : i32
    %c0_i32_0 = arith.constant 0 : i32
    %c0_i32_1 = arith.constant 0 : i32
    return %c0_i32, %c0_i32_0 : i32, i32
  }
  func.func @transform_4(%arg0: i32) -> (i32, i32, i32) {
    %c0_i32 = arith.constant 0 : i32
    %c0_i32_0 = arith.constant 0 : i32
    %c0_i32_1 = arith.constant 0 : i32
    %c0_i32_2 = arith.constant 0 : i32
    return %c0_i32, %c0_i32_0, %c0_i32_1 : i32, i32, i32
  }
  func.func @transform_5(%arg0: i32) -> (i32, i32, i32) {
    %c0_i32 = arith.constant 0 : i32
    %c0_i32_0 = arith.constant 0 : i32
    %c0_i32_1 = arith.constant 0 : i32
    %c0_i32_2 = arith.constant 0 : i32
    return %c0_i32, %c0_i32_0, %c0_i32_1 : i32, i32, i32
  }
  func.func @transform_6(%arg0: i32) -> (i32, i32, i32) {
    %c0_i32 = arith.constant 0 : i32
    %c0_i32_0 = arith.constant 0 : i32
    %c0_i32_1 = arith.constant 0 : i32
    %c0_i32_2 = arith.constant 0 : i32
    return %c0_i32, %c0_i32_0, %c0_i32_1 : i32, i32, i32
  }
  func.func @transform_7(%arg0: i32) -> (i32, i32, i32) {
    %c0_i32 = arith.constant 0 : i32
    %c0_i32_0 = arith.constant 0 : i32
    %c0_i32_1 = arith.constant 0 : i32
    %c0_i32_2 = arith.constant 0 : i32
    return %c0_i32, %c0_i32_0, %c0_i32_1 : i32, i32, i32
  }
  func.func @transform_8(%arg0: i32) -> (i32, i32, i32) {
    %c0_i32 = arith.constant 0 : i32
    %c0_i32_0 = arith.constant 0 : i32
    %c0_i32_1 = arith.constant 0 : i32
    %c0_i32_2 = arith.constant 0 : i32
    return %c0_i32, %c0_i32_0, %c0_i32_1 : i32, i32, i32
  }
  func.func @transform_9(%arg0: i32) -> (i32, i32, i32) {
    %c0_i32 = arith.constant 0 : i32
    %c0_i32_0 = arith.constant 0 : i32
    %c0_i32_1 = arith.constant 0 : i32
    %c0_i32_2 = arith.constant 0 : i32
    return %c0_i32, %c0_i32_0, %c0_i32_1 : i32, i32, i32
  }
  func.func @transform_10(%arg0: i32) -> (i32, i32, i32) {
    %c0_i32 = arith.constant 0 : i32
    %c0_i32_0 = arith.constant 0 : i32
    %c0_i32_1 = arith.constant 0 : i32
    %c0_i32_2 = arith.constant 0 : i32
    return %c0_i32, %c0_i32_0, %c0_i32_1 : i32, i32, i32
  }
  func.func @transform_11(%arg0: i32) -> (i32, i32, i32) {
    %c0_i32 = arith.constant 0 : i32
    %c0_i32_0 = arith.constant 0 : i32
    %c0_i32_1 = arith.constant 0 : i32
    %c0_i32_2 = arith.constant 0 : i32
    return %c0_i32, %c0_i32_0, %c0_i32_1 : i32, i32, i32
  }
  func.func @transform_12(%arg0: i32) -> (i32, i32, i32) {
    %c0_i32 = arith.constant 0 : i32
    %c0_i32_0 = arith.constant 0 : i32
    %c0_i32_1 = arith.constant 0 : i32
    %c0_i32_2 = arith.constant 0 : i32
    return %c0_i32, %c0_i32_0, %c0_i32_1 : i32, i32, i32
  }
  func.func @transform_13(%arg0: i32) -> (i32, i32, i32) {
    %c0_i32 = arith.constant 0 : i32
    %c0_i32_0 = arith.constant 0 : i32
    %c0_i32_1 = arith.constant 0 : i32
    %c0_i32_2 = arith.constant 0 : i32
    return %c0_i32, %c0_i32_0, %c0_i32_1 : i32, i32, i32
  }
  func.func @transform_14(%arg0: i32) -> (i32, i32, i32) {
    %c0_i32 = arith.constant 0 : i32
    %c0_i32_0 = arith.constant 0 : i32
    %c0_i32_1 = arith.constant 0 : i32
    %c0_i32_2 = arith.constant 0 : i32
    return %c0_i32, %c0_i32_0, %c0_i32_1 : i32, i32, i32
  }
  func.func @transform_15(%arg0: i32) -> (i32, i32, i32) {
    %c0_i32 = arith.constant 0 : i32
    %c0_i32_0 = arith.constant 0 : i32
    %c0_i32_1 = arith.constant 0 : i32
    %c0_i32_2 = arith.constant 0 : i32
    return %c0_i32, %c0_i32_0, %c0_i32_1 : i32, i32, i32
  }
  func.func @transform_16(%arg0: i32) -> (i32, i32) {
    %c0_i32 = arith.constant 0 : i32
    %c0_i32_0 = arith.constant 0 : i32
    %c0_i32_1 = arith.constant 0 : i32
    return %c0_i32, %c0_i32_0 : i32, i32
  }
  func.func @transform_17(%arg0: i32) -> (i32, i32) {
    %c0_i32 = arith.constant 0 : i32
    %c0_i32_0 = arith.constant 0 : i32
    %c0_i32_1 = arith.constant 0 : i32
    return %c0_i32, %c0_i32_0 : i32, i32
  }
  func.func @transform_18(%arg0: i32) -> (i32, i32) {
    %c0_i32 = arith.constant 0 : i32
    %c0_i32_0 = arith.constant 0 : i32
    %c0_i32_1 = arith.constant 0 : i32
    return %c0_i32, %c0_i32_0 : i32, i32
  }
  func.func @transform_19(%arg0: i32) -> (i32, i32) {
    %c0_i32 = arith.constant 0 : i32
    %c0_i32_0 = arith.constant 0 : i32
    %c0_i32_1 = arith.constant 0 : i32
    return %c0_i32, %c0_i32_0 : i32, i32
  }
  func.func @transform_20(%arg0: i32) -> (i32, i32) {
    %c0_i32 = arith.constant 0 : i32
    %c0_i32_0 = arith.constant 0 : i32
    return %arg0, %c0_i32 : i32, i32
  }
}

</mosaic_0001>

<llo_original>
// kernel: forward.1
$region0: #{forward.1}
  #allocation0 [shape = 'u32[]', space=smem, size = 0x4, offset = 0x4, fixed_abs, tag = 'smem constant byte address 0x4 - core index']
  #allocation1 [shape = 'u32[144,128]{1,0:T(1,128)}', space=vmem, size = 0x12000, scoped, tag = 'internal scratch']
  %s0 = inlined_call_operand.vmem [shape: s32[32,1], index: 0, kind: input, shape index: {}]
  %s1 = inlined_call_operand.vmem [shape: f32[64,32], index: 1, kind: input, shape index: {}]
  %s2 = inlined_call_operand.vmem [shape: f32[16,32], index: 2, kind: input, shape index: {}]
  %s3 = inlined_call_operand.vmem [shape: f32[16,16], index: 3, kind: input, shape index: {}]
  %s4 = inlined_call_operand.vmem [shape: f32[2,1,32], index: 4, kind: input, shape index: {}]
  %s5 = inlined_call_operand.vmem [shape: f32[2,1,32], index: 5, kind: input, shape index: {}]
  %s6 = inlined_call_operand.vmem [shape: f32[2,1,32], index: 6, kind: input, shape index: {}]
  %s7 = inlined_call_operand.vmem [shape: f32[2,1,32], index: 7, kind: input, shape index: {}]
  %s8 = inlined_call_operand.vmem [shape: f32[2,32,96], index: 8, kind: input, shape index: {}]
  %s9 = inlined_call_operand.vmem [shape: f32[2,1,96], index: 9, kind: input, shape index: {}]
  %s10 = inlined_call_operand.vmem [shape: f32[2,32,32], index: 10, kind: input, shape index: {}]
  %s11 = inlined_call_operand.vmem [shape: f32[2,1,32], index: 11, kind: input, shape index: {}]
  %s12 = inlined_call_operand.vmem [shape: f32[2,32,64], index: 12, kind: input, shape index: {}]
  %s13 = inlined_call_operand.vmem [shape: f32[2,1,64], index: 13, kind: input, shape index: {}]
  %s14 = inlined_call_operand.vmem [shape: f32[2,64,32], index: 14, kind: input, shape index: {}]
  %s15 = inlined_call_operand.vmem [shape: f32[2,1,32], index: 15, kind: input, shape index: {}]
  %s16 = inlined_call_operand.vmem [shape: f32[1,32], index: 16, kind: input, shape index: {}]
  %s17 = inlined_call_operand.vmem [shape: f32[1,32], index: 17, kind: input, shape index: {}]
  %s18 = inlined_call_operand.vmem [shape: f32[32,128], index: 18, kind: input, shape index: {}]
  %s19 = inlined_call_operand.vmem [shape: f32[1,128], index: 19, kind: input, shape index: {}]
  %s20 = inlined_call_operand.hbm [shape: f32[32,128], index: 20, kind: output, shape index: {}]
  %s21 = sld [smem:[#allocation0]]
  $region113: #{forward.1} parent=0
    _
  %s23 = ssub.s32 1, %s21
  %s24 = scalar_select 0, %s23, %s21
  $region1: #{forward.1} parent=0
    #allocation2 [shape = 'u8[16384]{0}', space=vmem, size = 0x4000, scoped, tag = 'output window, operand 0']
    #allocation3 [shape = 's32[2]{0}', space=sflag, size = 0x8, scoped, tag = 'scoped memory for forward.1']
    %25 = vsyncpa [#allocation3], 0
    %s26 = scalar_lea.sflag [#allocation3], 1
    %27 = vsyncpa %s26, 0
    loop: start=0, step=1, limit=4
    $region2: #{forward.1} parent=1 // loop_pre_header
      _
    $region3: #{forward.1} parent=1 // loop_header
      %s29 = sphi 0, %s33
      %p30 = scmp.ge.s32.totalorder %s29, 4
      %s39 = sphi 0, %s41
      %s42 = sphi 0, %s39
      %s43 = sphi 0, %s42
      %s59 = sphi 0, %s43
      %s63 = sphi 0, %s63
      %s65 = sphi 0, %s63
      %s66 = sphi 0, %s65
      %s80 = sphi 0, %s66
      %s84 = sphi 0, %s84
      %s86 = sphi 0, %s84
      %s87 = sphi 0, %s86
      %s101 = sphi 0, %s87
      %s105 = sphi 0, %s105
      %s107 = sphi 0, %s105
      %s108 = sphi 0, %s107
      %s122 = sphi 0, %s108
      %s126 = sphi 0, %s126
      %s128 = sphi 0, %s126
      %s129 = sphi 0, %s128
      %s143 = sphi 0, %s129
      %s147 = sphi 0, %s147
      %s149 = sphi 0, %s147
      %s150 = sphi 0, %s149
      %s164 = sphi 0, %s150
      %s168 = sphi 0, %s168
      %s170 = sphi 0, %s168
      %s171 = sphi 0, %s170
      %s185 = sphi 0, %s171
      %s189 = sphi 0, %s189
      %s191 = sphi 0, %s189
      %s192 = sphi 0, %s191
      %s206 = sphi 0, %s192
      %s210 = sphi 0, %s210
      %s212 = sphi 0, %s210
      %s213 = sphi 0, %s212
      %s227 = sphi 0, %s213
      %s231 = sphi 0, %s231
      %s233 = sphi 0, %s231
      %s234 = sphi 0, %s233
      %s248 = sphi 0, %s234
      %s252 = sphi 0, %s252
      %s254 = sphi 0, %s252
      %s255 = sphi 0, %s254
      %s269 = sphi 0, %s255
      %s273 = sphi 0, %s273
      %s275 = sphi 0, %s273
      %s276 = sphi 0, %s275
      %s290 = sphi 0, %s276
      %s294 = sphi 0, %s294
      %s296 = sphi 0, %s294
      %s297 = sphi 0, %s296
      %s311 = sphi 0, %s297
      %s315 = sphi 0, %s315
      %s317 = sphi 0, %s315
      %s318 = sphi 0, %s317
      %s332 = sphi 0, %s318
      %s336 = sphi 0, %s336
      %s338 = sphi 0, %s336
      %s339 = sphi 0, %s338
      %s353 = sphi 0, %s339
      %s357 = sphi 0, %s357
      %s359 = sphi 0, %s357
      %s360 = sphi 0, %s359
      %s374 = sphi 0, %s360
      %s378 = sphi 0, %s378
      %s380 = sphi 0, %s378
      %s381 = sphi 0, %s380
      %s395 = sphi 0, %s381
      %s399 = sphi 0, %s399
      %s401 = sphi 0, %s399
      %s402 = sphi 0, %s401
      %s416 = sphi 0, %s402
      %s420 = sphi 0, %s420
      %s422 = sphi 0, %s420
      %s423 = sphi 0, %s422
      %s437 = sphi 0, %s423
      %s441 = sphi 0, %s441
      %s443 = sphi 0, %s441
      %s444 = sphi 0, %s443
      %s458 = sphi 0, %s444
      %s464 = sphi 0, %s466
      %s467 = sphi 0, %s464
      %s468 = sphi 0, %s467
      %s484 = sphi 0, %s468
    $region4: #{forward.1} parent=1 // loop_header_branch
      %32 = sbr.rel (%p30) target = $region8
    $region5: #{forward.1} parent=1 // loop_body
      %s34 = ssub.s32 %s29, 1
      %s35 = ssub.s32 %s29, 2
      %s36 = sadd.s32 %s29, 1
      %s37 = ssub.s32 %s29, %s36
      %p38 = scmp.eq.s32.totalorder %s37, 0
      %s40 = sadd.s32 %s39, 1
      %s41 = scalar_select %p38, %s39, %s40
      %p44 = pneg %p38
      %p45 = scmp.eq.s32.totalorder %s29, 1
      %p46 = por %p44, %p45
      %p47 = scmp.ne.s32.totalorder %s39, %s42
      %p48 = scmp.eq.s32.totalorder %s29, 0
      %p49 = por %p47, %p48
      %p50 = scmp.ne.s32.totalorder %s39, %s42
      %p51 = scmp.eq.s32.totalorder %s34, 1
      %p52 = por %p50, %p51
      %p53 = scmp.ne.s32.totalorder %s42, %s43
      %p54 = scmp.eq.s32.totalorder %s34, 0
      %p55 = por %p53, %p54
      %p56 = scmp.ne.s32.totalorder %s42, %s43
      %p57 = scmp.eq.s32.totalorder %s35, 1
      %p58 = por %p56, %p57
      %p60 = scmp.ne.s32.totalorder %s43, %s59
      %p61 = scmp.eq.s32.totalorder %s35, 0
      %p62 = por %p60, %p61
      %s64 = sadd.s32 %s63, 1
      %p67 = scmp.eq.s32.totalorder %s29, 1
      %p68 = scmp.ne.s32.totalorder %s63, %s65
      %p69 = scmp.eq.s32.totalorder %s29, 0
      %p70 = por %p68, %p69
      %p71 = scmp.ne.s32.totalorder %s63, %s65
      %p72 = scmp.eq.s32.totalorder %s34, 1
      %p73 = por %p71, %p72
      %p74 = scmp.ne.s32.totalorder %s65, %s66
      %p75 = scmp.eq.s32.totalorder %s34, 0
      %p76 = por %p74, %p75
      %p77 = scmp.ne.s32.totalorder %s65, %s66
      %p78 = scmp.eq.s32.totalorder %s35, 1
      %p79 = por %p77, %p78
      %p81 = scmp.ne.s32.totalorder %s66, %s80
      %p82 = scmp.eq.s32.totalorder %s35, 0
      %p83 = por %p81, %p82
      %s85 = sadd.s32 %s84, 1
      %p88 = scmp.eq.s32.totalorder %s29, 1
      %p89 = scmp.ne.s32.totalorder %s84, %s86
      %p90 = scmp.eq.s32.totalorder %s29, 0
      %p91 = por %p89, %p90
      %p92 = scmp.ne.s32.totalorder %s84, %s86
      %p93 = scmp.eq.s32.totalorder %s34, 1
      %p94 = por %p92, %p93
      %p95 = scmp.ne.s32.totalorder %s86, %s87
      %p96 = scmp.eq.s32.totalorder %s34, 0
      %p97 = por %p95, %p96
      %p98 = scmp.ne.s32.totalorder %s86, %s87
      %p99 = scmp.eq.s32.totalorder %s35, 1
      %p100 = por %p98, %p99
      %p102 = scmp.ne.s32.totalorder %s87, %s101
      %p103 = scmp.eq.s32.totalorder %s35, 0
      %p104 = por %p102, %p103
      %s106 = sadd.s32 %s105, 1
      %p109 = scmp.eq.s32.totalorder %s29, 1
      %p110 = scmp.ne.s32.totalorder %s105, %s107
      %p111 = scmp.eq.s32.totalorder %s29, 0
      %p112 = por %p110, %p111
      %p113 = scmp.ne.s32.totalorder %s105, %s107
      %p114 = scmp.eq.s32.totalorder %s34, 1
      %p115 = por %p113, %p114
      %p116 = scmp.ne.s32.totalorder %s107, %s108
      %p117 = scmp.eq.s32.totalorder %s34, 0
      %p118 = por %p116, %p117
      %p119 = scmp.ne.s32.totalorder %s107, %s108
      %p120 = scmp.eq.s32.totalorder %s35, 1
      %p121 = por %p119, %p120
      %p123 = scmp.ne.s32.totalorder %s108, %s122
      %p124 = scmp.eq.s32.totalorder %s35, 0
      %p125 = por %p123, %p124
      %s127 = sadd.s32 %s126, 1
      %p130 = scmp.eq.s32.totalorder %s29, 1
      %p131 = scmp.ne.s32.totalorder %s126, %s128
      %p132 = scmp.eq.s32.totalorder %s29, 0
      %p133 = por %p131, %p132
      %p134 = scmp.ne.s32.totalorder %s126, %s128
      %p135 = scmp.eq.s32.totalorder %s34, 1
      %p136 = por %p134, %p135
      %p137 = scmp.ne.s32.totalorder %s128, %s129
      %p138 = scmp.eq.s32.totalorder %s34, 0
      %p139 = por %p137, %p138
      %p140 = scmp.ne.s32.totalorder %s128, %s129
      %p141 = scmp.eq.s32.totalorder %s35, 1
      %p142 = por %p140, %p141
      %p144 = scmp.ne.s32.totalorder %s129, %s143
      %p145 = scmp.eq.s32.totalorder %s35, 0
      %p146 = por %p144, %p145
      %s148 = sadd.s32 %s147, 1
      %p151 = scmp.eq.s32.totalorder %s29, 1
      %p152 = scmp.ne.s32.totalorder %s147, %s149
      %p153 = scmp.eq.s32.totalorder %s29, 0
      %p154 = por %p152, %p153
      %p155 = scmp.ne.s32.totalorder %s147, %s149
      %p156 = scmp.eq.s32.totalorder %s34, 1
      %p157 = por %p155, %p156
      %p158 = scmp.ne.s32.totalorder %s149, %s150
      %p159 = scmp.eq.s32.totalorder %s34, 0
      %p160 = por %p158, %p159
      %p161 = scmp.ne.s32.totalorder %s149, %s150
      %p162 = scmp.eq.s32.totalorder %s35, 1
      %p163 = por %p161, %p162
      %p165 = scmp.ne.s32.totalorder %s150, %s164
      %p166 = scmp.eq.s32.totalorder %s35, 0
      %p167 = por %p165, %p166
      %s169 = sadd.s32 %s168, 1
      %p172 = scmp.eq.s32.totalorder %s29, 1
      %p173 = scmp.ne.s32.totalorder %s168, %s170
      %p174 = scmp.eq.s32.totalorder %s29, 0
      %p175 = por %p173, %p174
      %p176 = scmp.ne.s32.totalorder %s168, %s170
      %p177 = scmp.eq.s32.totalorder %s34, 1
      %p178 = por %p176, %p177
      %p179 = scmp.ne.s32.totalorder %s170, %s171
      %p180 = scmp.eq.s32.totalorder %s34, 0
      %p181 = por %p179, %p180
      %p182 = scmp.ne.s32.totalorder %s170, %s171
      %p183 = scmp.eq.s32.totalorder %s35, 1
      %p184 = por %p182, %p183
      %p186 = scmp.ne.s32.totalorder %s171, %s185
      %p187 = scmp.eq.s32.totalorder %s35, 0
      %p188 = por %p186, %p187
      %s190 = sadd.s32 %s189, 1
      %p193 = scmp.eq.s32.totalorder %s29, 1
      %p194 = scmp.ne.s32.totalorder %s189, %s191
      %p195 = scmp.eq.s32.totalorder %s29, 0
      %p196 = por %p194, %p195
      %p197 = scmp.ne.s32.totalorder %s189, %s191
      %p198 = scmp.eq.s32.totalorder %s34, 1
      %p199 = por %p197, %p198
      %p200 = scmp.ne.s32.totalorder %s191, %s192
      %p201 = scmp.eq.s32.totalorder %s34, 0
      %p202 = por %p200, %p201
      %p203 = scmp.ne.s32.totalorder %s191, %s192
      %p204 = scmp.eq.s32.totalorder %s35, 1
      %p205 = por %p203, %p204
      %p207 = scmp.ne.s32.totalorder %s192, %s206
      %p208 = scmp.eq.s32.totalorder %s35, 0
      %p209 = por %p207, %p208
      %s211 = sadd.s32 %s210, 1
      %p214 = scmp.eq.s32.totalorder %s29, 1
      %p215 = scmp.ne.s32.totalorder %s210, %s212
      %p216 = scmp.eq.s32.totalorder %s29, 0
      %p217 = por %p215, %p216
      %p218 = scmp.ne.s32.totalorder %s210, %s212
      %p219 = scmp.eq.s32.totalorder %s34, 1
      %p220 = por %p218, %p219
      %p221 = scmp.ne.s32.totalorder %s212, %s213
      %p222 = scmp.eq.s32.totalorder %s34, 0
      %p223 = por %p221, %p222
      %p224 = scmp.ne.s32.totalorder %s212, %s213
      %p225 = scmp.eq.s32.totalorder %s35, 1
      %p226 = por %p224, %p225
      %p228 = scmp.ne.s32.totalorder %s213, %s227
      %p229 = scmp.eq.s32.totalorder %s35, 0
      %p230 = por %p228, %p229
      %s232 = sadd.s32 %s231, 1
      %p235 = scmp.eq.s32.totalorder %s29, 1
      %p236 = scmp.ne.s32.totalorder %s231, %s233
      %p237 = scmp.eq.s32.totalorder %s29, 0
      %p238 = por %p236, %p237
      %p239 = scmp.ne.s32.totalorder %s231, %s233
      %p240 = scmp.eq.s32.totalorder %s34, 1
      %p241 = por %p239, %p240
      %p242 = scmp.ne.s32.totalorder %s233, %s234
      %p243 = scmp.eq.s32.totalorder %s34, 0
      %p244 = por %p242, %p243
      %p245 = scmp.ne.s32.totalorder %s233, %s234
      %p246 = scmp.eq.s32.totalorder %s35, 1
      %p247 = por %p245, %p246
      %p249 = scmp.ne.s32.totalorder %s234, %s248
      %p250 = scmp.eq.s32.totalorder %s35, 0
      %p251 = por %p249, %p250
      %s253 = sadd.s32 %s252, 1
      %p256 = scmp.eq.s32.totalorder %s29, 1
      %p257 = scmp.ne.s32.totalorder %s252, %s254
      %p258 = scmp.eq.s32.totalorder %s29, 0
      %p259 = por %p257, %p258
      %p260 = scmp.ne.s32.totalorder %s252, %s254
      %p261 = scmp.eq.s32.totalorder %s34, 1
      %p262 = por %p260, %p261
      %p263 = scmp.ne.s32.totalorder %s254, %s255
      %p264 = scmp.eq.s32.totalorder %s34, 0
      %p265 = por %p263, %p264
      %p266 = scmp.ne.s32.totalorder %s254, %s255
      %p267 = scmp.eq.s32.totalorder %s35, 1
      %p268 = por %p266, %p267
      %p270 = scmp.ne.s32.totalorder %s255, %s269
      %p271 = scmp.eq.s32.totalorder %s35, 0
      %p272 = por %p270, %p271
      %s274 = sadd.s32 %s273, 1
      %p277 = scmp.eq.s32.totalorder %s29, 1
      %p278 = scmp.ne.s32.totalorder %s273, %s275
      %p279 = scmp.eq.s32.totalorder %s29, 0
      %p280 = por %p278, %p279
      %p281 = scmp.ne.s32.totalorder %s273, %s275
      %p282 = scmp.eq.s32.totalorder %s34, 1
      %p283 = por %p281, %p282
      %p284 = scmp.ne.s32.totalorder %s275, %s276
      %p285 = scmp.eq.s32.totalorder %s34, 0
      %p286 = por %p284, %p285
      %p287 = scmp.ne.s32.totalorder %s275, %s276
      %p288 = scmp.eq.s32.totalorder %s35, 1
      %p289 = por %p287, %p288
      %p291 = scmp.ne.s32.totalorder %s276, %s290
      %p292 = scmp.eq.s32.totalorder %s35, 0
      %p293 = por %p291, %p292
      %s295 = sadd.s32 %s294, 1
      %p298 = scmp.eq.s32.totalorder %s29, 1
      %p299 = scmp.ne.s32.totalorder %s294, %s296
      %p300 = scmp.eq.s32.totalorder %s29, 0
      %p301 = por %p299, %p300
      %p302 = scmp.ne.s32.totalorder %s294, %s296
      %p303 = scmp.eq.s32.totalorder %s34, 1
      %p304 = por %p302, %p303
      %p305 = scmp.ne.s32.totalorder %s296, %s297
      %p306 = scmp.eq.s32.totalorder %s34, 0
      %p307 = por %p305, %p306
      %p308 = scmp.ne.s32.totalorder %s296, %s297
      %p309 = scmp.eq.s32.totalorder %s35, 1
      %p310 = por %p308, %p309
      %p312 = scmp.ne.s32.totalorder %s297, %s311
      %p313 = scmp.eq.s32.totalorder %s35, 0
      %p314 = por %p312, %p313
      %s316 = sadd.s32 %s315, 1
      %p319 = scmp.eq.s32.totalorder %s29, 1
      %p320 = scmp.ne.s32.totalorder %s315, %s317
      %p321 = scmp.eq.s32.totalorder %s29, 0
      %p322 = por %p320, %p321
      %p323 = scmp.ne.s32.totalorder %s315, %s317
      %p324 = scmp.eq.s32.totalorder %s34, 1
      %p325 = por %p323, %p324
      %p326 = scmp.ne.s32.totalorder %s317, %s318
      %p327 = scmp.eq.s32.totalorder %s34, 0
      %p328 = por %p326, %p327
      %p329 = scmp.ne.s32.totalorder %s317, %s318
      %p330 = scmp.eq.s32.totalorder %s35, 1
      %p331 = por %p329, %p330
      %p333 = scmp.ne.s32.totalorder %s318, %s332
      %p334 = scmp.eq.s32.totalorder %s35, 0
      %p335 = por %p333, %p334
      %s337 = sadd.s32 %s336, 1
      %p340 = scmp.eq.s32.totalorder %s29, 1
      %p341 = scmp.ne.s32.totalorder %s336, %s338
      %p342 = scmp.eq.s32.totalorder %s29, 0
      %p343 = por %p341, %p342
      %p344 = scmp.ne.s32.totalorder %s336, %s338
      %p345 = scmp.eq.s32.totalorder %s34, 1
      %p346 = por %p344, %p345
      %p347 = scmp.ne.s32.totalorder %s338, %s339
      %p348 = scmp.eq.s32.totalorder %s34, 0
      %p349 = por %p347, %p348
      %p350 = scmp.ne.s32.totalorder %s338, %s339
      %p351 = scmp.eq.s32.totalorder %s35, 1
      %p352 = por %p350, %p351
      %p354 = scmp.ne.s32.totalorder %s339, %s353
      %p355 = scmp.eq.s32.totalorder %s35, 0
      %p356 = por %p354, %p355
      %s358 = sadd.s32 %s357, 1
      %p361 = scmp.eq.s32.totalorder %s29, 1
      %p362 = scmp.ne.s32.totalorder %s357, %s359
      %p363 = scmp.eq.s32.totalorder %s29, 0
      %p364 = por %p362, %p363
      %p365 = scmp.ne.s32.totalorder %s357, %s359
      %p366 = scmp.eq.s32.totalorder %s34, 1
      %p367 = por %p365, %p366
      %p368 = scmp.ne.s32.totalorder %s359, %s360
      %p369 = scmp.eq.s32.totalorder %s34, 0
      %p370 = por %p368, %p369
      %p371 = scmp.ne.s32.totalorder %s359, %s360
      %p372 = scmp.eq.s32.totalorder %s35, 1
      %p373 = por %p371, %p372
      %p375 = scmp.ne.s32.totalorder %s360, %s374
      %p376 = scmp.eq.s32.totalorder %s35, 0
      %p377 = por %p375, %p376
      %s379 = sadd.s32 %s378, 1
      %p382 = scmp.eq.s32.totalorder %s29, 1
      %p383 = scmp.ne.s32.totalorder %s378, %s380
      %p384 = scmp.eq.s32.totalorder %s29, 0
      %p385 = por %p383, %p384
      %p386 = scmp.ne.s32.totalorder %s378, %s380
      %p387 = scmp.eq.s32.totalorder %s34, 1
      %p388 = por %p386, %p387
      %p389 = scmp.ne.s32.totalorder %s380, %s381
      %p390 = scmp.eq.s32.totalorder %s34, 0
      %p391 = por %p389, %p390
      %p392 = scmp.ne.s32.totalorder %s380, %s381
      %p393 = scmp.eq.s32.totalorder %s35, 1
      %p394 = por %p392, %p393
      %p396 = scmp.ne.s32.totalorder %s381, %s395
      %p397 = scmp.eq.s32.totalorder %s35, 0
      %p398 = por %p396, %p397
      %s400 = sadd.s32 %s399, 1
      %p403 = scmp.eq.s32.totalorder %s29, 1
      %p404 = scmp.ne.s32.totalorder %s399, %s401
      %p405 = scmp.eq.s32.totalorder %s29, 0
      %p406 = por %p404, %p405
      %p407 = scmp.ne.s32.totalorder %s399, %s401
      %p408 = scmp.eq.s32.totalorder %s34, 1
      %p409 = por %p407, %p408
      %p410 = scmp.ne.s32.totalorder %s401, %s402
      %p411 = scmp.eq.s32.totalorder %s34, 0
      %p412 = por %p410, %p411
      %p413 = scmp.ne.s32.totalorder %s401, %s402
      %p414 = scmp.eq.s32.totalorder %s35, 1
      %p415 = por %p413, %p414
      %p417 = scmp.ne.s32.totalorder %s402, %s416
      %p418 = scmp.eq.s32.totalorder %s35, 0
      %p419 = por %p417, %p418
      %s421 = sadd.s32 %s420, 1
      %p424 = scmp.eq.s32.totalorder %s29, 1
      %p425 = scmp.ne.s32.totalorder %s420, %s422
      %p426 = scmp.eq.s32.totalorder %s29, 0
      %p427 = por %p425, %p426
      %p428 = scmp.ne.s32.totalorder %s420, %s422
      %p429 = scmp.eq.s32.totalorder %s34, 1
      %p430 = por %p428, %p429
      %p431 = scmp.ne.s32.totalorder %s422, %s423
      %p432 = scmp.eq.s32.totalorder %s34, 0
      %p433 = por %p431, %p432
      %p434 = scmp.ne.s32.totalorder %s422, %s423
      %p435 = scmp.eq.s32.totalorder %s35, 1
      %p436 = por %p434, %p435
      %p438 = scmp.ne.s32.totalorder %s423, %s437
      %p439 = scmp.eq.s32.totalorder %s35, 0
      %p440 = por %p438, %p439
      %s442 = sadd.s32 %s441, 1
      %p445 = scmp.eq.s32.totalorder %s29, 1
      %p446 = scmp.ne.s32.totalorder %s441, %s443
      %p447 = scmp.eq.s32.totalorder %s29, 0
      %p448 = por %p446, %p447
      %p449 = scmp.ne.s32.totalorder %s441, %s443
      %p450 = scmp.eq.s32.totalorder %s34, 1
      %p451 = por %p449, %p450
      %p452 = scmp.ne.s32.totalorder %s443, %s444
      %p453 = scmp.eq.s32.totalorder %s34, 0
      %p454 = por %p452, %p453
      %p455 = scmp.ne.s32.totalorder %s443, %s444
      %p456 = scmp.eq.s32.totalorder %s35, 1
      %p457 = por %p455, %p456
      %p459 = scmp.ne.s32.totalorder %s444, %s458
      %p460 = scmp.eq.s32.totalorder %s35, 0
      %p461 = por %p459, %p460
      %s462 = ssub.s32 %s29, %s36
      %p463 = scmp.eq.s32.totalorder %s462, 0
      %s465 = sadd.s32 %s464, 1
      %s466 = scalar_select %p463, %s464, %s465
      %p469 = pneg %p463
      %p470 = scmp.eq.s32.totalorder %s29, 1
      %p471 = por %p469, %p470
      %p472 = scmp.ne.s32.totalorder %s464, %s467
      %p473 = scmp.eq.s32.totalorder %s29, 0
      %p474 = por %p472, %p473
      %p475 = scmp.ne.s32.totalorder %s464, %s467
      %p476 = scmp.eq.s32.totalorder %s34, 1
      %p477 = por %p475, %p476
      %p478 = scmp.ne.s32.totalorder %s467, %s468
      %p479 = scmp.eq.s32.totalorder %s34, 0
      %p480 = por %p478, %p479
      %p481 = scmp.ne.s32.totalorder %s467, %s468
      %p482 = scmp.eq.s32.totalorder %s35, 1
      %p483 = por %p481, %p482
      %p485 = scmp.ne.s32.totalorder %s468, %s484
      %p486 = scmp.eq.s32.totalorder %s35, 0
      %p487 = por %p485, %p486
      %p488 = scmp.le.s32.totalorder 1, %s29
      %p489 = scmp.lt.s32.totalorder %s29, 3
      %p490 = pnand %p488, %p489
      %p491 = pneg %p490
      // Predicated region
      $region9: #{forward.1} parent=5 // pred_check
        _
      $region10: #{forward.1} parent=5 // pred_check_branch
        %493 = sbr.rel (%p490) target = $region12
      $region11: #{forward.1} parent=5 // pred_region
        %s494 = ssub.s32 %s29, 1
        // Predicated region
        $region13: #{forward.1} parent=11 // pred_check
          %p495 = pneg %p76
        $region14: #{forward.1} parent=11 // pred_check_branch
          %497 = sbr.rel (%p495) target = $region16
        $region15: #{forward.1} parent=11 // pred_region
          _
        $region16: #{forward.1} parent=11 // pred_fallthru
          _
        // Predicated region
        $region17: #{forward.1} parent=11 // pred_check
          %p498 = pneg %p97
        $region18: #{forward.1} parent=11 // pred_check_branch
          %500 = sbr.rel (%p498) target = $region20
        $region19: #{forward.1} parent=11 // pred_region
          _
        $region20: #{forward.1} parent=11 // pred_fallthru
          _
        // Predicated region
        $region21: #{forward.1} parent=11 // pred_check
          %p501 = pneg %p118
        $region22: #{forward.1} parent=11 // pred_check_branch
          %503 = sbr.rel (%p501) target = $region24
        $region23: #{forward.1} parent=11 // pred_region
          _
        $region24: #{forward.1} parent=11 // pred_fallthru
          _
        // Predicated region
        $region25: #{forward.1} parent=11 // pred_check
          %p504 = pneg %p139
        $region26: #{forward.1} parent=11 // pred_check_branch
          %506 = sbr.rel (%p504) target = $region28
        $region27: #{forward.1} parent=11 // pred_region
          _
        $region28: #{forward.1} parent=11 // pred_fallthru
          _
        // Predicated region
        $region29: #{forward.1} parent=11 // pred_check
          %p507 = pneg %p160
        $region30: #{forward.1} parent=11 // pred_check_branch
          %509 = sbr.rel (%p507) target = $region32
        $region31: #{forward.1} parent=11 // pred_region
          _
        $region32: #{forward.1} parent=11 // pred_fallthru
          _
        // Predicated region
        $region33: #{forward.1} parent=11 // pred_check
          %p510 = pneg %p181
        $region34: #{forward.1} parent=11 // pred_check_branch
          %512 = sbr.rel (%p510) target = $region36
        $region35: #{forward.1} parent=11 // pred_region
          _
        $region36: #{forward.1} parent=11 // pred_fallthru
          _
        // Predicated region
        $region37: #{forward.1} parent=11 // pred_check
          %p513 = pneg %p202
        $region38: #{forward.1} parent=11 // pred_check_branch
          %515 = sbr.rel (%p513) target = $region40
        $region39: #{forward.1} parent=11 // pred_region
          _
        $region40: #{forward.1} parent=11 // pred_fallthru
          _
        // Predicated region
        $region41: #{forward.1} parent=11 // pred_check
          %p516 = pneg %p223
        $region42: #{forward.1} parent=11 // pred_check_branch
          %518 = sbr.rel (%p516) target = $region44
        $region43: #{forward.1} parent=11 // pred_region
          _
        $region44: #{forward.1} parent=11 // pred_fallthru
          _
        // Predicated region
        $region45: #{forward.1} parent=11 // pred_check
          %p519 = pneg %p244
        $region46: #{forward.1} parent=11 // pred_check_branch
          %521 = sbr.rel (%p519) target = $region48
        $region47: #{forward.1} parent=11 // pred_region
          _
        $region48: #{forward.1} parent=11 // pred_fallthru
          _
        // Predicated region
        $region49: #{forward.1} parent=11 // pred_check
          %p522 = pneg %p265
        $region50: #{forward.1} parent=11 // pred_check_branch
          %524 = sbr.rel (%p522) target = $region52
        $region51: #{forward.1} parent=11 // pred_region
          _
        $region52: #{forward.1} parent=11 // pred_fallthru
          _
        // Predicated region
        $region53: #{forward.1} parent=11 // pred_check
          %p525 = pneg %p286
        $region54: #{forward.1} parent=11 // pred_check_branch
          %527 = sbr.rel (%p525) target = $region56
        $region55: #{forward.1} parent=11 // pred_region
          _
        $region56: #{forward.1} parent=11 // pred_fallthru
          _
        // Predicated region
        $region57: #{forward.1} parent=11 // pred_check
          %p528 = pneg %p307
        $region58: #{forward.1} parent=11 // pred_check_branch
          %530 = sbr.rel (%p528) target = $region60
        $region59: #{forward.1} parent=11 // pred_region
          _
        $region60: #{forward.1} parent=11 // pred_fallthru
          _
        // Predicated region
        $region61: #{forward.1} parent=11 // pred_check
          %p531 = pneg %p328
        $region62: #{forward.1} parent=11 // pred_check_branch
          %533 = sbr.rel (%p531) target = $region64
        $region63: #{forward.1} parent=11 // pred_region
          _
        $region64: #{forward.1} parent=11 // pred_fallthru
          _
        // Predicated region
        $region65: #{forward.1} parent=11 // pred_check
          %p534 = pneg %p349
        $region66: #{forward.1} parent=11 // pred_check_branch
          %536 = sbr.rel (%p534) target = $region68
        $region67: #{forward.1} parent=11 // pred_region
          _
        $region68: #{forward.1} parent=11 // pred_fallthru
          _
        // Predicated region
        $region69: #{forward.1} parent=11 // pred_check
          %p537 = pneg %p370
        $region70: #{forward.1} parent=11 // pred_check_branch
          %539 = sbr.rel (%p537) target = $region72
        $region71: #{forward.1} parent=11 // pred_region
          _
        $region72: #{forward.1} parent=11 // pred_fallthru
          _
        // Predicated region
        $region73: #{forward.1} parent=11 // pred_check
          %p540 = pneg %p391
        $region74: #{forward.1} parent=11 // pred_check_branch
          %542 = sbr.rel (%p540) target = $region76
        $region75: #{forward.1} parent=11 // pred_region
          _
        $region76: #{forward.1} parent=11 // pred_fallthru
          _
        // Predicated region
        $region77: #{forward.1} parent=11 // pred_check
          %p543 = pneg %p412
        $region78: #{forward.1} parent=11 // pred_check_branch
          %545 = sbr.rel (%p543) target = $region80
        $region79: #{forward.1} parent=11 // pred_region
          _
        $region80: #{forward.1} parent=11 // pred_fallthru
          _
        // Predicated region
        $region81: #{forward.1} parent=11 // pred_check
          %p546 = pneg %p433
        $region82: #{forward.1} parent=11 // pred_check_branch
          %548 = sbr.rel (%p546) target = $region84
        $region83: #{forward.1} parent=11 // pred_region
          _
        $region84: #{forward.1} parent=11 // pred_fallthru
          _
        // Predicated region
        $region85: #{forward.1} parent=11 // pred_check
          %p549 = pneg %p454
        $region86: #{forward.1} parent=11 // pred_check_branch
          %551 = sbr.rel (%p549) target = $region88
        $region87: #{forward.1} parent=11 // pred_region
          _
        $region88: #{forward.1} parent=11 // pred_fallthru
          _
      $region12: #{forward.1} parent=5 // pred_fallthru
        _
      %p552 = scmp.lt.s32.totalorder %s29, 2
      // Predicated region
      $region89: #{forward.1} parent=5 // pred_check
        %p553 = pneg %p552
      $region90: #{forward.1} parent=5 // pred_check_branch
        %555 = sbr.rel (%p553) target = $region92
      $region91: #{forward.1} parent=5 // pred_region
        // Predicated region
        $region93: #{forward.1} parent=91 // pred_check
          %p556 = pneg %p49
        $region94: #{forward.1} parent=91 // pred_check_branch
          %558 = sbr.rel (%p556) target = $region96
        $region95: #{forward.1} parent=91 // pred_region
          %s559 = smul.u32 2, %s29
          %p560 = scmp.lt.s32.totalorder %s559, 3
          %s561 = scalar_select %p560, %s559, 3
          %s562 = smul.addr %s561, 8
          %s563 = scalar_lea.vmem %s0, %s562
          %s564 = smul.u32 2, %s29
        $region96: #{forward.1} parent=91 // pred_fallthru
          _
      $region92: #{forward.1} parent=5 // pred_fallthru
        _
      %p565 = scmp.le.s32.totalorder 1, %s29
      %p566 = scmp.lt.s32.totalorder %s29, 3
      %p567 = pnand %p565, %p566
      %p568 = pneg %p567
      // Predicated region
      $region97: #{forward.1} parent=5 // pred_check
        _
      $region98: #{forward.1} parent=5 // pred_check_branch
        %570 = sbr.rel (%p567) target = $region100
      $region99: #{forward.1} parent=5 // pred_region
        %s571 = ssub.s32 %s29, 1
        %s572 = smul.u32 2, %s34
        %p573 = scmp.lt.s32.totalorder %s572, 3
        %s574 = scalar_select %p573, %s572, 3
        %s575 = smul.addr %s574, 8
        %s576 = scalar_lea.vmem %s0, %s575
        %p577 = pneg %p55
        %p578 = pneg %p52
        %p579 = pneg %p76
        %p580 = pneg %p73
        %p581 = pneg %p97
        %p582 = pneg %p94
        %p583 = pneg %p118
        %p584 = pneg %p115
        %p585 = pneg %p139
        %p586 = pneg %p136
        %p587 = pneg %p160
        %p588 = pneg %p157
        %p589 = pneg %p181
        %p590 = pneg %p178
        %p591 = pneg %p202
        %p592 = pneg %p199
        %p593 = pneg %p223
        %p594 = pneg %p220
        %p595 = pneg %p244
        %p596 = pneg %p241
        %p597 = pneg %p265
        %p598 = pneg %p262
        %p599 = pneg %p286
        %p600 = pneg %p283
        %p601 = pneg %p307
        %p602 = pneg %p304
        %p603 = pneg %p328
        %p604 = pneg %p325
        %p605 = pneg %p349
        %p606 = pneg %p346
        %p607 = pneg %p370
        %p608 = pneg %p367
        %p609 = pneg %p391
        %p610 = pneg %p388
        %p611 = pneg %p412
        %p612 = pneg %p409
        %p613 = pneg %p433
        %p614 = pneg %p430
        %p615 = pneg %p454
        %p616 = pneg %p451
        %p617 = pneg %p480
        %p618 = pneg %p477
        %s619 = sand.u32 %s467, 1
        %s620 = scalar_lea.sflag [#allocation3], %s619
        %s621 = sand.u32 %s467, 1
        %s622 = smul.addr %s621, 16
        %s623 = scalar_lea.vmem [#allocation2], %s622
        %s624 = smul.u32 2, %s34
        %p625 = scmp.lt.s32.totalorder %s624, 3
        %s626 = scalar_select %p625, %s624, 3
        %s627 = smul.addr %s626, 8
        %s628 = scalar_lea.vmem %s0, %s627
        %s629 = smul.u32 2, %s34
        %s630 = smul.u32 2, %s34
        %v631 = vld [vmem:[%s628] sm:$0xff]
        %v632 = vld [vmem:[%s628 + $0x8] sm:$0xff]
        %v633 = vlaneseq
        %v634 = vand.u32 %v633, 127
        %635 = vset.pattern.permute.xlu0 0
        %636 = vperm.xlu0 %635, %v631
        %v637 = vpop.permute.xlu0 %636
        %638 = vset.pattern.permute.xlu0 0
        %639 = vperm.xlu0 %638, %v632
        %v640 = vpop.permute.xlu0 %639
        %vm641 = vcmp.eq.s32.totalorder %v634, %v637
        %vm642 = vcmp.eq.s32.totalorder %v634, %v640
        %v643 = vsel %vm641, 1, 0
        %v644 = vsel %vm642, 1, 0
        %v645 = vcvt.s32.f32 %v643
        %v646 = vcvt.s32.f32 %v644
        %v647 = vld [vmem:[%s1] sm:$0xff]
        %v648 = vld [vmem:[%s1 + $0x8] sm:$0xff]
        %v649 = vld [vmem:[%s1 + $0x10] sm:$0xff]
        %v650 = vld [vmem:[%s1 + $0x18] sm:$0xff]
        %v651 = vld [vmem:[%s1 + $0x20] sm:$0xff]
        %v652 = vld [vmem:[%s1 + $0x28] sm:$0xff]
        %v653 = vld [vmem:[%s1 + $0x30] sm:$0xff]
        %v654 = vld [vmem:[%s1 + $0x38] sm:$0xff]
        %vm655 = vcmask 523264
        %v657 = vsel %vm655, %v645, 0
        %v660 = vsel %vm655, %v646, 0
        %662 = vmatprep.subr.mxu0 0.0
        %663 = vmatpush1.msra.mxu0 0.0
        %664 = vmatprep.subr.mxu0 0.0
        %665 = vmatpush1.msra.mxu0 0.0
        %666 = vmatprep.subr.mxu0 0.0
        %667 = vmatpush1.msra.mxu0 0.0
        %668 = vmatprep.subr.mxu0 0.0
        %669 = vmatpush1.msra.mxu0 0.0
        %670 = vmatprep.subr.mxu0 0.0
        %671 = vmatpush1.msra.mxu0 0.0
        %672 = vmatprep.subr.mxu0 0.0
        %673 = vmatpush1.msra.mxu0 0.0
        %674 = vmatprep.subr.mxu0 0.0
        %675 = vmatpush1.msra.mxu0 0.0
        %676 = vmatprep.subr.mxu0 0.0
        %677 = vmatpush1.msra.mxu0 0.0
        %678 = vmatprep.subr.mxu0 0.0
        %679 = vmatpush1.msra.mxu0 %v654
        %680 = vmatprep.subr.mxu0 0.0
        %681 = vmatpush1.msra.mxu0 %v653
        %682 = vmatprep.subr.mxu0 0.0
        %683 = vmatpush1.msra.mxu0 %v652
        %684 = vmatprep.subr.mxu0 0.0
        %685 = vmatpush1.msra.mxu0 %v651
        %686 = vmatprep.subr.mxu0 0.0
        %687 = vmatpush1.msra.mxu0 %v650
        %688 = vmatprep.subr.mxu0 0.0
        %689 = vmatpush1.msra.mxu0 %v649
        %690 = vmatprep.subr.mxu0 0.0
        %691 = vmatpush1.msra.mxu0 %v648
        %692 = vmatprep.subr.mxu0 0.0
        %693 = vmatpush1.msra.mxu0 %v647
        %694 = vmatprep.subr.mxu0 0.0
        %695 = vmatpush2.msra.mxu0 0.0
        %696 = vmatprep.subr.mxu0 0.0
        %697 = vmatpush2.msra.mxu0 0.0
        %698 = vmatprep.subr.mxu0 0.0
        %699 = vmatpush2.msra.mxu0 0.0
        %700 = vmatprep.subr.mxu0 0.0
        %701 = vmatpush2.msra.mxu0 0.0
        %702 = vmatprep.subr.mxu0 0.0
        %703 = vmatpush2.msra.mxu0 0.0
        %704 = vmatprep.subr.mxu0 0.0
        %705 = vmatpush2.msra.mxu0 0.0
        %706 = vmatprep.subr.mxu0 0.0
        %707 = vmatpush2.msra.mxu0 0.0
        %708 = vmatprep.subr.mxu0 0.0
        %709 = vmatpush2.msra.mxu0 0.0
        %710 = vmatprep.subr.mxu0 0.0
        %711 = vmatpush2.msra.mxu0 0.0
        %712 = vmatprep.subr.mxu0 0.0
        %713 = vmatpush2.msra.mxu0 0.0
        %714 = vmatprep.subr.mxu0 0.0
        %715 = vmatpush2.msra.mxu0 0.0
        %716 = vmatprep.subr.mxu0 0.0
        %717 = vmatpush2.msra.mxu0 0.0
        %718 = vmatprep.subr.mxu0 0.0
        %719 = vmatpush2.msra.mxu0 0.0
        %720 = vmatprep.subr.mxu0 0.0
        %721 = vmatpush2.msra.mxu0 0.0
        %722 = vmatprep.subr.mxu0 0.0
        %723 = vmatpush2.msra.mxu0 0.0
        %724 = vmatprep.subr.mxu0 0.0
        %725 = vmatpush2.msra.mxu0 0.0
        %726 = vmatprep.mubr.f32.mxu0 0.0
        %727 = vmatmul.mubr.f32.gmra.mxu0 %v657
        %v728 = vpop.f32.mrf.mxu0
        %v729 = vadd.f32 0.0, %v728
        %v730 = vpop.f32.mrf.mxu0
        %731 = vmatprep.mubr.f32.mxu0 0.0
        %732 = vmatmul.mubr.f32.gmra.mxu0 %v660
        %v733 = vpop.f32.mrf.mxu0
        %v734 = vadd.f32 0.0, %v733
        %v735 = vpop.f32.mrf.mxu0
        %736 = vdwg.mxu0
        %v737 = vmul.f32 %v729, 5.656854
        %v738 = vmul.f32 %v734, 5.656854
        %v739 = vld [vmem:[%s2] sm:$0xff]
        %v740 = vld [vmem:[%s2 + $0x8] sm:$0xff]
        %v741 = vadd.f32 %v737, %v739
        %v742 = vadd.f32 %v738, %v740
        %v743 = vld [vmem:[%s3] sm:$0xff]
        %v744 = vld [vmem:[%s3 + $0x8] sm:$0xff]
        %v745 = vld [vmem:[%s4] sm:$0x1]
        %v746 = vld [vmem:[%s5] sm:$0x1]
        %vm747 = vcmask 261120
        %v748 = vsel %vm747, %v741, 0.0
        %749 = vadd.xlane.f32.xlu0 %v748
        %v750 = vpop.xlane.xlu0 %749
        %v751 = vsel %vm747, %v742, 0.0
        %752 = vadd.xlane.f32.xlu0 %v751
        %v753 = vpop.xlane.xlu0 %752
        %v754 = vrcp.pop 32.0
        %v755 = vmul.f32 %v750, %v754
        %v756 = vmul.f32 %v753, %v754
        %v757 = vsub.f32 %v741, %v755
        %v758 = vsub.f32 %v742, %v756
        %v759 = vmul.f32 %v757, %v757
        %v760 = vmul.f32 %v758, %v758
        %v761 = vsel %vm747, %v759, 0.0
        %762 = vadd.xlane.f32.xlu0 %v761
        %v763 = vpop.xlane.xlu0 %762
        %v764 = vsel %vm747, %v760, 0.0
        %765 = vadd.xlane.f32.xlu0 %v764
        %v766 = vpop.xlane.xlu0 %765
        %v767 = vrcp.pop 31.0
        %v768 = vmul.f32 %v763, %v767
        %v769 = vmul.f32 %v766, %v767
        %v770 = vrsqrt.pop %v768
        %v771 = vmul.f32 %v768, %v770
        %vm772 = vcmp.eq.f32.partialorder %v768, inf
        %v773 = vsel %vm772, %v768, %v771
        %vm774 = vcmp.eq.f32.partialorder %v768, 0.0
        %v775 = vand.u32 %v768, 2147483648
        %v776 = vsel %vm774, %v775, %v773
        %v777 = vrsqrt.pop %v769
        %v778 = vmul.f32 %v769, %v777
        %vm779 = vcmp.eq.f32.partialorder %v769, inf
        %v780 = vsel %vm779, %v769, %v778
        %vm781 = vcmp.eq.f32.partialorder %v769, 0.0
        %v782 = vand.u32 %v769, 2147483648
        %v783 = vsel %vm781, %v782, %v780
        %v784 = vadd.f32 %v776, 1e-06
        %v785 = vadd.f32 %v783, 1e-06
        %v786 = vrcp.pop %v784
        %v787 = vrcp.pop %v785
        %v788 = vmul.f32 %v757, %v786
        %v789 = vmul.f32 %v758, %v787
        %v791 = vlaneseq
        %v792 = vshrl.u32 %v791, 7
        %v793 = vsub.s32 0, %v792
        %v794 = vrot.slane %v745, %v793
        %v796 = vmul.f32 %v788, %v794
        %v797 = vmul.f32 %v789, %v794
        %v799 = vlaneseq
        %v800 = vshrl.u32 %v799, 7
        %v801 = vsub.s32 0, %v800
        %v802 = vrot.slane %v746, %v801
        %v804 = vadd.f32 %v796, %v802
        %v805 = vadd.f32 %v797, %v802
        %v806 = vld [vmem:[%s8] sm:$0xff]
        %v807 = vld [vmem:[%s8 + $0x8] sm:$0xff]
        %v808 = vld [vmem:[%s8 + $0x10] sm:$0xff]
        %v809 = vld [vmem:[%s8 + $0x18] sm:$0xff]
        %v810 = vld [vmem:[%s9] sm:$0x1]
        %v812 = vlaneseq
        %v813 = vshrl.u32 %v812, 7
        %v814 = vsub.s32 0, %v813
        %v815 = vrot.slane %v810, %v814
        %v818 = vsel %vm747, %v804, 0
        %v821 = vsel %vm747, %v805, 0
        %823 = vmatprep.subr.mxu0 0.0
        %824 = vmatpush1.msra.mxu0 0.0
        %825 = vmatprep.subr.mxu0 0.0
        %826 = vmatpush1.msra.mxu0 0.0
        %827 = vmatprep.subr.mxu0 0.0
        %828 = vmatpush1.msra.mxu0 0.0
        %829 = vmatprep.subr.mxu0 0.0
        %830 = vmatpush1.msra.mxu0 0.0
        %831 = vmatprep.subr.mxu0 0.0
        %832 = vmatpush1.msra.mxu0 0.0
        %833 = vmatprep.subr.mxu0 0.0
        %834 = vmatpush1.msra.mxu0 0.0
        %835 = vmatprep.subr.mxu0 0.0
        %836 = vmatpush1.msra.mxu0 0.0
        %837 = vmatprep.subr.mxu0 0.0
        %838 = vmatpush1.msra.mxu0 0.0
        %839 = vmatprep.subr.mxu0 0.0
        %840 = vmatpush1.msra.mxu0 0.0
        %841 = vmatprep.subr.mxu0 0.0
        %842 = vmatpush1.msra.mxu0 0.0
        %843 = vmatprep.subr.mxu0 0.0
        %844 = vmatpush1.msra.mxu0 0.0
        %845 = vmatprep.subr.mxu0 0.0
        %846 = vmatpush1.msra.mxu0 0.0
        %847 = vmatprep.subr.mxu0 0.0
        %848 = vmatpush1.msra.mxu0 %v809
        %849 = vmatprep.subr.mxu0 0.0
        %850 = vmatpush1.msra.mxu0 %v808
        %851 = vmatprep.subr.mxu0 0.0
        %852 = vmatpush1.msra.mxu0 %v807
        %853 = vmatprep.subr.mxu0 0.0
        %854 = vmatpush1.msra.mxu0 %v806
        %855 = vmatprep.subr.mxu0 0.0
        %856 = vmatpush2.msra.mxu0 0.0
        %857 = vmatprep.subr.mxu0 0.0
        %858 = vmatpush2.msra.mxu0 0.0
        %859 = vmatprep.subr.mxu0 0.0
        %860 = vmatpush2.msra.mxu0 0.0
        %861 = vmatprep.subr.mxu0 0.0
        %862 = vmatpush2.msra.mxu0 0.0
        %863 = vmatprep.subr.mxu0 0.0
        %864 = vmatpush2.msra.mxu0 0.0
        %865 = vmatprep.subr.mxu0 0.0
        %866 = vmatpush2.msra.mxu0 0.0
        %867 = vmatprep.subr.mxu0 0.0
        %868 = vmatpush2.msra.mxu0 0.0
        %869 = vmatprep.subr.mxu0 0.0
        %870 = vmatpush2.msra.mxu0 0.0
        %871 = vmatprep.subr.mxu0 0.0
        %872 = vmatpush2.msra.mxu0 0.0
        %873 = vmatprep.subr.mxu0 0.0
        %874 = vmatpush2.msra.mxu0 0.0
        %875 = vmatprep.subr.mxu0 0.0
        %876 = vmatpush2.msra.mxu0 0.0
        %877 = vmatprep.subr.mxu0 0.0
        %878 = vmatpush2.msra.mxu0 0.0
        %879 = vmatprep.subr.mxu0 0.0
        %880 = vmatpush2.msra.mxu0 0.0
        %881 = vmatprep.subr.mxu0 0.0
        %882 = vmatpush2.msra.mxu0 0.0
        %883 = vmatprep.subr.mxu0 0.0
        %884 = vmatpush2.msra.mxu0 0.0
        %885 = vmatprep.subr.mxu0 0.0
        %886 = vmatpush2.msra.mxu0 0.0
        %887 = vmatprep.mubr.f32.mxu0 0.0
        %888 = vmatmul.mubr.f32.gmra.mxu0 %v818
        %v889 = vpop.f32.mrf.mxu0
        %v890 = vadd.f32 %v815, %v889
        %v891 = vpop.f32.mrf.mxu0
        %892 = vmatprep.mubr.f32.mxu0 0.0
        %893 = vmatmul.mubr.f32.gmra.mxu0 %v821
        %v894 = vpop.f32.mrf.mxu0
        %v895 = vadd.f32 %v815, %v894
        %v896 = vpop.f32.mrf.mxu0
        %897 = vdwg.mxu0
        %900 = vrot.lane.b32.xlu0 %v890, 96
        %v901 = vpop.permute.xlu0 %900
        %902 = vrot.lane.b32.xlu0 %v895, 96
        %v903 = vpop.permute.xlu0 %902
        %vm904 = vcmask 64512
        %v905 = vsel %vm904, %v890, 0
        %v907 = vsel %vm904, %v895, 0
        %v909 = vsel %vm904, %v901, 0
        %v911 = vsel %vm904, %v903, 0
        %913 = vmatprep.subr.mxu0 0.0
        %914 = vmatpush1.xpose.msra.mxu0 0.0
        %915 = vmatprep.subr.mxu0 0.0
        %916 = vmatpush1.xpose.msra.mxu0 0.0
        %917 = vmatprep.subr.mxu0 0.0
        %918 = vmatpush1.xpose.msra.mxu0 0.0
        %919 = vmatprep.subr.mxu0 0.0
        %920 = vmatpush1.xpose.msra.mxu0 0.0
        %921 = vmatprep.subr.mxu0 0.0
        %922 = vmatpush1.xpose.msra.mxu0 0.0
        %923 = vmatprep.subr.mxu0 0.0
        %924 = vmatpush1.xpose.msra.mxu0 0.0
        %925 = vmatprep.subr.mxu0 0.0
        %926 = vmatpush1.xpose.msra.mxu0 0.0
        %927 = vmatprep.subr.mxu0 0.0
        %928 = vmatpush1.xpose.msra.mxu0 0.0
        %929 = vmatprep.subr.mxu0 0.0
        %930 = vmatpush1.xpose.msra.mxu0 0.0
        %931 = vmatprep.subr.mxu0 0.0
        %932 = vmatpush1.xpose.msra.mxu0 0.0
        %933 = vmatprep.subr.mxu0 0.0
        %934 = vmatpush1.xpose.msra.mxu0 0.0
        %935 = vmatprep.subr.mxu0 0.0
        %936 = vmatpush1.xpose.msra.mxu0 0.0
        %937 = vmatprep.subr.mxu0 0.0
        %938 = vmatpush1.xpose.msra.mxu0 0.0
        %939 = vmatprep.subr.mxu0 0.0
        %940 = vmatpush1.xpose.msra.mxu0 0.0
        %941 = vmatprep.subr.mxu0 0.0
        %942 = vmatpush1.xpose.msra.mxu0 %v911
        %943 = vmatprep.subr.mxu0 0.0
        %944 = vmatpush1.xpose.msra.mxu0 %v909
        %945 = vmatprep.subr.mxu0 0.0
        %946 = vmatpush2.xpose.msra.mxu0 0.0
        %947 = vmatprep.subr.mxu0 0.0
        %948 = vmatpush2.xpose.msra.mxu0 0.0
        %949 = vmatprep.subr.mxu0 0.0
        %950 = vmatpush2.xpose.msra.mxu0 0.0
        %951 = vmatprep.subr.mxu0 0.0
        %952 = vmatpush2.xpose.msra.mxu0 0.0
        %953 = vmatprep.subr.mxu0 0.0
        %954 = vmatpush2.xpose.msra.mxu0 0.0
        %955 = vmatprep.subr.mxu0 0.0
        %956 = vmatpush2.xpose.msra.mxu0 0.0
        %957 = vmatprep.subr.mxu0 0.0
        %958 = vmatpush2.xpose.msra.mxu0 0.0
        %959 = vmatprep.subr.mxu0 0.0
        %960 = vmatpush2.xpose.msra.mxu0 0.0
        %961 = vmatprep.subr.mxu0 0.0
        %962 = vmatpush2.xpose.msra.mxu0 0.0
        %963 = vmatprep.subr.mxu0 0.0
        %964 = vmatpush2.xpose.msra.mxu0 0.0
        %965 = vmatprep.subr.mxu0 0.0
        %966 = vmatpush2.xpose.msra.mxu0 0.0
        %967 = vmatprep.subr.mxu0 0.0
        %968 = vmatpush2.xpose.msra.mxu0 0.0
        %969 = vmatprep.subr.mxu0 0.0
        %970 = vmatpush2.xpose.msra.mxu0 0.0
        %971 = vmatprep.subr.mxu0 0.0
        %972 = vmatpush2.xpose.msra.mxu0 0.0
        %973 = vmatprep.subr.mxu0 0.0
        %974 = vmatpush2.xpose.msra.mxu0 0.0
        %975 = vmatprep.subr.mxu0 0.0
        %976 = vmatpush2.xpose.msra.mxu0 0.0
        %977 = vmatprep.mubr.f32.mxu0 0.0
        %978 = vmatmul.mubr.f32.gmra.mxu0 %v905
        %v979 = vpop.f32.mrf.mxu0
        %v980 = vadd.f32 %v743, %v979
        %v981 = vpop.f32.mrf.mxu0
        %982 = vmatprep.mubr.f32.mxu0 0.0
        %983 = vmatmul.mubr.f32.gmra.mxu0 %v907
        %v984 = vpop.f32.mrf.mxu0
        %v985 = vadd.f32 %v744, %v984
        %v986 = vpop.f32.mrf.mxu0
        %987 = vdwg.mxu0
        %vm988 = vcmask 130048
        %v989 = vsel %vm988, %v980, -inf
        %990 = vmax.xlane.f32.xlu0 %v989
        %v991 = vpop.xlane.xlu0 %990
        %v992 = vsel %vm988, %v985, -inf
        %993 = vmax.xlane.f32.xlu0 %v992
        %v994 = vpop.xlane.xlu0 %993
        %v995 = vsub.f32 %v980, %v991
        %v996 = vsub.f32 %v985, %v994
        %v997 = vmul.f32 %v995, 1.442695
        %v998 = vpow.pop %v997
        %v999 = vmul.f32 %v996, 1.442695
        %v1000 = vpow.pop %v999
        %v1001 = vsel %vm988, %v998, 0.0
        %1002 = vadd.xlane.f32.xlu0 %v1001
        %v1003 = vpop.xlane.xlu0 %1002
        %v1004 = vsel %vm988, %v1000, 0.0
        %1005 = vadd.xlane.f32.xlu0 %v1004
        %v1006 = vpop.xlane.xlu0 %1005
        %1007 = vrot.lane.b32.xlu0 %v890, 64
        %v1008 = vpop.permute.xlu0 %1007
        %1009 = vrot.lane.b32.xlu0 %v895, 64
        %v1010 = vpop.permute.xlu0 %1009
        %v1014 = vsel %vm988, %v998, 0
        %v1017 = vsel %vm988, %v1000, 0
        %1019 = vmatprep.subr.mxu0 0.0
        %1020 = vmatpush1.msra.mxu0 0.0
        %1021 = vmatprep.subr.mxu0 0.0
        %1022 = vmatpush1.msra.mxu0 0.0
        %1023 = vmatprep.subr.mxu0 0.0
        %1024 = vmatpush1.msra.mxu0 0.0
        %1025 = vmatprep.subr.mxu0 0.0
        %1026 = vmatpush1.msra.mxu0 0.0
        %1027 = vmatprep.subr.mxu0 0.0
        %1028 = vmatpush1.msra.mxu0 0.0
        %1029 = vmatprep.subr.mxu0 0.0
        %1030 = vmatpush1.msra.mxu0 0.0
        %1031 = vmatprep.subr.mxu0 0.0
        %1032 = vmatpush1.msra.mxu0 0.0
        %1033 = vmatprep.subr.mxu0 0.0
        %1034 = vmatpush1.msra.mxu0 0.0
        %1035 = vmatprep.subr.mxu0 0.0
        %1036 = vmatpush1.msra.mxu0 0.0
        %1037 = vmatprep.subr.mxu0 0.0
        %1038 = vmatpush1.msra.mxu0 0.0
        %1039 = vmatprep.subr.mxu0 0.0
        %1040 = vmatpush1.msra.mxu0 0.0
        %1041 = vmatprep.subr.mxu0 0.0
        %1042 = vmatpush1.msra.mxu0 0.0
        %1043 = vmatprep.subr.mxu0 0.0
        %1044 = vmatpush1.msra.mxu0 0.0
        %1045 = vmatprep.subr.mxu0 0.0
        %1046 = vmatpush1.msra.mxu0 0.0
        %1047 = vmatprep.subr.mxu0 0.0
        %1048 = vmatpush1.msra.mxu0 %v1010
        %1049 = vmatprep.subr.mxu0 0.0
        %1050 = vmatpush1.msra.mxu0 %v1008
        %1051 = vmatprep.subr.mxu0 0.0
        %1052 = vmatpush2.msra.mxu0 0.0
        %1053 = vmatprep.subr.mxu0 0.0
        %1054 = vmatpush2.msra.mxu0 0.0
        %1055 = vmatprep.subr.mxu0 0.0
        %1056 = vmatpush2.msra.mxu0 0.0
        %1057 = vmatprep.subr.mxu0 0.0
        %1058 = vmatpush2.msra.mxu0 0.0
        %1059 = vmatprep.subr.mxu0 0.0
        %1060 = vmatpush2.msra.mxu0 0.0
        %1061 = vmatprep.subr.mxu0 0.0
        %1062 = vmatpush2.msra.mxu0 0.0
        %1063 = vmatprep.subr.mxu0 0.0
        %1064 = vmatpush2.msra.mxu0 0.0
        %1065 = vmatprep.subr.mxu0 0.0
        %1066 = vmatpush2.msra.mxu0 0.0
        %1067 = vmatprep.subr.mxu0 0.0
        %1068 = vmatpush2.msra.mxu0 0.0
        %1069 = vmatprep.subr.mxu0 0.0
        %1070 = vmatpush2.msra.mxu0 0.0
        %1071 = vmatprep.subr.mxu0 0.0
        %1072 = vmatpush2.msra.mxu0 0.0
        %1073 = vmatprep.subr.mxu0 0.0
        %1074 = vmatpush2.msra.mxu0 0.0
        %1075 = vmatprep.subr.mxu0 0.0
        %1076 = vmatpush2.msra.mxu0 0.0
        %1077 = vmatprep.subr.mxu0 0.0
        %1078 = vmatpush2.msra.mxu0 0.0
        %1079 = vmatprep.subr.mxu0 0.0
        %1080 = vmatpush2.msra.mxu0 0.0
        %1081 = vmatprep.subr.mxu0 0.0
        %1082 = vmatpush2.msra.mxu0 0.0
        %1083 = vmatprep.mubr.f32.mxu0 0.0
        %1084 = vmatmul.mubr.f32.gmra.mxu0 %v1014
        %v1085 = vpop.f32.mrf.mxu0
        %v1086 = vadd.f32 0.0, %v1085
        %v1087 = vpop.f32.mrf.mxu0
        %1088 = vmatprep.mubr.f32.mxu0 0.0
        %1089 = vmatmul.mubr.f32.gmra.mxu0 %v1017
        %v1090 = vpop.f32.mrf.mxu0
        %v1091 = vadd.f32 0.0, %v1090
        %v1092 = vpop.f32.mrf.mxu0
        %1093 = vdwg.mxu0
        %v1094 = vrcp.pop %v1003
        %v1095 = vrcp.pop %v1006
        %v1096 = vmul.f32 %v1086, %v1094
        %v1097 = vmul.f32 %v1091, %v1095
        %1098 = vrot.lane.b32.xlu0 %v890, 120
        %v1099 = vpop.permute.xlu0 %1098
        %1100 = vrot.lane.b32.xlu0 %v895, 120
        %v1101 = vpop.permute.xlu0 %1100
        %1102 = vrot.lane.b32.xlu0 %v890, 88
        %v1103 = vpop.permute.xlu0 %1102
        %1104 = vrot.lane.b32.xlu0 %v895, 88
        %v1105 = vpop.permute.xlu0 %1104
        %v1106 = vsel %vm904, %v1099, 0
        %v1108 = vsel %vm904, %v1101, 0
        %v1110 = vsel %vm904, %v1103, 0
        %v1112 = vsel %vm904, %v1105, 0
        %1114 = vmatprep.subr.mxu0 0.0
        %1115 = vmatpush1.xpose.msra.mxu0 0.0
        %1116 = vmatprep.subr.mxu0 0.0
        %1117 = vmatpush1.xpose.msra.mxu0 0.0
        %1118 = vmatprep.subr.mxu0 0.0
        %1119 = vmatpush1.xpose.msra.mxu0 0.0
        %1120 = vmatprep.subr.mxu0 0.0
        %1121 = vmatpush1.xpose.msra.mxu0 0.0
        %1122 = vmatprep.subr.mxu0 0.0
        %1123 = vmatpush1.xpose.msra.mxu0 0.0
        %1124 = vmatprep.subr.mxu0 0.0
        %1125 = vmatpush1.xpose.msra.mxu0 0.0
        %1126 = vmatprep.subr.mxu0 0.0
        %1127 = vmatpush1.xpose.msra.mxu0 0.0
        %1128 = vmatprep.subr.mxu0 0.0
        %1129 = vmatpush1.xpose.msra.mxu0 0.0
        %1130 = vmatprep.subr.mxu0 0.0
        %1131 = vmatpush1.xpose.msra.mxu0 0.0
        %1132 = vmatprep.subr.mxu0 0.0
        %1133 = vmatpush1.xpose.msra.mxu0 0.0
        %1134 = vmatprep.subr.mxu0 0.0
        %1135 = vmatpush1.xpose.msra.mxu0 0.0
        %1136 = vmatprep.subr.mxu0 0.0
        %1137 = vmatpush1.xpose.msra.mxu0 0.0
        %1138 = vmatprep.subr.mxu0 0.0
        %1139 = vmatpush1.xpose.msra.mxu0 0.0
        %1140 = vmatprep.subr.mxu0 0.0
        %1141 = vmatpush1.xpose.msra.mxu0 0.0
        %1142 = vmatprep.subr.mxu0 0.0
        %1143 = vmatpush1.xpose.msra.mxu0 %v1112
        %1144 = vmatprep.subr.mxu0 0.0
        %1145 = vmatpush1.xpose.msra.mxu0 %v1110
        %1146 = vmatprep.subr.mxu0 0.0
        %1147 = vmatpush2.xpose.msra.mxu0 0.0
        %1148 = vmatprep.subr.mxu0 0.0
        %1149 = vmatpush2.xpose.msra.mxu0 0.0
        %1150 = vmatprep.subr.mxu0 0.0
        %1151 = vmatpush2.xpose.msra.mxu0 0.0
        %1152 = vmatprep.subr.mxu0 0.0
        %1153 = vmatpush2.xpose.msra.mxu0 0.0
        %1154 = vmatprep.subr.mxu0 0.0
        %1155 = vmatpush2.xpose.msra.mxu0 0.0
        %1156 = vmatprep.subr.mxu0 0.0
        %1157 = vmatpush2.xpose.msra.mxu0 0.0
        %1158 = vmatprep.subr.mxu0 0.0
        %1159 = vmatpush2.xpose.msra.mxu0 0.0
        %1160 = vmatprep.subr.mxu0 0.0
        %1161 = vmatpush2.xpose.msra.mxu0 0.0
        %1162 = vmatprep.subr.mxu0 0.0
        %1163 = vmatpush2.xpose.msra.mxu0 0.0
        %1164 = vmatprep.subr.mxu0 0.0
        %1165 = vmatpush2.xpose.msra.mxu0 0.0
        %1166 = vmatprep.subr.mxu0 0.0
        %1167 = vmatpush2.xpose.msra.mxu0 0.0
        %1168 = vmatprep.subr.mxu0 0.0
        %1169 = vmatpush2.xpose.msra.mxu0 0.0
        %1170 = vmatprep.subr.mxu0 0.0
        %1171 = vmatpush2.xpose.msra.mxu0 0.0
        %1172 = vmatprep.subr.mxu0 0.0
        %1173 = vmatpush2.xpose.msra.mxu0 0.0
        %1174 = vmatprep.subr.mxu0 0.0
        %1175 = vmatpush2.xpose.msra.mxu0 0.0
        %1176 = vmatprep.subr.mxu0 0.0
        %1177 = vmatpush2.xpose.msra.mxu0 0.0
        %1178 = vmatprep.mubr.f32.mxu0 0.0
        %1179 = vmatmul.mubr.f32.gmra.mxu0 %v1106
        %v1180 = vpop.f32.mrf.mxu0
        %v1181 = vadd.f32 %v743, %v1180
        %v1182 = vpop.f32.mrf.mxu0
        %1183 = vmatprep.mubr.f32.mxu0 0.0
        %1184 = vmatmul.mubr.f32.gmra.mxu0 %v1108
        %v1185 = vpop.f32.mrf.mxu0
        %v1186 = vadd.f32 %v744, %v1185
        %v1187 = vpop.f32.mrf.mxu0
        %1188 = vdwg.mxu0
        %v1189 = vsel %vm988, %v1181, -inf
        %1190 = vmax.xlane.f32.xlu0 %v1189
        %v1191 = vpop.xlane.xlu0 %1190
        %v1192 = vsel %vm988, %v1186, -inf
        %1193 = vmax.xlane.f32.xlu0 %v1192
        %v1194 = vpop.xlane.xlu0 %1193
        %v1195 = vsub.f32 %v1181, %v1191
        %v1196 = vsub.f32 %v1186, %v1194
        %v1197 = vmul.f32 %v1195, 1.442695
        %v1198 = vpow.pop %v1197
        %v1199 = vmul.f32 %v1196, 1.442695
        %v1200 = vpow.pop %v1199
        %v1201 = vsel %vm988, %v1198, 0.0
        %1202 = vadd.xlane.f32.xlu0 %v1201
        %v1203 = vpop.xlane.xlu0 %1202
        %v1204 = vsel %vm988, %v1200, 0.0
        %1205 = vadd.xlane.f32.xlu0 %v1204
        %v1206 = vpop.xlane.xlu0 %1205
        %1207 = vrot.lane.b32.xlu0 %v890, 56
        %v1208 = vpop.permute.xlu0 %1207
        %1209 = vrot.lane.b32.xlu0 %v895, 56
        %v1210 = vpop.permute.xlu0 %1209
        %v1214 = vsel %vm988, %v1198, 0
        %v1217 = vsel %vm988, %v1200, 0
        %1219 = vmatprep.subr.mxu0 0.0
        %1220 = vmatpush1.msra.mxu0 0.0
        %1221 = vmatprep.subr.mxu0 0.0
        %1222 = vmatpush1.msra.mxu0 0.0
        %1223 = vmatprep.subr.mxu0 0.0
        %1224 = vmatpush1.msra.mxu0 0.0
        %1225 = vmatprep.subr.mxu0 0.0
        %1226 = vmatpush1.msra.mxu0 0.0
        %1227 = vmatprep.subr.mxu0 0.0
        %1228 = vmatpush1.msra.mxu0 0.0
        %1229 = vmatprep.subr.mxu0 0.0
        %1230 = vmatpush1.msra.mxu0 0.0
        %1231 = vmatprep.subr.mxu0 0.0
        %1232 = vmatpush1.msra.mxu0 0.0
        %1233 = vmatprep.subr.mxu0 0.0
        %1234 = vmatpush1.msra.mxu0 0.0
        %1235 = vmatprep.subr.mxu0 0.0
        %1236 = vmatpush1.msra.mxu0 0.0
        %1237 = vmatprep.subr.mxu0 0.0
        %1238 = vmatpush1.msra.mxu0 0.0
        %1239 = vmatprep.subr.mxu0 0.0
        %1240 = vmatpush1.msra.mxu0 0.0
        %1241 = vmatprep.subr.mxu0 0.0
        %1242 = vmatpush1.msra.mxu0 0.0
        %1243 = vmatprep.subr.mxu0 0.0
        %1244 = vmatpush1.msra.mxu0 0.0
        %1245 = vmatprep.subr.mxu0 0.0
        %1246 = vmatpush1.msra.mxu0 0.0
        %1247 = vmatprep.subr.mxu0 0.0
        %1248 = vmatpush1.msra.mxu0 %v1210
        %1249 = vmatprep.subr.mxu0 0.0
        %1250 = vmatpush1.msra.mxu0 %v1208
        %1251 = vmatprep.subr.mxu0 0.0
        %1252 = vmatpush2.msra.mxu0 0.0
        %1253 = vmatprep.subr.mxu0 0.0
        %1254 = vmatpush2.msra.mxu0 0.0
        %1255 = vmatprep.subr.mxu0 0.0
        %1256 = vmatpush2.msra.mxu0 0.0
        %1257 = vmatprep.subr.mxu0 0.0
        %1258 = vmatpush2.msra.mxu0 0.0
        %1259 = vmatprep.subr.mxu0 0.0
        %1260 = vmatpush2.msra.mxu0 0.0
        %1261 = vmatprep.subr.mxu0 0.0
        %1262 = vmatpush2.msra.mxu0 0.0
        %1263 = vmatprep.subr.mxu0 0.0
        %1264 = vmatpush2.msra.mxu0 0.0
        %1265 = vmatprep.subr.mxu0 0.0
        %1266 = vmatpush2.msra.mxu0 0.0
        %1267 = vmatprep.subr.mxu0 0.0
        %1268 = vmatpush2.msra.mxu0 0.0
        %1269 = vmatprep.subr.mxu0 0.0
        %1270 = vmatpush2.msra.mxu0 0.0
        %1271 = vmatprep.subr.mxu0 0.0
        %1272 = vmatpush2.msra.mxu0 0.0
        %1273 = vmatprep.subr.mxu0 0.0
        %1274 = vmatpush2.msra.mxu0 0.0
        %1275 = vmatprep.subr.mxu0 0.0
        %1276 = vmatpush2.msra.mxu0 0.0
        %1277 = vmatprep.subr.mxu0 0.0
        %1278 = vmatpush2.msra.mxu0 0.0
        %1279 = vmatprep.subr.mxu0 0.0
        %1280 = vmatpush2.msra.mxu0 0.0
        %1281 = vmatprep.subr.mxu0 0.0
        %1282 = vmatpush2.msra.mxu0 0.0
        %1283 = vmatprep.mubr.f32.mxu0 0.0
        %1284 = vmatmul.mubr.f32.gmra.mxu0 %v1214
        %v1285 = vpop.f32.mrf.mxu0
        %v1286 = vadd.f32 0.0, %v1285
        %v1287 = vpop.f32.mrf.mxu0
        %1288 = vmatprep.mubr.f32.mxu0 0.0
        %1289 = vmatmul.mubr.f32.gmra.mxu0 %v1217
        %v1290 = vpop.f32.mrf.mxu0
        %v1291 = vadd.f32 0.0, %v1290
        %v1292 = vpop.f32.mrf.mxu0
        %1293 = vdwg.mxu0
        %v1294 = vrcp.pop %v1203
        %v1295 = vrcp.pop %v1206
        %v1296 = vmul.f32 %v1286, %v1294
        %v1297 = vmul.f32 %v1291, %v1295
        %1298 = vrot.lane.b32.xlu0 %v890, 112
        %v1299 = vpop.permute.xlu0 %1298
        %1300 = vrot.lane.b32.xlu0 %v895, 112
        %v1301 = vpop.permute.xlu0 %1300
        %1302 = vrot.lane.b32.xlu0 %v890, 80
        %v1303 = vpop.permute.xlu0 %1302
        %1304 = vrot.lane.b32.xlu0 %v895, 80
        %v1305 = vpop.permute.xlu0 %1304
        %v1306 = vsel %vm904, %v1299, 0
        %v1308 = vsel %vm904, %v1301, 0
        %v1310 = vsel %vm904, %v1303, 0
        %v1312 = vsel %vm904, %v1305, 0
        %1314 = vmatprep.subr.mxu0 0.0
        %1315 = vmatpush1.xpose.msra.mxu0 0.0
        %1316 = vmatprep.subr.mxu0 0.0
        %1317 = vmatpush1.xpose.msra.mxu0 0.0
        %1318 = vmatprep.subr.mxu0 0.0
        %1319 = vmatpush1.xpose.msra.mxu0 0.0
        %1320 = vmatprep.subr.mxu0 0.0
        %1321 = vmatpush1.xpose.msra.mxu0 0.0
        %1322 = vmatprep.subr.mxu0 0.0
        %1323 = vmatpush1.xpose.msra.mxu0 0.0
        %1324 = vmatprep.subr.mxu0 0.0
        %1325 = vmatpush1.xpose.msra.mxu0 0.0
        %1326 = vmatprep.subr.mxu0 0.0
        %1327 = vmatpush1.xpose.msra.mxu0 0.0
        %1328 = vmatprep.subr.mxu0 0.0
        %1329 = vmatpush1.xpose.msra.mxu0 0.0
        %1330 = vmatprep.subr.mxu0 0.0
        %1331 = vmatpush1.xpose.msra.mxu0 0.0
        %1332 = vmatprep.subr.mxu0 0.0
        %1333 = vmatpush1.xpose.msra.mxu0 0.0
        %1334 = vmatprep.subr.mxu0 0.0
        %1335 = vmatpush1.xpose.msra.mxu0 0.0
        %1336 = vmatprep.subr.mxu0 0.0
        %1337 = vmatpush1.xpose.msra.mxu0 0.0
        %1338 = vmatprep.subr.mxu0 0.0
        %1339 = vmatpush1.xpose.msra.mxu0 0.0
        %1340 = vmatprep.subr.mxu0 0.0
        %1341 = vmatpush1.xpose.msra.mxu0 0.0
        %1342 = vmatprep.subr.mxu0 0.0
        %1343 = vmatpush1.xpose.msra.mxu0 %v1312
        %1344 = vmatprep.subr.mxu0 0.0
        %1345 = vmatpush1.xpose.msra.mxu0 %v1310
        %1346 = vmatprep.subr.mxu0 0.0
        %1347 = vmatpush2.xpose.msra.mxu0 0.0
        %1348 = vmatprep.subr.mxu0 0.0
        %1349 = vmatpush2.xpose.msra.mxu0 0.0
        %1350 = vmatprep.subr.mxu0 0.0
        %1351 = vmatpush2.xpose.msra.mxu0 0.0
        %1352 = vmatprep.subr.mxu0 0.0
        %1353 = vmatpush2.xpose.msra.mxu0 0.0
        %1354 = vmatprep.subr.mxu0 0.0
        %1355 = vmatpush2.xpose.msra.mxu0 0.0
        %1356 = vmatprep.subr.mxu0 0.0
        %1357 = vmatpush2.xpose.msra.mxu0 0.0
        %1358 = vmatprep.subr.mxu0 0.0
        %1359 = vmatpush2.xpose.msra.mxu0 0.0
        %1360 = vmatprep.subr.mxu0 0.0
        %1361 = vmatpush2.xpose.msra.mxu0 0.0
        %1362 = vmatprep.subr.mxu0 0.0
        %1363 = vmatpush2.xpose.msra.mxu0 0.0
        %1364 = vmatprep.subr.mxu0 0.0
        %1365 = vmatpush2.xpose.msra.mxu0 0.0
        %1366 = vmatprep.subr.mxu0 0.0
        %1367 = vmatpush2.xpose.msra.mxu0 0.0
        %1368 = vmatprep.subr.mxu0 0.0
        %1369 = vmatpush2.xpose.msra.mxu0 0.0
        %1370 = vmatprep.subr.mxu0 0.0
        %1371 = vmatpush2.xpose.msra.mxu0 0.0
        %1372 = vmatprep.subr.mxu0 0.0
        %1373 = vmatpush2.xpose.msra.mxu0 0.0
        %1374 = vmatprep.subr.mxu0 0.0
        %1375 = vmatpush2.xpose.msra.mxu0 0.0
        %1376 = vmatprep.subr.mxu0 0.0
        %1377 = vmatpush2.xpose.msra.mxu0 0.0
        %1378 = vmatprep.mubr.f32.mxu0 0.0
        %1379 = vmatmul.mubr.f32.gmra.mxu0 %v1306
        %v1380 = vpop.f32.mrf.mxu0
        %v1381 = vadd.f32 %v743, %v1380
        %v1382 = vpop.f32.mrf.mxu0
        %1383 = vmatprep.mubr.f32.mxu0 0.0
        %1384 = vmatmul.mubr.f32.gmra.mxu0 %v1308
        %v1385 = vpop.f32.mrf.mxu0
        %v1386 = vadd.f32 %v744, %v1385
        %v1387 = vpop.f32.mrf.mxu0
        %1388 = vdwg.mxu0
        %v1389 = vsel %vm988, %v1381, -inf
        %1390 = vmax.xlane.f32.xlu0 %v1389
        %v1391 = vpop.xlane.xlu0 %1390
        %v1392 = vsel %vm988, %v1386, -inf
        %1393 = vmax.xlane.f32.xlu0 %v1392
        %v1394 = vpop.xlane.xlu0 %1393
        %v1395 = vsub.f32 %v1381, %v1391
        %v1396 = vsub.f32 %v1386, %v1394
        %v1397 = vmul.f32 %v1395, 1.442695
        %v1398 = vpow.pop %v1397
        %v1399 = vmul.f32 %v1396, 1.442695
        %v1400 = vpow.pop %v1399
        %v1401 = vsel %vm988, %v1398, 0.0
        %1402 = vadd.xlane.f32.xlu0 %v1401
        %v1403 = vpop.xlane.xlu0 %1402
        %v1404 = vsel %vm988, %v1400, 0.0
        %1405 = vadd.xlane.f32.xlu0 %v1404
        %v1406 = vpop.xlane.xlu0 %1405
        %1407 = vrot.lane.b32.xlu0 %v890, 48
        %v1408 = vpop.permute.xlu0 %1407
        %1409 = vrot.lane.b32.xlu0 %v895, 48
        %v1410 = vpop.permute.xlu0 %1409
        %v1414 = vsel %vm988, %v1398, 0
        %v1417 = vsel %vm988, %v1400, 0
        %1419 = vmatprep.subr.mxu0 0.0
        %1420 = vmatpush1.msra.mxu0 0.0
        %1421 = vmatprep.subr.mxu0 0.0
        %1422 = vmatpush1.msra.mxu0 0.0
        %1423 = vmatprep.subr.mxu0 0.0
        %1424 = vmatpush1.msra.mxu0 0.0
        %1425 = vmatprep.subr.mxu0 0.0
        %1426 = vmatpush1.msra.mxu0 0.0
        %1427 = vmatprep.subr.mxu0 0.0
        %1428 = vmatpush1.msra.mxu0 0.0
        %1429 = vmatprep.subr.mxu0 0.0
        %1430 = vmatpush1.msra.mxu0 0.0
        %1431 = vmatprep.subr.mxu0 0.0
        %1432 = vmatpush1.msra.mxu0 0.0
        %1433 = vmatprep.subr.mxu0 0.0
        %1434 = vmatpush1.msra.mxu0 0.0
        %1435 = vmatprep.subr.mxu0 0.0
        %1436 = vmatpush1.msra.mxu0 0.0
        %1437 = vmatprep.subr.mxu0 0.0
        %1438 = vmatpush1.msra.mxu0 0.0
        %1439 = vmatprep.subr.mxu0 0.0
        %1440 = vmatpush1.msra.mxu0 0.0
        %1441 = vmatprep.subr.mxu0 0.0
        %1442 = vmatpush1.msra.mxu0 0.0
        %1443 = vmatprep.subr.mxu0 0.0
        %1444 = vmatpush1.msra.mxu0 0.0
        %1445 = vmatprep.subr.mxu0 0.0
        %1446 = vmatpush1.msra.mxu0 0.0
        %1447 = vmatprep.subr.mxu0 0.0
        %1448 = vmatpush1.msra.mxu0 %v1410
        %1449 = vmatprep.subr.mxu0 0.0
        %1450 = vmatpush1.msra.mxu0 %v1408
        %1451 = vmatprep.subr.mxu0 0.0
        %1452 = vmatpush2.msra.mxu0 0.0
        %1453 = vmatprep.subr.mxu0 0.0
        %1454 = vmatpush2.msra.mxu0 0.0
        %1455 = vmatprep.subr.mxu0 0.0
        %1456 = vmatpush2.msra.mxu0 0.0
        %1457 = vmatprep.subr.mxu0 0.0
        %1458 = vmatpush2.msra.mxu0 0.0
        %1459 = vmatprep.subr.mxu0 0.0
        %1460 = vmatpush2.msra.mxu0 0.0
        %1461 = vmatprep.subr.mxu0 0.0
        %1462 = vmatpush2.msra.mxu0 0.0
        %1463 = vmatprep.subr.mxu0 0.0
        %1464 = vmatpush2.msra.mxu0 0.0
        %1465 = vmatprep.subr.mxu0 0.0
        %1466 = vmatpush2.msra.mxu0 0.0
        %1467 = vmatprep.subr.mxu0 0.0
        %1468 = vmatpush2.msra.mxu0 0.0
        %1469 = vmatprep.subr.mxu0 0.0
        %1470 = vmatpush2.msra.mxu0 0.0
        %1471 = vmatprep.subr.mxu0 0.0
        %1472 = vmatpush2.msra.mxu0 0.0
        %1473 = vmatprep.subr.mxu0 0.0
        %1474 = vmatpush2.msra.mxu0 0.0
        %1475 = vmatprep.subr.mxu0 0.0
        %1476 = vmatpush2.msra.mxu0 0.0
        %1477 = vmatprep.subr.mxu0 0.0
        %1478 = vmatpush2.msra.mxu0 0.0
        %1479 = vmatprep.subr.mxu0 0.0
        %1480 = vmatpush2.msra.mxu0 0.0
        %1481 = vmatprep.subr.mxu0 0.0
        %1482 = vmatpush2.msra.mxu0 0.0
        %1483 = vmatprep.mubr.f32.mxu0 0.0
        %1484 = vmatmul.mubr.f32.gmra.mxu0 %v1414
        %v1485 = vpop.f32.mrf.mxu0
        %v1486 = vadd.f32 0.0, %v1485
        %v1487 = vpop.f32.mrf.mxu0
        %1488 = vmatprep.mubr.f32.mxu0 0.0
        %1489 = vmatmul.mubr.f32.gmra.mxu0 %v1417
        %v1490 = vpop.f32.mrf.mxu0
        %v1491 = vadd.f32 0.0, %v1490
        %v1492 = vpop.f32.mrf.mxu0
        %1493 = vdwg.mxu0
        %v1494 = vrcp.pop %v1403
        %v1495 = vrcp.pop %v1406
        %v1496 = vmul.f32 %v1486, %v1494
        %v1497 = vmul.f32 %v1491, %v1495
        %1498 = vrot.lane.b32.xlu0 %v890, 104
        %v1499 = vpop.permute.xlu0 %1498
        %1500 = vrot.lane.b32.xlu0 %v895, 104
        %v1501 = vpop.permute.xlu0 %1500
        %1502 = vrot.lane.b32.xlu0 %v890, 72
        %v1503 = vpop.permute.xlu0 %1502
        %1504 = vrot.lane.b32.xlu0 %v895, 72
        %v1505 = vpop.permute.xlu0 %1504
        %v1506 = vsel %vm904, %v1499, 0
        %v1508 = vsel %vm904, %v1501, 0
        %v1510 = vsel %vm904, %v1503, 0
        %v1512 = vsel %vm904, %v1505, 0
        %1514 = vmatprep.subr.mxu0 0.0
        %1515 = vmatpush1.xpose.msra.mxu0 0.0
        %1516 = vmatprep.subr.mxu0 0.0
        %1517 = vmatpush1.xpose.msra.mxu0 0.0
        %1518 = vmatprep.subr.mxu0 0.0
        %1519 = vmatpush1.xpose.msra.mxu0 0.0
        %1520 = vmatprep.subr.mxu0 0.0
        %1521 = vmatpush1.xpose.msra.mxu0 0.0
        %1522 = vmatprep.subr.mxu0 0.0
        %1523 = vmatpush1.xpose.msra.mxu0 0.0
        %1524 = vmatprep.subr.mxu0 0.0
        %1525 = vmatpush1.xpose.msra.mxu0 0.0
        %1526 = vmatprep.subr.mxu0 0.0
        %1527 = vmatpush1.xpose.msra.mxu0 0.0
        %1528 = vmatprep.subr.mxu0 0.0
        %1529 = vmatpush1.xpose.msra.mxu0 0.0
        %1530 = vmatprep.subr.mxu0 0.0
        %1531 = vmatpush1.xpose.msra.mxu0 0.0
        %1532 = vmatprep.subr.mxu0 0.0
        %1533 = vmatpush1.xpose.msra.mxu0 0.0
        %1534 = vmatprep.subr.mxu0 0.0
        %1535 = vmatpush1.xpose.msra.mxu0 0.0
        %1536 = vmatprep.subr.mxu0 0.0
        %1537 = vmatpush1.xpose.msra.mxu0 0.0
        %1538 = vmatprep.subr.mxu0 0.0
        %1539 = vmatpush1.xpose.msra.mxu0 0.0
        %1540 = vmatprep.subr.mxu0 0.0
        %1541 = vmatpush1.xpose.msra.mxu0 0.0
        %1542 = vmatprep.subr.mxu0 0.0
        %1543 = vmatpush1.xpose.msra.mxu0 %v1512
        %1544 = vmatprep.subr.mxu0 0.0
        %1545 = vmatpush1.xpose.msra.mxu0 %v1510
        %1546 = vmatprep.subr.mxu0 0.0
        %1547 = vmatpush2.xpose.msra.mxu0 0.0
        %1548 = vmatprep.subr.mxu0 0.0
        %1549 = vmatpush2.xpose.msra.mxu0 0.0
        %1550 = vmatprep.subr.mxu0 0.0
        %1551 = vmatpush2.xpose.msra.mxu0 0.0
        %1552 = vmatprep.subr.mxu0 0.0
        %1553 = vmatpush2.xpose.msra.mxu0 0.0
        %1554 = vmatprep.subr.mxu0 0.0
        %1555 = vmatpush2.xpose.msra.mxu0 0.0
        %1556 = vmatprep.subr.mxu0 0.0
        %1557 = vmatpush2.xpose.msra.mxu0 0.0
        %1558 = vmatprep.subr.mxu0 0.0
        %1559 = vmatpush2.xpose.msra.mxu0 0.0
        %1560 = vmatprep.subr.mxu0 0.0
        %1561 = vmatpush2.xpose.msra.mxu0 0.0
        %1562 = vmatprep.subr.mxu0 0.0
        %1563 = vmatpush2.xpose.msra.mxu0 0.0
        %1564 = vmatprep.subr.mxu0 0.0
        %1565 = vmatpush2.xpose.msra.mxu0 0.0
        %1566 = vmatprep.subr.mxu0 0.0
        %1567 = vmatpush2.xpose.msra.mxu0 0.0
        %1568 = vmatprep.subr.mxu0 0.0
        %1569 = vmatpush2.xpose.msra.mxu0 0.0
        %1570 = vmatprep.subr.mxu0 0.0
        %1571 = vmatpush2.xpose.msra.mxu0 0.0
        %1572 = vmatprep.subr.mxu0 0.0
        %1573 = vmatpush2.xpose.msra.mxu0 0.0
        %1574 = vmatprep.subr.mxu0 0.0
        %1575 = vmatpush2.xpose.msra.mxu0 0.0
        %1576 = vmatprep.subr.mxu0 0.0
        %1577 = vmatpush2.xpose.msra.mxu0 0.0
        %1578 = vmatprep.mubr.f32.mxu0 0.0
        %1579 = vmatmul.mubr.f32.gmra.mxu0 %v1506
        %v1580 = vpop.f32.mrf.mxu0
        %v1581 = vadd.f32 %v743, %v1580
        %v1582 = vpop.f32.mrf.mxu0
        %1583 = vmatprep.mubr.f32.mxu0 0.0
        %1584 = vmatmul.mubr.f32.gmra.mxu0 %v1508
        %v1585 = vpop.f32.mrf.mxu0
        %v1586 = vadd.f32 %v744, %v1585
        %v1587 = vpop.f32.mrf.mxu0
        %1588 = vdwg.mxu0
        %v1589 = vsel %vm988, %v1581, -inf
        %1590 = vmax.xlane.f32.xlu0 %v1589
        %v1591 = vpop.xlane.xlu0 %1590
        %v1592 = vsel %vm988, %v1586, -inf
        %1593 = vmax.xlane.f32.xlu0 %v1592
        %v1594 = vpop.xlane.xlu0 %1593
        %v1595 = vsub.f32 %v1581, %v1591
        %v1596 = vsub.f32 %v1586, %v1594
        %v1597 = vmul.f32 %v1595, 1.442695
        %v1598 = vpow.pop %v1597
        %v1599 = vmul.f32 %v1596, 1.442695
        %v1600 = vpow.pop %v1599
        %v1601 = vsel %vm988, %v1598, 0.0
        %1602 = vadd.xlane.f32.xlu0 %v1601
        %v1603 = vpop.xlane.xlu0 %1602
        %v1604 = vsel %vm988, %v1600, 0.0
        %1605 = vadd.xlane.f32.xlu0 %v1604
        %v1606 = vpop.xlane.xlu0 %1605
        %1607 = vrot.lane.b32.xlu0 %v890, 40
        %v1608 = vpop.permute.xlu0 %1607
        %1609 = vrot.lane.b32.xlu0 %v895, 40
        %v1610 = vpop.permute.xlu0 %1609
        %v1614 = vsel %vm988, %v1598, 0
        %v1617 = vsel %vm988, %v1600, 0
        %1619 = vmatprep.subr.mxu0 0.0
        %1620 = vmatpush1.msra.mxu0 0.0
        %1621 = vmatprep.subr.mxu0 0.0
        %1622 = vmatpush1.msra.mxu0 0.0
        %1623 = vmatprep.subr.mxu0 0.0
        %1624 = vmatpush1.msra.mxu0 0.0
        %1625 = vmatprep.subr.mxu0 0.0
        %1626 = vmatpush1.msra.mxu0 0.0
        %1627 = vmatprep.subr.mxu0 0.0
        %1628 = vmatpush1.msra.mxu0 0.0
        %1629 = vmatprep.subr.mxu0 0.0
        %1630 = vmatpush1.msra.mxu0 0.0
        %1631 = vmatprep.subr.mxu0 0.0
        %1632 = vmatpush1.msra.mxu0 0.0
        %1633 = vmatprep.subr.mxu0 0.0
        %1634 = vmatpush1.msra.mxu0 0.0
        %1635 = vmatprep.subr.mxu0 0.0
        %1636 = vmatpush1.msra.mxu0 0.0
        %1637 = vmatprep.subr.mxu0 0.0
        %1638 = vmatpush1.msra.mxu0 0.0
        %1639 = vmatprep.subr.mxu0 0.0
        %1640 = vmatpush1.msra.mxu0 0.0
        %1641 = vmatprep.subr.mxu0 0.0
        %1642 = vmatpush1.msra.mxu0 0.0
        %1643 = vmatprep.subr.mxu0 0.0
        %1644 = vmatpush1.msra.mxu0 0.0
        %1645 = vmatprep.subr.mxu0 0.0
        %1646 = vmatpush1.msra.mxu0 0.0
        %1647 = vmatprep.subr.mxu0 0.0
        %1648 = vmatpush1.msra.mxu0 %v1610
        %1649 = vmatprep.subr.mxu0 0.0
        %1650 = vmatpush1.msra.mxu0 %v1608
        %1651 = vmatprep.subr.mxu0 0.0
        %1652 = vmatpush2.msra.mxu0 0.0
        %1653 = vmatprep.subr.mxu0 0.0
        %1654 = vmatpush2.msra.mxu0 0.0
        %1655 = vmatprep.subr.mxu0 0.0
        %1656 = vmatpush2.msra.mxu0 0.0
        %1657 = vmatprep.subr.mxu0 0.0
        %1658 = vmatpush2.msra.mxu0 0.0
        %1659 = vmatprep.subr.mxu0 0.0
        %1660 = vmatpush2.msra.mxu0 0.0
        %1661 = vmatprep.subr.mxu0 0.0
        %1662 = vmatpush2.msra.mxu0 0.0
        %1663 = vmatprep.subr.mxu0 0.0
        %1664 = vmatpush2.msra.mxu0 0.0
        %1665 = vmatprep.subr.mxu0 0.0
        %1666 = vmatpush2.msra.mxu0 0.0
        %1667 = vmatprep.subr.mxu0 0.0
        %1668 = vmatpush2.msra.mxu0 0.0
        %1669 = vmatprep.subr.mxu0 0.0
        %1670 = vmatpush2.msra.mxu0 0.0
        %1671 = vmatprep.subr.mxu0 0.0
        %1672 = vmatpush2.msra.mxu0 0.0
        %1673 = vmatprep.subr.mxu0 0.0
        %1674 = vmatpush2.msra.mxu0 0.0
        %1675 = vmatprep.subr.mxu0 0.0
        %1676 = vmatpush2.msra.mxu0 0.0
        %1677 = vmatprep.subr.mxu0 0.0
        %1678 = vmatpush2.msra.mxu0 0.0
        %1679 = vmatprep.subr.mxu0 0.0
        %1680 = vmatpush2.msra.mxu0 0.0
        %1681 = vmatprep.subr.mxu0 0.0
        %1682 = vmatpush2.msra.mxu0 0.0
        %1683 = vmatprep.mubr.f32.mxu0 0.0
        %1684 = vmatmul.mubr.f32.gmra.mxu0 %v1614
        %v1685 = vpop.f32.mrf.mxu0
        %v1686 = vadd.f32 0.0, %v1685
        %v1687 = vpop.f32.mrf.mxu0
        %1688 = vmatprep.mubr.f32.mxu0 0.0
        %1689 = vmatmul.mubr.f32.gmra.mxu0 %v1617
        %v1690 = vpop.f32.mrf.mxu0
        %v1691 = vadd.f32 0.0, %v1690
        %v1692 = vpop.f32.mrf.mxu0
        %1693 = vdwg.mxu0
        %v1694 = vrcp.pop %v1603
        %v1695 = vrcp.pop %v1606
        %v1696 = vmul.f32 %v1686, %v1694
        %v1697 = vmul.f32 %v1691, %v1695
        %1700 = vrot.lane.b32.xlu0 %v1296, 8
        %v1701 = vpop.permute.xlu0 %1700
        %1702 = vrot.lane.b32.xlu0 %v1297, 8
        %v1703 = vpop.permute.xlu0 %1702
        %1708 = vrot.lane.b32.xlu0 %v1496, 16
        %v1709 = vpop.permute.xlu0 %1708
        %1710 = vrot.lane.b32.xlu0 %v1497, 16
        %v1711 = vpop.permute.xlu0 %1710
        %1716 = vrot.lane.b32.xlu0 %v1696, 24
        %v1717 = vpop.permute.xlu0 %1716
        %1718 = vrot.lane.b32.xlu0 %v1697, 24
        %v1719 = vpop.permute.xlu0 %1718
        %v1722 = vsel %vm904, %v1096, %v1701
        %v1723 = vsel %vm904, %v1097, %v1703
        %v1724 = vsel %vm988, %v1722, %v1709
        %v1725 = vsel %vm988, %v1723, %v1711
        %vm1726 = vcmask 195584
        %v1727 = vsel %vm1726, %v1724, %v1717
        %v1728 = vsel %vm1726, %v1725, %v1719
        %v1729 = vld [vmem:[%s10] sm:$0xff]
        %v1730 = vld [vmem:[%s10 + $0x8] sm:$0xff]
        %v1731 = vld [vmem:[%s10 + $0x10] sm:$0xff]
        %v1732 = vld [vmem:[%s10 + $0x18] sm:$0xff]
        %v1734 = vsel %vm747, %v1727, 0
        %v1737 = vsel %vm747, %v1728, 0
        %1739 = vmatprep.subr.mxu0 0.0
        %1740 = vmatpush1.msra.mxu0 0.0
        %1741 = vmatprep.subr.mxu0 0.0
        %1742 = vmatpush1.msra.mxu0 0.0
        %1743 = vmatprep.subr.mxu0 0.0
        %1744 = vmatpush1.msra.mxu0 0.0
        %1745 = vmatprep.subr.mxu0 0.0
        %1746 = vmatpush1.msra.mxu0 0.0
        %1747 = vmatprep.subr.mxu0 0.0
        %1748 = vmatpush1.msra.mxu0 0.0
        %1749 = vmatprep.subr.mxu0 0.0
        %1750 = vmatpush1.msra.mxu0 0.0
        %1751 = vmatprep.subr.mxu0 0.0
        %1752 = vmatpush1.msra.mxu0 0.0
        %1753 = vmatprep.subr.mxu0 0.0
        %1754 = vmatpush1.msra.mxu0 0.0
        %1755 = vmatprep.subr.mxu0 0.0
        %1756 = vmatpush1.msra.mxu0 0.0
        %1757 = vmatprep.subr.mxu0 0.0
        %1758 = vmatpush1.msra.mxu0 0.0
        %1759 = vmatprep.subr.mxu0 0.0
        %1760 = vmatpush1.msra.mxu0 0.0
        %1761 = vmatprep.subr.mxu0 0.0
        %1762 = vmatpush1.msra.mxu0 0.0
        %1763 = vmatprep.subr.mxu0 0.0
        %1764 = vmatpush1.msra.mxu0 %v1732
        %1765 = vmatprep.subr.mxu0 0.0
        %1766 = vmatpush1.msra.mxu0 %v1731
        %1767 = vmatprep.subr.mxu0 0.0
        %1768 = vmatpush1.msra.mxu0 %v1730
        %1769 = vmatprep.subr.mxu0 0.0
        %1770 = vmatpush1.msra.mxu0 %v1729
        %1771 = vmatprep.subr.mxu0 0.0
        %1772 = vmatpush2.msra.mxu0 0.0
        %1773 = vmatprep.subr.mxu0 0.0
        %1774 = vmatpush2.msra.mxu0 0.0
        %1775 = vmatprep.subr.mxu0 0.0
        %1776 = vmatpush2.msra.mxu0 0.0
        %1777 = vmatprep.subr.mxu0 0.0
        %1778 = vmatpush2.msra.mxu0 0.0
        %1779 = vmatprep.subr.mxu0 0.0
        %1780 = vmatpush2.msra.mxu0 0.0
        %1781 = vmatprep.subr.mxu0 0.0
        %1782 = vmatpush2.msra.mxu0 0.0
        %1783 = vmatprep.subr.mxu0 0.0
        %1784 = vmatpush2.msra.mxu0 0.0
        %1785 = vmatprep.subr.mxu0 0.0
        %1786 = vmatpush2.msra.mxu0 0.0
        %1787 = vmatprep.subr.mxu0 0.0
        %1788 = vmatpush2.msra.mxu0 0.0
        %1789 = vmatprep.subr.mxu0 0.0
        %1790 = vmatpush2.msra.mxu0 0.0
        %1791 = vmatprep.subr.mxu0 0.0
        %1792 = vmatpush2.msra.mxu0 0.0
        %1793 = vmatprep.subr.mxu0 0.0
        %1794 = vmatpush2.msra.mxu0 0.0
        %1795 = vmatprep.subr.mxu0 0.0
        %1796 = vmatpush2.msra.mxu0 0.0
        %1797 = vmatprep.subr.mxu0 0.0
        %1798 = vmatpush2.msra.mxu0 0.0
        %1799 = vmatprep.subr.mxu0 0.0
        %1800 = vmatpush2.msra.mxu0 0.0
        %1801 = vmatprep.subr.mxu0 0.0
        %1802 = vmatpush2.msra.mxu0 0.0
        %1803 = vmatprep.mubr.f32.mxu0 0.0
        %1804 = vmatmul.mubr.f32.gmra.mxu0 %v1734
        %v1805 = vpop.f32.mrf.mxu0
        %v1806 = vadd.f32 0.0, %v1805
        %v1807 = vpop.f32.mrf.mxu0
        %1808 = vmatprep.mubr.f32.mxu0 0.0
        %1809 = vmatmul.mubr.f32.gmra.mxu0 %v1737
        %v1810 = vpop.f32.mrf.mxu0
        %v1811 = vadd.f32 0.0, %v1810
        %v1812 = vpop.f32.mrf.mxu0
        %1813 = vdwg.mxu0
        %v1814 = vadd.f32 %v741, %v1806
        %v1815 = vadd.f32 %v742, %v1811
        %v1816 = vld [vmem:[%s11] sm:$0x1]
        %v1818 = vlaneseq
        %v1819 = vshrl.u32 %v1818, 7
        %v1820 = vsub.s32 0, %v1819
        %v1821 = vrot.slane %v1816, %v1820
        %v1823 = vadd.f32 %v1814, %v1821
        %v1824 = vadd.f32 %v1815, %v1821
        %v1825 = vld [vmem:[%s6] sm:$0x1]
        %v1826 = vld [vmem:[%s7] sm:$0x1]
        %v1827 = vsel %vm747, %v1823, 0.0
        %1828 = vadd.xlane.f32.xlu0 %v1827
        %v1829 = vpop.xlane.xlu0 %1828
        %v1830 = vsel %vm747, %v1824, 0.0
        %1831 = vadd.xlane.f32.xlu0 %v1830
        %v1832 = vpop.xlane.xlu0 %1831
        %v1833 = vmul.f32 %v1829, %v754
        %v1834 = vmul.f32 %v1832, %v754
        %v1835 = vsub.f32 %v1823, %v1833
        %v1836 = vsub.f32 %v1824, %v1834
        %v1837 = vmul.f32 %v1835, %v1835
        %v1838 = vmul.f32 %v1836, %v1836
        %v1839 = vsel %vm747, %v1837, 0.0
        %1840 = vadd.xlane.f32.xlu0 %v1839
        %v1841 = vpop.xlane.xlu0 %1840
        %v1842 = vsel %vm747, %v1838, 0.0
        %1843 = vadd.xlane.f32.xlu0 %v1842
        %v1844 = vpop.xlane.xlu0 %1843
        %v1845 = vmul.f32 %v1841, %v767
        %v1846 = vmul.f32 %v1844, %v767
        %v1847 = vrsqrt.pop %v1845
        %v1848 = vmul.f32 %v1845, %v1847
        %vm1849 = vcmp.eq.f32.partialorder %v1845, inf
        %v1850 = vsel %vm1849, %v1845, %v1848
        %vm1851 = vcmp.eq.f32.partialorder %v1845, 0.0
        %v1852 = vand.u32 %v1845, 2147483648
        %v1853 = vsel %vm1851, %v1852, %v1850
        %v1854 = vrsqrt.pop %v1846
        %v1855 = vmul.f32 %v1846, %v1854
        %vm1856 = vcmp.eq.f32.partialorder %v1846, inf
        %v1857 = vsel %vm1856, %v1846, %v1855
        %vm1858 = vcmp.eq.f32.partialorder %v1846, 0.0
        %v1859 = vand.u32 %v1846, 2147483648
        %v1860 = vsel %vm1858, %v1859, %v1857
        %v1861 = vadd.f32 %v1853, 1e-06
        %v1862 = vadd.f32 %v1860, 1e-06
        %v1863 = vrcp.pop %v1861
        %v1864 = vrcp.pop %v1862
        %v1865 = vmul.f32 %v1835, %v1863
        %v1866 = vmul.f32 %v1836, %v1864
        %v1868 = vlaneseq
        %v1869 = vshrl.u32 %v1868, 7
        %v1870 = vsub.s32 0, %v1869
        %v1871 = vrot.slane %v1825, %v1870
        %v1873 = vmul.f32 %v1865, %v1871
        %v1874 = vmul.f32 %v1866, %v1871
        %v1876 = vlaneseq
        %v1877 = vshrl.u32 %v1876, 7
        %v1878 = vsub.s32 0, %v1877
        %v1879 = vrot.slane %v1826, %v1878
        %v1881 = vadd.f32 %v1873, %v1879
        %v1882 = vadd.f32 %v1874, %v1879
        %v1883 = vld [vmem:[%s12] sm:$0xff]
        %v1884 = vld [vmem:[%s12 + $0x8] sm:$0xff]
        %v1885 = vld [vmem:[%s12 + $0x10] sm:$0xff]
        %v1886 = vld [vmem:[%s12 + $0x18] sm:$0xff]
        %v1887 = vld [vmem:[%s13] sm:$0x1]
        %v1889 = vlaneseq
        %v1890 = vshrl.u32 %v1889, 7
        %v1891 = vsub.s32 0, %v1890
        %v1892 = vrot.slane %v1887, %v1891
        %v1895 = vsel %vm747, %v1881, 0
        %v1898 = vsel %vm747, %v1882, 0
        %1900 = vmatprep.subr.mxu0 0.0
        %1901 = vmatpush1.msra.mxu0 0.0
        %1902 = vmatprep.subr.mxu0 0.0
        %1903 = vmatpush1.msra.mxu0 0.0
        %1904 = vmatprep.subr.mxu0 0.0
        %1905 = vmatpush1.msra.mxu0 0.0
        %1906 = vmatprep.subr.mxu0 0.0
        %1907 = vmatpush1.msra.mxu0 0.0
        %1908 = vmatprep.subr.mxu0 0.0
        %1909 = vmatpush1.msra.mxu0 0.0
        %1910 = vmatprep.subr.mxu0 0.0
        %1911 = vmatpush1.msra.mxu0 0.0
        %1912 = vmatprep.subr.mxu0 0.0
        %1913 = vmatpush1.msra.mxu0 0.0
        %1914 = vmatprep.subr.mxu0 0.0
        %1915 = vmatpush1.msra.mxu0 0.0
        %1916 = vmatprep.subr.mxu0 0.0
        %1917 = vmatpush1.msra.mxu0 0.0
        %1918 = vmatprep.subr.mxu0 0.0
        %1919 = vmatpush1.msra.mxu0 0.0
        %1920 = vmatprep.subr.mxu0 0.0
        %1921 = vmatpush1.msra.mxu0 0.0
        %1922 = vmatprep.subr.mxu0 0.0
        %1923 = vmatpush1.msra.mxu0 0.0
        %1924 = vmatprep.subr.mxu0 0.0
        %1925 = vmatpush1.msra.mxu0 %v1886
        %1926 = vmatprep.subr.mxu0 0.0
        %1927 = vmatpush1.msra.mxu0 %v1885
        %1928 = vmatprep.subr.mxu0 0.0
        %1929 = vmatpush1.msra.mxu0 %v1884
        %1930 = vmatprep.subr.mxu0 0.0
        %1931 = vmatpush1.msra.mxu0 %v1883
        %1932 = vmatprep.subr.mxu0 0.0
        %1933 = vmatpush2.msra.mxu0 0.0
        %1934 = vmatprep.subr.mxu0 0.0
        %1935 = vmatpush2.msra.mxu0 0.0
        %1936 = vmatprep.subr.mxu0 0.0
        %1937 = vmatpush2.msra.mxu0 0.0
        %1938 = vmatprep.subr.mxu0 0.0
        %1939 = vmatpush2.msra.mxu0 0.0
        %1940 = vmatprep.subr.mxu0 0.0
        %1941 = vmatpush2.msra.mxu0 0.0
        %1942 = vmatprep.subr.mxu0 0.0
        %1943 = vmatpush2.msra.mxu0 0.0
        %1944 = vmatprep.subr.mxu0 0.0
        %1945 = vmatpush2.msra.mxu0 0.0
        %1946 = vmatprep.subr.mxu0 0.0
        %1947 = vmatpush2.msra.mxu0 0.0
        %1948 = vmatprep.subr.mxu0 0.0
        %1949 = vmatpush2.msra.mxu0 0.0
        %1950 = vmatprep.subr.mxu0 0.0
        %1951 = vmatpush2.msra.mxu0 0.0
        %1952 = vmatprep.subr.mxu0 0.0
        %1953 = vmatpush2.msra.mxu0 0.0
        %1954 = vmatprep.subr.mxu0 0.0
        %1955 = vmatpush2.msra.mxu0 0.0
        %1956 = vmatprep.subr.mxu0 0.0
        %1957 = vmatpush2.msra.mxu0 0.0
        %1958 = vmatprep.subr.mxu0 0.0
        %1959 = vmatpush2.msra.mxu0 0.0
        %1960 = vmatprep.subr.mxu0 0.0
        %1961 = vmatpush2.msra.mxu0 0.0
        %1962 = vmatprep.subr.mxu0 0.0
        %1963 = vmatpush2.msra.mxu0 0.0
        %1964 = vmatprep.mubr.f32.mxu0 0.0
        %1965 = vmatmul.mubr.f32.gmra.mxu0 %v1895
        %v1966 = vpop.f32.mrf.mxu0
        %v1967 = vadd.f32 %v1892, %v1966
        %v1968 = vpop.f32.mrf.mxu0
        %1969 = vmatprep.mubr.f32.mxu0 0.0
        %1970 = vmatmul.mubr.f32.gmra.mxu0 %v1898
        %v1971 = vpop.f32.mrf.mxu0
        %v1972 = vadd.f32 %v1892, %v1971
        %v1973 = vpop.f32.mrf.mxu0
        %1974 = vdwg.mxu0
        %v1975 = vmax.f32 %v1967, 0.0
        %v1976 = vmax.f32 %v1972, 0.0
        %v1977 = vld [vmem:[%s14] sm:$0xff]
        %v1978 = vld [vmem:[%s14 + $0x8] sm:$0xff]
        %v1979 = vld [vmem:[%s14 + $0x10] sm:$0xff]
        %v1980 = vld [vmem:[%s14 + $0x18] sm:$0xff]
        %v1981 = vld [vmem:[%s14 + $0x20] sm:$0xff]
        %v1982 = vld [vmem:[%s14 + $0x28] sm:$0xff]
        %v1983 = vld [vmem:[%s14 + $0x30] sm:$0xff]
        %v1984 = vld [vmem:[%s14 + $0x38] sm:$0xff]
        %v1986 = vsel %vm655, %v1975, 0
        %v1989 = vsel %vm655, %v1976, 0
        %1991 = vmatprep.subr.mxu0 0.0
        %1992 = vmatpush1.msra.mxu0 0.0
        %1993 = vmatprep.subr.mxu0 0.0
        %1994 = vmatpush1.msra.mxu0 0.0
        %1995 = vmatprep.subr.mxu0 0.0
        %1996 = vmatpush1.msra.mxu0 0.0
        %1997 = vmatprep.subr.mxu0 0.0
        %1998 = vmatpush1.msra.mxu0 0.0
        %1999 = vmatprep.subr.mxu0 0.0
        %2000 = vmatpush1.msra.mxu0 0.0
        %2001 = vmatprep.subr.mxu0 0.0
        %2002 = vmatpush1.msra.mxu0 0.0
        %2003 = vmatprep.subr.mxu0 0.0
        %2004 = vmatpush1.msra.mxu0 0.0
        %2005 = vmatprep.subr.mxu0 0.0
        %2006 = vmatpush1.msra.mxu0 0.0
        %2007 = vmatprep.subr.mxu0 0.0
        %2008 = vmatpush1.msra.mxu0 %v1984
        %2009 = vmatprep.subr.mxu0 0.0
        %2010 = vmatpush1.msra.mxu0 %v1983
        %2011 = vmatprep.subr.mxu0 0.0
        %2012 = vmatpush1.msra.mxu0 %v1982
        %2013 = vmatprep.subr.mxu0 0.0
        %2014 = vmatpush1.msra.mxu0 %v1981
        %2015 = vmatprep.subr.mxu0 0.0
        %2016 = vmatpush1.msra.mxu0 %v1980
        %2017 = vmatprep.subr.mxu0 0.0
        %2018 = vmatpush1.msra.mxu0 %v1979
        %2019 = vmatprep.subr.mxu0 0.0
        %2020 = vmatpush1.msra.mxu0 %v1978
        %2021 = vmatprep.subr.mxu0 0.0
        %2022 = vmatpush1.msra.mxu0 %v1977
        %2023 = vmatprep.subr.mxu0 0.0
        %2024 = vmatpush2.msra.mxu0 0.0
        %2025 = vmatprep.subr.mxu0 0.0
        %2026 = vmatpush2.msra.mxu0 0.0
        %2027 = vmatprep.subr.mxu0 0.0
        %2028 = vmatpush2.msra.mxu0 0.0
        %2029 = vmatprep.subr.mxu0 0.0
        %2030 = vmatpush2.msra.mxu0 0.0
        %2031 = vmatprep.subr.mxu0 0.0
        %2032 = vmatpush2.msra.mxu0 0.0
        %2033 = vmatprep.subr.mxu0 0.0
        %2034 = vmatpush2.msra.mxu0 0.0
        %2035 = vmatprep.subr.mxu0 0.0
        %2036 = vmatpush2.msra.mxu0 0.0
        %2037 = vmatprep.subr.mxu0 0.0
        %2038 = vmatpush2.msra.mxu0 0.0
        %2039 = vmatprep.subr.mxu0 0.0
        %2040 = vmatpush2.msra.mxu0 0.0
        %2041 = vmatprep.subr.mxu0 0.0
        %2042 = vmatpush2.msra.mxu0 0.0
        %2043 = vmatprep.subr.mxu0 0.0
        %2044 = vmatpush2.msra.mxu0 0.0
        %2045 = vmatprep.subr.mxu0 0.0
        %2046 = vmatpush2.msra.mxu0 0.0
        %2047 = vmatprep.subr.mxu0 0.0
        %2048 = vmatpush2.msra.mxu0 0.0
        %2049 = vmatprep.subr.mxu0 0.0
        %2050 = vmatpush2.msra.mxu0 0.0
        %2051 = vmatprep.subr.mxu0 0.0
        %2052 = vmatpush2.msra.mxu0 0.0
        %2053 = vmatprep.subr.mxu0 0.0
        %2054 = vmatpush2.msra.mxu0 0.0
        %2055 = vmatprep.mubr.f32.mxu0 0.0
        %2056 = vmatmul.mubr.f32.gmra.mxu0 %v1986
        %v2057 = vpop.f32.mrf.mxu0
        %v2058 = vadd.f32 0.0, %v2057
        %v2059 = vpop.f32.mrf.mxu0
        %2060 = vmatprep.mubr.f32.mxu0 0.0
        %2061 = vmatmul.mubr.f32.gmra.mxu0 %v1989
        %v2062 = vpop.f32.mrf.mxu0
        %v2063 = vadd.f32 0.0, %v2062
        %v2064 = vpop.f32.mrf.mxu0
        %2065 = vdwg.mxu0
        %v2066 = vadd.f32 %v1823, %v2058
        %v2067 = vadd.f32 %v1824, %v2063
        %v2068 = vld [vmem:[%s15] sm:$0x1]
        %v2070 = vlaneseq
        %v2071 = vshrl.u32 %v2070, 7
        %v2072 = vsub.s32 0, %v2071
        %v2073 = vrot.slane %v2068, %v2072
        %v2075 = vadd.f32 %v2066, %v2073
        %v2076 = vadd.f32 %v2067, %v2073
        %s2077 = scalar_lea.vmem %s4, 1
        %v2078 = vld [vmem:[%s2077] sm:$0x1]
        %s2079 = scalar_lea.vmem %s5, 1
        %v2080 = vld [vmem:[%s2079] sm:$0x1]
        %v2081 = vsel %vm747, %v2075, 0.0
        %2082 = vadd.xlane.f32.xlu0 %v2081
        %v2083 = vpop.xlane.xlu0 %2082
        %v2084 = vsel %vm747, %v2076, 0.0
        %2085 = vadd.xlane.f32.xlu0 %v2084
        %v2086 = vpop.xlane.xlu0 %2085
        %v2087 = vmul.f32 %v2083, %v754
        %v2088 = vmul.f32 %v2086, %v754
        %v2089 = vsub.f32 %v2075, %v2087
        %v2090 = vsub.f32 %v2076, %v2088
        %v2091 = vmul.f32 %v2089, %v2089
        %v2092 = vmul.f32 %v2090, %v2090
        %v2093 = vsel %vm747, %v2091, 0.0
        %2094 = vadd.xlane.f32.xlu0 %v2093
        %v2095 = vpop.xlane.xlu0 %2094
        %v2096 = vsel %vm747, %v2092, 0.0
        %2097 = vadd.xlane.f32.xlu0 %v2096
        %v2098 = vpop.xlane.xlu0 %2097
        %v2099 = vmul.f32 %v2095, %v767
        %v2100 = vmul.f32 %v2098, %v767
        %v2101 = vrsqrt.pop %v2099
        %v2102 = vmul.f32 %v2099, %v2101
        %vm2103 = vcmp.eq.f32.partialorder %v2099, inf
        %v2104 = vsel %vm2103, %v2099, %v2102
        %vm2105 = vcmp.eq.f32.partialorder %v2099, 0.0
        %v2106 = vand.u32 %v2099, 2147483648
        %v2107 = vsel %vm2105, %v2106, %v2104
        %v2108 = vrsqrt.pop %v2100
        %v2109 = vmul.f32 %v2100, %v2108
        %vm2110 = vcmp.eq.f32.partialorder %v2100, inf
        %v2111 = vsel %vm2110, %v2100, %v2109
        %vm2112 = vcmp.eq.f32.partialorder %v2100, 0.0
        %v2113 = vand.u32 %v2100, 2147483648
        %v2114 = vsel %vm2112, %v2113, %v2111
        %v2115 = vadd.f32 %v2107, 1e-06
        %v2116 = vadd.f32 %v2114, 1e-06
        %v2117 = vrcp.pop %v2115
        %v2118 = vrcp.pop %v2116
        %v2119 = vmul.f32 %v2089, %v2117
        %v2120 = vmul.f32 %v2090, %v2118
        %v2122 = vlaneseq
        %v2123 = vshrl.u32 %v2122, 7
        %v2124 = vsub.s32 0, %v2123
        %v2125 = vrot.slane %v2078, %v2124
        %v2127 = vmul.f32 %v2119, %v2125
        %v2128 = vmul.f32 %v2120, %v2125
        %v2130 = vlaneseq
        %v2131 = vshrl.u32 %v2130, 7
        %v2132 = vsub.s32 0, %v2131
        %v2133 = vrot.slane %v2080, %v2132
        %v2135 = vadd.f32 %v2127, %v2133
        %v2136 = vadd.f32 %v2128, %v2133
        %s2137 = scalar_lea.vmem %s8, 32
        %v2138 = vld [vmem:[%s2137] sm:$0xff]
        %v2139 = vld [vmem:[%s2137 + $0x8] sm:$0xff]
        %v2140 = vld [vmem:[%s2137 + $0x10] sm:$0xff]
        %v2141 = vld [vmem:[%s2137 + $0x18] sm:$0xff]
        %s2142 = scalar_lea.vmem %s9, 1
        %v2143 = vld [vmem:[%s2142] sm:$0x1]
        %v2145 = vlaneseq
        %v2146 = vshrl.u32 %v2145, 7
        %v2147 = vsub.s32 0, %v2146
        %v2148 = vrot.slane %v2143, %v2147
        %v2151 = vsel %vm747, %v2135, 0
        %v2154 = vsel %vm747, %v2136, 0
        %2156 = vmatprep.subr.mxu0 0.0
        %2157 = vmatpush1.msra.mxu0 0.0
        %2158 = vmatprep.subr.mxu0 0.0
        %2159 = vmatpush1.msra.mxu0 0.0
        %2160 = vmatprep.subr.mxu0 0.0
        %2161 = vmatpush1.msra.mxu0 0.0
        %2162 = vmatprep.subr.mxu0 0.0
        %2163 = vmatpush1.msra.mxu0 0.0
        %2164 = vmatprep.subr.mxu0 0.0
        %2165 = vmatpush1.msra.mxu0 0.0
        %2166 = vmatprep.subr.mxu0 0.0
        %2167 = vmatpush1.msra.mxu0 0.0
        %2168 = vmatprep.subr.mxu0 0.0
        %2169 = vmatpush1.msra.mxu0 0.0
        %2170 = vmatprep.subr.mxu0 0.0
        %2171 = vmatpush1.msra.mxu0 0.0
        %2172 = vmatprep.subr.mxu0 0.0
        %2173 = vmatpush1.msra.mxu0 0.0
        %2174 = vmatprep.subr.mxu0 0.0
        %2175 = vmatpush1.msra.mxu0 0.0
        %2176 = vmatprep.subr.mxu0 0.0
        %2177 = vmatpush1.msra.mxu0 0.0
        %2178 = vmatprep.subr.mxu0 0.0
        %2179 = vmatpush1.msra.mxu0 0.0
        %2180 = vmatprep.subr.mxu0 0.0
        %2181 = vmatpush1.msra.mxu0 %v2141
        %2182 = vmatprep.subr.mxu0 0.0
        %2183 = vmatpush1.msra.mxu0 %v2140
        %2184 = vmatprep.subr.mxu0 0.0
        %2185 = vmatpush1.msra.mxu0 %v2139
        %2186 = vmatprep.subr.mxu0 0.0
        %2187 = vmatpush1.msra.mxu0 %v2138
        %2188 = vmatprep.subr.mxu0 0.0
        %2189 = vmatpush2.msra.mxu0 0.0
        %2190 = vmatprep.subr.mxu0 0.0
        %2191 = vmatpush2.msra.mxu0 0.0
        %2192 = vmatprep.subr.mxu0 0.0
        %2193 = vmatpush2.msra.mxu0 0.0
        %2194 = vmatprep.subr.mxu0 0.0
        %2195 = vmatpush2.msra.mxu0 0.0
        %2196 = vmatprep.subr.mxu0 0.0
        %2197 = vmatpush2.msra.mxu0 0.0
        %2198 = vmatprep.subr.mxu0 0.0
        %2199 = vmatpush2.msra.mxu0 0.0
        %2200 = vmatprep.subr.mxu0 0.0
        %2201 = vmatpush2.msra.mxu0 0.0
        %2202 = vmatprep.subr.mxu0 0.0
        %2203 = vmatpush2.msra.mxu0 0.0
        %2204 = vmatprep.subr.mxu0 0.0
        %2205 = vmatpush2.msra.mxu0 0.0
        %2206 = vmatprep.subr.mxu0 0.0
        %2207 = vmatpush2.msra.mxu0 0.0
        %2208 = vmatprep.subr.mxu0 0.0
        %2209 = vmatpush2.msra.mxu0 0.0
        %2210 = vmatprep.subr.mxu0 0.0
        %2211 = vmatpush2.msra.mxu0 0.0
        %2212 = vmatprep.subr.mxu0 0.0
        %2213 = vmatpush2.msra.mxu0 0.0
        %2214 = vmatprep.subr.mxu0 0.0
        %2215 = vmatpush2.msra.mxu0 0.0
        %2216 = vmatprep.subr.mxu0 0.0
        %2217 = vmatpush2.msra.mxu0 0.0
        %2218 = vmatprep.subr.mxu0 0.0
        %2219 = vmatpush2.msra.mxu0 0.0
        %2220 = vmatprep.mubr.f32.mxu0 0.0
        %2221 = vmatmul.mubr.f32.gmra.mxu0 %v2151
        %v2222 = vpop.f32.mrf.mxu0
        %v2223 = vadd.f32 %v2148, %v2222
        %v2224 = vpop.f32.mrf.mxu0
        %2225 = vmatprep.mubr.f32.mxu0 0.0
        %2226 = vmatmul.mubr.f32.gmra.mxu0 %v2154
        %v2227 = vpop.f32.mrf.mxu0
        %v2228 = vadd.f32 %v2148, %v2227
        %v2229 = vpop.f32.mrf.mxu0
        %2230 = vdwg.mxu0
        %2233 = vrot.lane.b32.xlu0 %v2223, 96
        %v2234 = vpop.permute.xlu0 %2233
        %2235 = vrot.lane.b32.xlu0 %v2228, 96
        %v2236 = vpop.permute.xlu0 %2235
        %v2237 = vsel %vm904, %v2223, 0
        %v2239 = vsel %vm904, %v2228, 0
        %v2241 = vsel %vm904, %v2234, 0
        %v2243 = vsel %vm904, %v2236, 0
        %2245 = vmatprep.subr.mxu0 0.0
        %2246 = vmatpush1.xpose.msra.mxu0 0.0
        %2247 = vmatprep.subr.mxu0 0.0
        %2248 = vmatpush1.xpose.msra.mxu0 0.0
        %2249 = vmatprep.subr.mxu0 0.0
        %2250 = vmatpush1.xpose.msra.mxu0 0.0
        %2251 = vmatprep.subr.mxu0 0.0
        %2252 = vmatpush1.xpose.msra.mxu0 0.0
        %2253 = vmatprep.subr.mxu0 0.0
        %2254 = vmatpush1.xpose.msra.mxu0 0.0
        %2255 = vmatprep.subr.mxu0 0.0
        %2256 = vmatpush1.xpose.msra.mxu0 0.0
        %2257 = vmatprep.subr.mxu0 0.0
        %2258 = vmatpush1.xpose.msra.mxu0 0.0
        %2259 = vmatprep.subr.mxu0 0.0
        %2260 = vmatpush1.xpose.msra.mxu0 0.0
        %2261 = vmatprep.subr.mxu0 0.0
        %2262 = vmatpush1.xpose.msra.mxu0 0.0
        %2263 = vmatprep.subr.mxu0 0.0
        %2264 = vmatpush1.xpose.msra.mxu0 0.0
        %2265 = vmatprep.subr.mxu0 0.0
        %2266 = vmatpush1.xpose.msra.mxu0 0.0
        %2267 = vmatprep.subr.mxu0 0.0
        %2268 = vmatpush1.xpose.msra.mxu0 0.0
        %2269 = vmatprep.subr.mxu0 0.0
        %2270 = vmatpush1.xpose.msra.mxu0 0.0
        %2271 = vmatprep.subr.mxu0 0.0
        %2272 = vmatpush1.xpose.msra.mxu0 0.0
        %2273 = vmatprep.subr.mxu0 0.0
        %2274 = vmatpush1.xpose.msra.mxu0 %v2243
        %2275 = vmatprep.subr.mxu0 0.0
        %2276 = vmatpush1.xpose.msra.mxu0 %v2241
        %2277 = vmatprep.subr.mxu0 0.0
        %2278 = vmatpush2.xpose.msra.mxu0 0.0
        %2279 = vmatprep.subr.mxu0 0.0
        %2280 = vmatpush2.xpose.msra.mxu0 0.0
        %2281 = vmatprep.subr.mxu0 0.0
        %2282 = vmatpush2.xpose.msra.mxu0 0.0
        %2283 = vmatprep.subr.mxu0 0.0
        %2284 = vmatpush2.xpose.msra.mxu0 0.0
        %2285 = vmatprep.subr.mxu0 0.0
        %2286 = vmatpush2.xpose.msra.mxu0 0.0
        %2287 = vmatprep.subr.mxu0 0.0
        %2288 = vmatpush2.xpose.msra.mxu0 0.0
        %2289 = vmatprep.subr.mxu0 0.0
        %2290 = vmatpush2.xpose.msra.mxu0 0.0
        %2291 = vmatprep.subr.mxu0 0.0
        %2292 = vmatpush2.xpose.msra.mxu0 0.0
        %2293 = vmatprep.subr.mxu0 0.0
        %2294 = vmatpush2.xpose.msra.mxu0 0.0
        %2295 = vmatprep.subr.mxu0 0.0
        %2296 = vmatpush2.xpose.msra.mxu0 0.0
        %2297 = vmatprep.subr.mxu0 0.0
        %2298 = vmatpush2.xpose.msra.mxu0 0.0
        %2299 = vmatprep.subr.mxu0 0.0
        %2300 = vmatpush2.xpose.msra.mxu0 0.0
        %2301 = vmatprep.subr.mxu0 0.0
        %2302 = vmatpush2.xpose.msra.mxu0 0.0
        %2303 = vmatprep.subr.mxu0 0.0
        %2304 = vmatpush2.xpose.msra.mxu0 0.0
        %2305 = vmatprep.subr.mxu0 0.0
        %2306 = vmatpush2.xpose.msra.mxu0 0.0
        %2307 = vmatprep.subr.mxu0 0.0
        %2308 = vmatpush2.xpose.msra.mxu0 0.0
        %2309 = vmatprep.mubr.f32.mxu0 0.0
        %2310 = vmatmul.mubr.f32.gmra.mxu0 %v2237
        %v2311 = vpop.f32.mrf.mxu0
        %v2312 = vadd.f32 %v743, %v2311
        %v2313 = vpop.f32.mrf.mxu0
        %2314 = vmatprep.mubr.f32.mxu0 0.0
        %2315 = vmatmul.mubr.f32.gmra.mxu0 %v2239
        %v2316 = vpop.f32.mrf.mxu0
        %v2317 = vadd.f32 %v744, %v2316
        %v2318 = vpop.f32.mrf.mxu0
        %2319 = vdwg.mxu0
        %v2320 = vsel %vm988, %v2312, -inf
        %2321 = vmax.xlane.f32.xlu0 %v2320
        %v2322 = vpop.xlane.xlu0 %2321
        %v2323 = vsel %vm988, %v2317, -inf
        %2324 = vmax.xlane.f32.xlu0 %v2323
        %v2325 = vpop.xlane.xlu0 %2324
        %v2326 = vsub.f32 %v2312, %v2322
        %v2327 = vsub.f32 %v2317, %v2325
        %v2328 = vmul.f32 %v2326, 1.442695
        %v2329 = vpow.pop %v2328
        %v2330 = vmul.f32 %v2327, 1.442695
        %v2331 = vpow.pop %v2330
        %v2332 = vsel %vm988, %v2329, 0.0
        %2333 = vadd.xlane.f32.xlu0 %v2332
        %v2334 = vpop.xlane.xlu0 %2333
        %v2335 = vsel %vm988, %v2331, 0.0
        %2336 = vadd.xlane.f32.xlu0 %v2335
        %v2337 = vpop.xlane.xlu0 %2336
        %2338 = vrot.lane.b32.xlu0 %v2223, 64
        %v2339 = vpop.permute.xlu0 %2338
        %2340 = vrot.lane.b32.xlu0 %v2228, 64
        %v2341 = vpop.permute.xlu0 %2340
        %v2345 = vsel %vm988, %v2329, 0
        %v2348 = vsel %vm988, %v2331, 0
        %2350 = vmatprep.subr.mxu0 0.0
        %2351 = vmatpush1.msra.mxu0 0.0
        %2352 = vmatprep.subr.mxu0 0.0
        %2353 = vmatpush1.msra.mxu0 0.0
        %2354 = vmatprep.subr.mxu0 0.0
        %2355 = vmatpush1.msra.mxu0 0.0
        %2356 = vmatprep.subr.mxu0 0.0
        %2357 = vmatpush1.msra.mxu0 0.0
        %2358 = vmatprep.subr.mxu0 0.0
        %2359 = vmatpush1.msra.mxu0 0.0
        %2360 = vmatprep.subr.mxu0 0.0
        %2361 = vmatpush1.msra.mxu0 0.0
        %2362 = vmatprep.subr.mxu0 0.0
        %2363 = vmatpush1.msra.mxu0 0.0
        %2364 = vmatprep.subr.mxu0 0.0
        %2365 = vmatpush1.msra.mxu0 0.0
        %2366 = vmatprep.subr.mxu0 0.0
        %2367 = vmatpush1.msra.mxu0 0.0
        %2368 = vmatprep.subr.mxu0 0.0
        %2369 = vmatpush1.msra.mxu0 0.0
        %2370 = vmatprep.subr.mxu0 0.0
        %2371 = vmatpush1.msra.mxu0 0.0
        %2372 = vmatprep.subr.mxu0 0.0
        %2373 = vmatpush1.msra.mxu0 0.0
        %2374 = vmatprep.subr.mxu0 0.0
        %2375 = vmatpush1.msra.mxu0 0.0
        %2376 = vmatprep.subr.mxu0 0.0
        %2377 = vmatpush1.msra.mxu0 0.0
        %2378 = vmatprep.subr.mxu0 0.0
        %2379 = vmatpush1.msra.mxu0 %v2341
        %2380 = vmatprep.subr.mxu0 0.0
        %2381 = vmatpush1.msra.mxu0 %v2339
        %2382 = vmatprep.subr.mxu0 0.0
        %2383 = vmatpush2.msra.mxu0 0.0
        %2384 = vmatprep.subr.mxu0 0.0
        %2385 = vmatpush2.msra.mxu0 0.0
        %2386 = vmatprep.subr.mxu0 0.0
        %2387 = vmatpush2.msra.mxu0 0.0
        %2388 = vmatprep.subr.mxu0 0.0
        %2389 = vmatpush2.msra.mxu0 0.0
        %2390 = vmatprep.subr.mxu0 0.0
        %2391 = vmatpush2.msra.mxu0 0.0
        %2392 = vmatprep.subr.mxu0 0.0
        %2393 = vmatpush2.msra.mxu0 0.0
        %2394 = vmatprep.subr.mxu0 0.0
        %2395 = vmatpush2.msra.mxu0 0.0
        %2396 = vmatprep.subr.mxu0 0.0
        %2397 = vmatpush2.msra.mxu0 0.0
        %2398 = vmatprep.subr.mxu0 0.0
        %2399 = vmatpush2.msra.mxu0 0.0
        %2400 = vmatprep.subr.mxu0 0.0
        %2401 = vmatpush2.msra.mxu0 0.0
        %2402 = vmatprep.subr.mxu0 0.0
        %2403 = vmatpush2.msra.mxu0 0.0
        %2404 = vmatprep.subr.mxu0 0.0
        %2405 = vmatpush2.msra.mxu0 0.0
        %2406 = vmatprep.subr.mxu0 0.0
        %2407 = vmatpush2.msra.mxu0 0.0
        %2408 = vmatprep.subr.mxu0 0.0
        %2409 = vmatpush2.msra.mxu0 0.0
        %2410 = vmatprep.subr.mxu0 0.0
        %2411 = vmatpush2.msra.mxu0 0.0
        %2412 = vmatprep.subr.mxu0 0.0
        %2413 = vmatpush2.msra.mxu0 0.0
        %2414 = vmatprep.mubr.f32.mxu0 0.0
        %2415 = vmatmul.mubr.f32.gmra.mxu0 %v2345
        %v2416 = vpop.f32.mrf.mxu0
        %v2417 = vadd.f32 0.0, %v2416
        %v2418 = vpop.f32.mrf.mxu0
        %2419 = vmatprep.mubr.f32.mxu0 0.0
        %2420 = vmatmul.mubr.f32.gmra.mxu0 %v2348
        %v2421 = vpop.f32.mrf.mxu0
        %v2422 = vadd.f32 0.0, %v2421
        %v2423 = vpop.f32.mrf.mxu0
        %2424 = vdwg.mxu0
        %v2425 = vrcp.pop %v2334
        %v2426 = vrcp.pop %v2337
        %v2427 = vmul.f32 %v2417, %v2425
        %v2428 = vmul.f32 %v2422, %v2426
        %2429 = vrot.lane.b32.xlu0 %v2223, 120
        %v2430 = vpop.permute.xlu0 %2429
        %2431 = vrot.lane.b32.xlu0 %v2228, 120
        %v2432 = vpop.permute.xlu0 %2431
        %2433 = vrot.lane.b32.xlu0 %v2223, 88
        %v2434 = vpop.permute.xlu0 %2433
        %2435 = vrot.lane.b32.xlu0 %v2228, 88
        %v2436 = vpop.permute.xlu0 %2435
        %v2437 = vsel %vm904, %v2430, 0
        %v2439 = vsel %vm904, %v2432, 0
        %v2441 = vsel %vm904, %v2434, 0
        %v2443 = vsel %vm904, %v2436, 0
        %2445 = vmatprep.subr.mxu0 0.0
        %2446 = vmatpush1.xpose.msra.mxu0 0.0
        %2447 = vmatprep.subr.mxu0 0.0
        %2448 = vmatpush1.xpose.msra.mxu0 0.0
        %2449 = vmatprep.subr.mxu0 0.0
        %2450 = vmatpush1.xpose.msra.mxu0 0.0
        %2451 = vmatprep.subr.mxu0 0.0
        %2452 = vmatpush1.xpose.msra.mxu0 0.0
        %2453 = vmatprep.subr.mxu0 0.0
        %2454 = vmatpush1.xpose.msra.mxu0 0.0
        %2455 = vmatprep.subr.mxu0 0.0
        %2456 = vmatpush1.xpose.msra.mxu0 0.0
        %2457 = vmatprep.subr.mxu0 0.0
        %2458 = vmatpush1.xpose.msra.mxu0 0.0
        %2459 = vmatprep.subr.mxu0 0.0
        %2460 = vmatpush1.xpose.msra.mxu0 0.0
        %2461 = vmatprep.subr.mxu0 0.0
        %2462 = vmatpush1.xpose.msra.mxu0 0.0
        %2463 = vmatprep.subr.mxu0 0.0
        %2464 = vmatpush1.xpose.msra.mxu0 0.0
        %2465 = vmatprep.subr.mxu0 0.0
        %2466 = vmatpush1.xpose.msra.mxu0 0.0
        %2467 = vmatprep.subr.mxu0 0.0
        %2468 = vmatpush1.xpose.msra.mxu0 0.0
        %2469 = vmatprep.subr.mxu0 0.0
        %2470 = vmatpush1.xpose.msra.mxu0 0.0
        %2471 = vmatprep.subr.mxu0 0.0
        %2472 = vmatpush1.xpose.msra.mxu0 0.0
        %2473 = vmatprep.subr.mxu0 0.0
        %2474 = vmatpush1.xpose.msra.mxu0 %v2443
        %2475 = vmatprep.subr.mxu0 0.0
        %2476 = vmatpush1.xpose.msra.mxu0 %v2441
        %2477 = vmatprep.subr.mxu0 0.0
        %2478 = vmatpush2.xpose.msra.mxu0 0.0
        %2479 = vmatprep.subr.mxu0 0.0
        %2480 = vmatpush2.xpose.msra.mxu0 0.0
        %2481 = vmatprep.subr.mxu0 0.0
        %2482 = vmatpush2.xpose.msra.mxu0 0.0
        %2483 = vmatprep.subr.mxu0 0.0
        %2484 = vmatpush2.xpose.msra.mxu0 0.0
        %2485 = vmatprep.subr.mxu0 0.0
        %2486 = vmatpush2.xpose.msra.mxu0 0.0
        %2487 = vmatprep.subr.mxu0 0.0
        %2488 = vmatpush2.xpose.msra.mxu0 0.0
        %2489 = vmatprep.subr.mxu0 0.0
        %2490 = vmatpush2.xpose.msra.mxu0 0.0
        %2491 = vmatprep.subr.mxu0 0.0
        %2492 = vmatpush2.xpose.msra.mxu0 0.0
        %2493 = vmatprep.subr.mxu0 0.0
        %2494 = vmatpush2.xpose.msra.mxu0 0.0
        %2495 = vmatprep.subr.mxu0 0.0
        %2496 = vmatpush2.xpose.msra.mxu0 0.0
        %2497 = vmatprep.subr.mxu0 0.0
        %2498 = vmatpush2.xpose.msra.mxu0 0.0
        %2499 = vmatprep.subr.mxu0 0.0
        %2500 = vmatpush2.xpose.msra.mxu0 0.0
        %2501 = vmatprep.subr.mxu0 0.0
        %2502 = vmatpush2.xpose.msra.mxu0 0.0
        %2503 = vmatprep.subr.mxu0 0.0
        %2504 = vmatpush2.xpose.msra.mxu0 0.0
        %2505 = vmatprep.subr.mxu0 0.0
        %2506 = vmatpush2.xpose.msra.mxu0 0.0
        %2507 = vmatprep.subr.mxu0 0.0
        %2508 = vmatpush2.xpose.msra.mxu0 0.0
        %2509 = vmatprep.mubr.f32.mxu0 0.0
        %2510 = vmatmul.mubr.f32.gmra.mxu0 %v2437
        %v2511 = vpop.f32.mrf.mxu0
        %v2512 = vadd.f32 %v743, %v2511
        %v2513 = vpop.f32.mrf.mxu0
        %2514 = vmatprep.mubr.f32.mxu0 0.0
        %2515 = vmatmul.mubr.f32.gmra.mxu0 %v2439
        %v2516 = vpop.f32.mrf.mxu0
        %v2517 = vadd.f32 %v744, %v2516
        %v2518 = vpop.f32.mrf.mxu0
        %2519 = vdwg.mxu0
        %v2520 = vsel %vm988, %v2512, -inf
        %2521 = vmax.xlane.f32.xlu0 %v2520
        %v2522 = vpop.xlane.xlu0 %2521
        %v2523 = vsel %vm988, %v2517, -inf
        %2524 = vmax.xlane.f32.xlu0 %v2523
        %v2525 = vpop.xlane.xlu0 %2524
        %v2526 = vsub.f32 %v2512, %v2522
        %v2527 = vsub.f32 %v2517, %v2525
        %v2528 = vmul.f32 %v2526, 1.442695
        %v2529 = vpow.pop %v2528
        %v2530 = vmul.f32 %v2527, 1.442695
        %v2531 = vpow.pop %v2530
        %v2532 = vsel %vm988, %v2529, 0.0
        %2533 = vadd.xlane.f32.xlu0 %v2532
        %v2534 = vpop.xlane.xlu0 %2533
        %v2535 = vsel %vm988, %v2531, 0.0
        %2536 = vadd.xlane.f32.xlu0 %v2535
        %v2537 = vpop.xlane.xlu0 %2536
        %2538 = vrot.lane.b32.xlu0 %v2223, 56
        %v2539 = vpop.permute.xlu0 %2538
        %2540 = vrot.lane.b32.xlu0 %v2228, 56
        %v2541 = vpop.permute.xlu0 %2540
        %v2545 = vsel %vm988, %v2529, 0
        %v2548 = vsel %vm988, %v2531, 0
        %2550 = vmatprep.subr.mxu0 0.0
        %2551 = vmatpush1.msra.mxu0 0.0
        %2552 = vmatprep.subr.mxu0 0.0
        %2553 = vmatpush1.msra.mxu0 0.0
        %2554 = vmatprep.subr.mxu0 0.0
        %2555 = vmatpush1.msra.mxu0 0.0
        %2556 = vmatprep.subr.mxu0 0.0
        %2557 = vmatpush1.msra.mxu0 0.0
        %2558 = vmatprep.subr.mxu0 0.0
        %2559 = vmatpush1.msra.mxu0 0.0
        %2560 = vmatprep.subr.mxu0 0.0
        %2561 = vmatpush1.msra.mxu0 0.0
        %2562 = vmatprep.subr.mxu0 0.0
        %2563 = vmatpush1.msra.mxu0 0.0
        %2564 = vmatprep.subr.mxu0 0.0
        %2565 = vmatpush1.msra.mxu0 0.0
        %2566 = vmatprep.subr.mxu0 0.0
        %2567 = vmatpush1.msra.mxu0 0.0
        %2568 = vmatprep.subr.mxu0 0.0
        %2569 = vmatpush1.msra.mxu0 0.0
        %2570 = vmatprep.subr.mxu0 0.0
        %2571 = vmatpush1.msra.mxu0 0.0
        %2572 = vmatprep.subr.mxu0 0.0
        %2573 = vmatpush1.msra.mxu0 0.0
        %2574 = vmatprep.subr.mxu0 0.0
        %2575 = vmatpush1.msra.mxu0 0.0
        %2576 = vmatprep.subr.mxu0 0.0
        %2577 = vmatpush1.msra.mxu0 0.0
        %2578 = vmatprep.subr.mxu0 0.0
        %2579 = vmatpush1.msra.mxu0 %v2541
        %2580 = vmatprep.subr.mxu0 0.0
        %2581 = vmatpush1.msra.mxu0 %v2539
        %2582 = vmatprep.subr.mxu0 0.0
        %2583 = vmatpush2.msra.mxu0 0.0
        %2584 = vmatprep.subr.mxu0 0.0
        %2585 = vmatpush2.msra.mxu0 0.0
        %2586 = vmatprep.subr.mxu0 0.0
        %2587 = vmatpush2.msra.mxu0 0.0
        %2588 = vmatprep.subr.mxu0 0.0
        %2589 = vmatpush2.msra.mxu0 0.0
        %2590 = vmatprep.subr.mxu0 0.0
        %2591 = vmatpush2.msra.mxu0 0.0
        %2592 = vmatprep.subr.mxu0 0.0
        %2593 = vmatpush2.msra.mxu0 0.0
        %2594 = vmatprep.subr.mxu0 0.0
        %2595 = vmatpush2.msra.mxu0 0.0
        %2596 = vmatprep.subr.mxu0 0.0
        %2597 = vmatpush2.msra.mxu0 0.0
        %2598 = vmatprep.subr.mxu0 0.0
        %2599 = vmatpush2.msra.mxu0 0.0
        %2600 = vmatprep.subr.mxu0 0.0
        %2601 = vmatpush2.msra.mxu0 0.0
        %2602 = vmatprep.subr.mxu0 0.0
        %2603 = vmatpush2.msra.mxu0 0.0
        %2604 = vmatprep.subr.mxu0 0.0
        %2605 = vmatpush2.msra.mxu0 0.0
        %2606 = vmatprep.subr.mxu0 0.0
        %2607 = vmatpush2.msra.mxu0 0.0
        %2608 = vmatprep.subr.mxu0 0.0
        %2609 = vmatpush2.msra.mxu0 0.0
        %2610 = vmatprep.subr.mxu0 0.0
        %2611 = vmatpush2.msra.mxu0 0.0
        %2612 = vmatprep.subr.mxu0 0.0
        %2613 = vmatpush2.msra.mxu0 0.0
        %2614 = vmatprep.mubr.f32.mxu0 0.0
        %2615 = vmatmul.mubr.f32.gmra.mxu0 %v2545
        %v2616 = vpop.f32.mrf.mxu0
        %v2617 = vadd.f32 0.0, %v2616
        %v2618 = vpop.f32.mrf.mxu0
        %2619 = vmatprep.mubr.f32.mxu0 0.0
        %2620 = vmatmul.mubr.f32.gmra.mxu0 %v2548
        %v2621 = vpop.f32.mrf.mxu0
        %v2622 = vadd.f32 0.0, %v2621
        %v2623 = vpop.f32.mrf.mxu0
        %2624 = vdwg.mxu0
        %v2625 = vrcp.pop %v2534
        %v2626 = vrcp.pop %v2537
        %v2627 = vmul.f32 %v2617, %v2625
        %v2628 = vmul.f32 %v2622, %v2626
        %2629 = vrot.lane.b32.xlu0 %v2223, 112
        %v2630 = vpop.permute.xlu0 %2629
        %2631 = vrot.lane.b32.xlu0 %v2228, 112
        %v2632 = vpop.permute.xlu0 %2631
        %2633 = vrot.lane.b32.xlu0 %v2223, 80
        %v2634 = vpop.permute.xlu0 %2633
        %2635 = vrot.lane.b32.xlu0 %v2228, 80
        %v2636 = vpop.permute.xlu0 %2635
        %v2637 = vsel %vm904, %v2630, 0
        %v2639 = vsel %vm904, %v2632, 0
        %v2641 = vsel %vm904, %v2634, 0
        %v2643 = vsel %vm904, %v2636, 0
        %2645 = vmatprep.subr.mxu0 0.0
        %2646 = vmatpush1.xpose.msra.mxu0 0.0
        %2647 = vmatprep.subr.mxu0 0.0
        %2648 = vmatpush1.xpose.msra.mxu0 0.0
        %2649 = vmatprep.subr.mxu0 0.0
        %2650 = vmatpush1.xpose.msra.mxu0 0.0
        %2651 = vmatprep.subr.mxu0 0.0
        %2652 = vmatpush1.xpose.msra.mxu0 0.0
        %2653 = vmatprep.subr.mxu0 0.0
        %2654 = vmatpush1.xpose.msra.mxu0 0.0
        %2655 = vmatprep.subr.mxu0 0.0
        %2656 = vmatpush1.xpose.msra.mxu0 0.0
        %2657 = vmatprep.subr.mxu0 0.0
        %2658 = vmatpush1.xpose.msra.mxu0 0.0
        %2659 = vmatprep.subr.mxu0 0.0
        %2660 = vmatpush1.xpose.msra.mxu0 0.0
        %2661 = vmatprep.subr.mxu0 0.0
        %2662 = vmatpush1.xpose.msra.mxu0 0.0
        %2663 = vmatprep.subr.mxu0 0.0
        %2664 = vmatpush1.xpose.msra.mxu0 0.0
        %2665 = vmatprep.subr.mxu0 0.0
        %2666 = vmatpush1.xpose.msra.mxu0 0.0
        %2667 = vmatprep.subr.mxu0 0.0
        %2668 = vmatpush1.xpose.msra.mxu0 0.0
        %2669 = vmatprep.subr.mxu0 0.0
        %2670 = vmatpush1.xpose.msra.mxu0 0.0
        %2671 = vmatprep.subr.mxu0 0.0
        %2672 = vmatpush1.xpose.msra.mxu0 0.0
        %2673 = vmatprep.subr.mxu0 0.0
        %2674 = vmatpush1.xpose.msra.mxu0 %v2643
        %2675 = vmatprep.subr.mxu0 0.0
        %2676 = vmatpush1.xpose.msra.mxu0 %v2641
        %2677 = vmatprep.subr.mxu0 0.0
        %2678 = vmatpush2.xpose.msra.mxu0 0.0
        %2679 = vmatprep.subr.mxu0 0.0
        %2680 = vmatpush2.xpose.msra.mxu0 0.0
        %2681 = vmatprep.subr.mxu0 0.0
        %2682 = vmatpush2.xpose.msra.mxu0 0.0
        %2683 = vmatprep.subr.mxu0 0.0
        %2684 = vmatpush2.xpose.msra.mxu0 0.0
        %2685 = vmatprep.subr.mxu0 0.0
        %2686 = vmatpush2.xpose.msra.mxu0 0.0
        %2687 = vmatprep.subr.mxu0 0.0
        %2688 = vmatpush2.xpose.msra.mxu0 0.0
        %2689 = vmatprep.subr.mxu0 0.0
        %2690 = vmatpush2.xpose.msra.mxu0 0.0
        %2691 = vmatprep.subr.mxu0 0.0
        %2692 = vmatpush2.xpose.msra.mxu0 0.0
        %2693 = vmatprep.subr.mxu0 0.0
        %2694 = vmatpush2.xpose.msra.mxu0 0.0
        %2695 = vmatprep.subr.mxu0 0.0
        %2696 = vmatpush2.xpose.msra.mxu0 0.0
        %2697 = vmatprep.subr.mxu0 0.0
        %2698 = vmatpush2.xpose.msra.mxu0 0.0
        %2699 = vmatprep.subr.mxu0 0.0
        %2700 = vmatpush2.xpose.msra.mxu0 0.0
        %2701 = vmatprep.subr.mxu0 0.0
        %2702 = vmatpush2.xpose.msra.mxu0 0.0
        %2703 = vmatprep.subr.mxu0 0.0
        %2704 = vmatpush2.xpose.msra.mxu0 0.0
        %2705 = vmatprep.subr.mxu0 0.0
        %2706 = vmatpush2.xpose.msra.mxu0 0.0
        %2707 = vmatprep.subr.mxu0 0.0
        %2708 = vmatpush2.xpose.msra.mxu0 0.0
        %2709 = vmatprep.mubr.f32.mxu0 0.0
        %2710 = vmatmul.mubr.f32.gmra.mxu0 %v2637
        %v2711 = vpop.f32.mrf.mxu0
        %v2712 = vadd.f32 %v743, %v2711
        %v2713 = vpop.f32.mrf.mxu0
        %2714 = vmatprep.mubr.f32.mxu0 0.0
        %2715 = vmatmul.mubr.f32.gmra.mxu0 %v2639
        %v2716 = vpop.f32.mrf.mxu0
        %v2717 = vadd.f32 %v744, %v2716
        %v2718 = vpop.f32.mrf.mxu0
        %2719 = vdwg.mxu0
        %v2720 = vsel %vm988, %v2712, -inf
        %2721 = vmax.xlane.f32.xlu0 %v2720
        %v2722 = vpop.xlane.xlu0 %2721
        %v2723 = vsel %vm988, %v2717, -inf
        %2724 = vmax.xlane.f32.xlu0 %v2723
        %v2725 = vpop.xlane.xlu0 %2724
        %v2726 = vsub.f32 %v2712, %v2722
        %v2727 = vsub.f32 %v2717, %v2725
        %v2728 = vmul.f32 %v2726, 1.442695
        %v2729 = vpow.pop %v2728
        %v2730 = vmul.f32 %v2727, 1.442695
        %v2731 = vpow.pop %v2730
        %v2732 = vsel %vm988, %v2729, 0.0
        %2733 = vadd.xlane.f32.xlu0 %v2732
        %v2734 = vpop.xlane.xlu0 %2733
        %v2735 = vsel %vm988, %v2731, 0.0
        %2736 = vadd.xlane.f32.xlu0 %v2735
        %v2737 = vpop.xlane.xlu0 %2736
        %2738 = vrot.lane.b32.xlu0 %v2223, 48
        %v2739 = vpop.permute.xlu0 %2738
        %2740 = vrot.lane.b32.xlu0 %v2228, 48
        %v2741 = vpop.permute.xlu0 %2740
        %v2745 = vsel %vm988, %v2729, 0
        %v2748 = vsel %vm988, %v2731, 0
        %2750 = vmatprep.subr.mxu0 0.0
        %2751 = vmatpush1.msra.mxu0 0.0
        %2752 = vmatprep.subr.mxu0 0.0
        %2753 = vmatpush1.msra.mxu0 0.0
        %2754 = vmatprep.subr.mxu0 0.0
        %2755 = vmatpush1.msra.mxu0 0.0
        %2756 = vmatprep.subr.mxu0 0.0
        %2757 = vmatpush1.msra.mxu0 0.0
        %2758 = vmatprep.subr.mxu0 0.0
        %2759 = vmatpush1.msra.mxu0 0.0
        %2760 = vmatprep.subr.mxu0 0.0
        %2761 = vmatpush1.msra.mxu0 0.0
        %2762 = vmatprep.subr.mxu0 0.0
        %2763 = vmatpush1.msra.mxu0 0.0
        %2764 = vmatprep.subr.mxu0 0.0
        %2765 = vmatpush1.msra.mxu0 0.0
        %2766 = vmatprep.subr.mxu0 0.0
        %2767 = vmatpush1.msra.mxu0 0.0
        %2768 = vmatprep.subr.mxu0 0.0
        %2769 = vmatpush1.msra.mxu0 0.0
        %2770 = vmatprep.subr.mxu0 0.0
        %2771 = vmatpush1.msra.mxu0 0.0
        %2772 = vmatprep.subr.mxu0 0.0
        %2773 = vmatpush1.msra.mxu0 0.0
        %2774 = vmatprep.subr.mxu0 0.0
        %2775 = vmatpush1.msra.mxu0 0.0
        %2776 = vmatprep.subr.mxu0 0.0
        %2777 = vmatpush1.msra.mxu0 0.0
        %2778 = vmatprep.subr.mxu0 0.0
        %2779 = vmatpush1.msra.mxu0 %v2741
        %2780 = vmatprep.subr.mxu0 0.0
        %2781 = vmatpush1.msra.mxu0 %v2739
        %2782 = vmatprep.subr.mxu0 0.0
        %2783 = vmatpush2.msra.mxu0 0.0
        %2784 = vmatprep.subr.mxu0 0.0
        %2785 = vmatpush2.msra.mxu0 0.0
        %2786 = vmatprep.subr.mxu0 0.0
        %2787 = vmatpush2.msra.mxu0 0.0
        %2788 = vmatprep.subr.mxu0 0.0
        %2789 = vmatpush2.msra.mxu0 0.0
        %2790 = vmatprep.subr.mxu0 0.0
        %2791 = vmatpush2.msra.mxu0 0.0
        %2792 = vmatprep.subr.mxu0 0.0
        %2793 = vmatpush2.msra.mxu0 0.0
        %2794 = vmatprep.subr.mxu0 0.0
        %2795 = vmatpush2.msra.mxu0 0.0
        %2796 = vmatprep.subr.mxu0 0.0
        %2797 = vmatpush2.msra.mxu0 0.0
        %2798 = vmatprep.subr.mxu0 0.0
        %2799 = vmatpush2.msra.mxu0 0.0
        %2800 = vmatprep.subr.mxu0 0.0
        %2801 = vmatpush2.msra.mxu0 0.0
        %2802 = vmatprep.subr.mxu0 0.0
        %2803 = vmatpush2.msra.mxu0 0.0
        %2804 = vmatprep.subr.mxu0 0.0
        %2805 = vmatpush2.msra.mxu0 0.0
        %2806 = vmatprep.subr.mxu0 0.0
        %2807 = vmatpush2.msra.mxu0 0.0
        %2808 = vmatprep.subr.mxu0 0.0
        %2809 = vmatpush2.msra.mxu0 0.0
        %2810 = vmatprep.subr.mxu0 0.0
        %2811 = vmatpush2.msra.mxu0 0.0
        %2812 = vmatprep.subr.mxu0 0.0
        %2813 = vmatpush2.msra.mxu0 0.0
        %2814 = vmatprep.mubr.f32.mxu0 0.0
        %2815 = vmatmul.mubr.f32.gmra.mxu0 %v2745
        %v2816 = vpop.f32.mrf.mxu0
        %v2817 = vadd.f32 0.0, %v2816
        %v2818 = vpop.f32.mrf.mxu0
        %2819 = vmatprep.mubr.f32.mxu0 0.0
        %2820 = vmatmul.mubr.f32.gmra.mxu0 %v2748
        %v2821 = vpop.f32.mrf.mxu0
        %v2822 = vadd.f32 0.0, %v2821
        %v2823 = vpop.f32.mrf.mxu0
        %2824 = vdwg.mxu0
        %v2825 = vrcp.pop %v2734
        %v2826 = vrcp.pop %v2737
        %v2827 = vmul.f32 %v2817, %v2825
        %v2828 = vmul.f32 %v2822, %v2826
        %2829 = vrot.lane.b32.xlu0 %v2223, 104
        %v2830 = vpop.permute.xlu0 %2829
        %2831 = vrot.lane.b32.xlu0 %v2228, 104
        %v2832 = vpop.permute.xlu0 %2831
        %2833 = vrot.lane.b32.xlu0 %v2223, 72
        %v2834 = vpop.permute.xlu0 %2833
        %2835 = vrot.lane.b32.xlu0 %v2228, 72
        %v2836 = vpop.permute.xlu0 %2835
        %v2837 = vsel %vm904, %v2830, 0
        %v2839 = vsel %vm904, %v2832, 0
        %v2841 = vsel %vm904, %v2834, 0
        %v2843 = vsel %vm904, %v2836, 0
        %2845 = vmatprep.subr.mxu0 0.0
        %2846 = vmatpush1.xpose.msra.mxu0 0.0
        %2847 = vmatprep.subr.mxu0 0.0
        %2848 = vmatpush1.xpose.msra.mxu0 0.0
        %2849 = vmatprep.subr.mxu0 0.0
        %2850 = vmatpush1.xpose.msra.mxu0 0.0
        %2851 = vmatprep.subr.mxu0 0.0
        %2852 = vmatpush1.xpose.msra.mxu0 0.0
        %2853 = vmatprep.subr.mxu0 0.0
        %2854 = vmatpush1.xpose.msra.mxu0 0.0
        %2855 = vmatprep.subr.mxu0 0.0
        %2856 = vmatpush1.xpose.msra.mxu0 0.0
        %2857 = vmatprep.subr.mxu0 0.0
        %2858 = vmatpush1.xpose.msra.mxu0 0.0
        %2859 = vmatprep.subr.mxu0 0.0
        %2860 = vmatpush1.xpose.msra.mxu0 0.0
        %2861 = vmatprep.subr.mxu0 0.0
        %2862 = vmatpush1.xpose.msra.mxu0 0.0
        %2863 = vmatprep.subr.mxu0 0.0
        %2864 = vmatpush1.xpose.msra.mxu0 0.0
        %2865 = vmatprep.subr.mxu0 0.0
        %2866 = vmatpush1.xpose.msra.mxu0 0.0
        %2867 = vmatprep.subr.mxu0 0.0
        %2868 = vmatpush1.xpose.msra.mxu0 0.0
        %2869 = vmatprep.subr.mxu0 0.0
        %2870 = vmatpush1.xpose.msra.mxu0 0.0
        %2871 = vmatprep.subr.mxu0 0.0
        %2872 = vmatpush1.xpose.msra.mxu0 0.0
        %2873 = vmatprep.subr.mxu0 0.0
        %2874 = vmatpush1.xpose.msra.mxu0 %v2843
        %2875 = vmatprep.subr.mxu0 0.0
        %2876 = vmatpush1.xpose.msra.mxu0 %v2841
        %2877 = vmatprep.subr.mxu0 0.0
        %2878 = vmatpush2.xpose.msra.mxu0 0.0
        %2879 = vmatprep.subr.mxu0 0.0
        %2880 = vmatpush2.xpose.msra.mxu0 0.0
        %2881 = vmatprep.subr.mxu0 0.0
        %2882 = vmatpush2.xpose.msra.mxu0 0.0
        %2883 = vmatprep.subr.mxu0 0.0
        %2884 = vmatpush2.xpose.msra.mxu0 0.0
        %2885 = vmatprep.subr.mxu0 0.0
        %2886 = vmatpush2.xpose.msra.mxu0 0.0
        %2887 = vmatprep.subr.mxu0 0.0
        %2888 = vmatpush2.xpose.msra.mxu0 0.0
        %2889 = vmatprep.subr.mxu0 0.0
        %2890 = vmatpush2.xpose.msra.mxu0 0.0
        %2891 = vmatprep.subr.mxu0 0.0
        %2892 = vmatpush2.xpose.msra.mxu0 0.0
        %2893 = vmatprep.subr.mxu0 0.0
        %2894 = vmatpush2.xpose.msra.mxu0 0.0
        %2895 = vmatprep.subr.mxu0 0.0
        %2896 = vmatpush2.xpose.msra.mxu0 0.0
        %2897 = vmatprep.subr.mxu0 0.0
        %2898 = vmatpush2.xpose.msra.mxu0 0.0
        %2899 = vmatprep.subr.mxu0 0.0
        %2900 = vmatpush2.xpose.msra.mxu0 0.0
        %2901 = vmatprep.subr.mxu0 0.0
        %2902 = vmatpush2.xpose.msra.mxu0 0.0
        %2903 = vmatprep.subr.mxu0 0.0
        %2904 = vmatpush2.xpose.msra.mxu0 0.0
        %2905 = vmatprep.subr.mxu0 0.0
        %2906 = vmatpush2.xpose.msra.mxu0 0.0
        %2907 = vmatprep.subr.mxu0 0.0
        %2908 = vmatpush2.xpose.msra.mxu0 0.0
        %2909 = vmatprep.mubr.f32.mxu0 0.0
        %2910 = vmatmul.mubr.f32.gmra.mxu0 %v2837
        %v2911 = vpop.f32.mrf.mxu0
        %v2912 = vadd.f32 %v743, %v2911
        %v2913 = vpop.f32.mrf.mxu0
        %2914 = vmatprep.mubr.f32.mxu0 0.0
        %2915 = vmatmul.mubr.f32.gmra.mxu0 %v2839
        %v2916 = vpop.f32.mrf.mxu0
        %v2917 = vadd.f32 %v744, %v2916
        %v2918 = vpop.f32.mrf.mxu0
        %2919 = vdwg.mxu0
        %v2920 = vsel %vm988, %v2912, -inf
        %2921 = vmax.xlane.f32.xlu0 %v2920
        %v2922 = vpop.xlane.xlu0 %2921
        %v2923 = vsel %vm988, %v2917, -inf
        %2924 = vmax.xlane.f32.xlu0 %v2923
        %v2925 = vpop.xlane.xlu0 %2924
        %v2926 = vsub.f32 %v2912, %v2922
        %v2927 = vsub.f32 %v2917, %v2925
        %v2928 = vmul.f32 %v2926, 1.442695
        %v2929 = vpow.pop %v2928
        %v2930 = vmul.f32 %v2927, 1.442695
        %v2931 = vpow.pop %v2930
        %v2932 = vsel %vm988, %v2929, 0.0
        %2933 = vadd.xlane.f32.xlu0 %v2932
        %v2934 = vpop.xlane.xlu0 %2933
        %v2935 = vsel %vm988, %v2931, 0.0
        %2936 = vadd.xlane.f32.xlu0 %v2935
        %v2937 = vpop.xlane.xlu0 %2936
        %2938 = vrot.lane.b32.xlu0 %v2223, 40
        %v2939 = vpop.permute.xlu0 %2938
        %2940 = vrot.lane.b32.xlu0 %v2228, 40
        %v2941 = vpop.permute.xlu0 %2940
        %v2945 = vsel %vm988, %v2929, 0
        %v2948 = vsel %vm988, %v2931, 0
        %2950 = vmatprep.subr.mxu0 0.0
        %2951 = vmatpush1.msra.mxu0 0.0
        %2952 = vmatprep.subr.mxu0 0.0
        %2953 = vmatpush1.msra.mxu0 0.0
        %2954 = vmatprep.subr.mxu0 0.0
        %2955 = vmatpush1.msra.mxu0 0.0
        %2956 = vmatprep.subr.mxu0 0.0
        %2957 = vmatpush1.msra.mxu0 0.0
        %2958 = vmatprep.subr.mxu0 0.0
        %2959 = vmatpush1.msra.mxu0 0.0
        %2960 = vmatprep.subr.mxu0 0.0
        %2961 = vmatpush1.msra.mxu0 0.0
        %2962 = vmatprep.subr.mxu0 0.0
        %2963 = vmatpush1.msra.mxu0 0.0
        %2964 = vmatprep.subr.mxu0 0.0
        %2965 = vmatpush1.msra.mxu0 0.0
        %2966 = vmatprep.subr.mxu0 0.0
        %2967 = vmatpush1.msra.mxu0 0.0
        %2968 = vmatprep.subr.mxu0 0.0
        %2969 = vmatpush1.msra.mxu0 0.0
        %2970 = vmatprep.subr.mxu0 0.0
        %2971 = vmatpush1.msra.mxu0 0.0
        %2972 = vmatprep.subr.mxu0 0.0
        %2973 = vmatpush1.msra.mxu0 0.0
        %2974 = vmatprep.subr.mxu0 0.0
        %2975 = vmatpush1.msra.mxu0 0.0
        %2976 = vmatprep.subr.mxu0 0.0
        %2977 = vmatpush1.msra.mxu0 0.0
        %2978 = vmatprep.subr.mxu0 0.0
        %2979 = vmatpush1.msra.mxu0 %v2941
        %2980 = vmatprep.subr.mxu0 0.0
        %2981 = vmatpush1.msra.mxu0 %v2939
        %2982 = vmatprep.subr.mxu0 0.0
        %2983 = vmatpush2.msra.mxu0 0.0
        %2984 = vmatprep.subr.mxu0 0.0
        %2985 = vmatpush2.msra.mxu0 0.0
        %2986 = vmatprep.subr.mxu0 0.0
        %2987 = vmatpush2.msra.mxu0 0.0
        %2988 = vmatprep.subr.mxu0 0.0
        %2989 = vmatpush2.msra.mxu0 0.0
        %2990 = vmatprep.subr.mxu0 0.0
        %2991 = vmatpush2.msra.mxu0 0.0
        %2992 = vmatprep.subr.mxu0 0.0
        %2993 = vmatpush2.msra.mxu0 0.0
        %2994 = vmatprep.subr.mxu0 0.0
        %2995 = vmatpush2.msra.mxu0 0.0
        %2996 = vmatprep.subr.mxu0 0.0
        %2997 = vmatpush2.msra.mxu0 0.0
        %2998 = vmatprep.subr.mxu0 0.0
        %2999 = vmatpush2.msra.mxu0 0.0
        %3000 = vmatprep.subr.mxu0 0.0
        %3001 = vmatpush2.msra.mxu0 0.0
        %3002 = vmatprep.subr.mxu0 0.0
        %3003 = vmatpush2.msra.mxu0 0.0
        %3004 = vmatprep.subr.mxu0 0.0
        %3005 = vmatpush2.msra.mxu0 0.0
        %3006 = vmatprep.subr.mxu0 0.0
        %3007 = vmatpush2.msra.mxu0 0.0
        %3008 = vmatprep.subr.mxu0 0.0
        %3009 = vmatpush2.msra.mxu0 0.0
        %3010 = vmatprep.subr.mxu0 0.0
        %3011 = vmatpush2.msra.mxu0 0.0
        %3012 = vmatprep.subr.mxu0 0.0
        %3013 = vmatpush2.msra.mxu0 0.0
        %3014 = vmatprep.mubr.f32.mxu0 0.0
        %3015 = vmatmul.mubr.f32.gmra.mxu0 %v2945
        %v3016 = vpop.f32.mrf.mxu0
        %v3017 = vadd.f32 0.0, %v3016
        %v3018 = vpop.f32.mrf.mxu0
        %3019 = vmatprep.mubr.f32.mxu0 0.0
        %3020 = vmatmul.mubr.f32.gmra.mxu0 %v2948
        %v3021 = vpop.f32.mrf.mxu0
        %v3022 = vadd.f32 0.0, %v3021
        %v3023 = vpop.f32.mrf.mxu0
        %3024 = vdwg.mxu0
        %v3025 = vrcp.pop %v2934
        %v3026 = vrcp.pop %v2937
        %v3027 = vmul.f32 %v3017, %v3025
        %v3028 = vmul.f32 %v3022, %v3026
        %3031 = vrot.lane.b32.xlu0 %v2627, 8
        %v3032 = vpop.permute.xlu0 %3031
        %3033 = vrot.lane.b32.xlu0 %v2628, 8
        %v3034 = vpop.permute.xlu0 %3033
        %3039 = vrot.lane.b32.xlu0 %v2827, 16
        %v3040 = vpop.permute.xlu0 %3039
        %3041 = vrot.lane.b32.xlu0 %v2828, 16
        %v3042 = vpop.permute.xlu0 %3041
        %3047 = vrot.lane.b32.xlu0 %v3027, 24
        %v3048 = vpop.permute.xlu0 %3047
        %3049 = vrot.lane.b32.xlu0 %v3028, 24
        %v3050 = vpop.permute.xlu0 %3049
        %v3053 = vsel %vm904, %v2427, %v3032
        %v3054 = vsel %vm904, %v2428, %v3034
        %v3055 = vsel %vm988, %v3053, %v3040
        %v3056 = vsel %vm988, %v3054, %v3042
        %v3057 = vsel %vm1726, %v3055, %v3048
        %v3058 = vsel %vm1726, %v3056, %v3050
        %s3059 = scalar_lea.vmem %s10, 32
        %v3060 = vld [vmem:[%s3059] sm:$0xff]
        %v3061 = vld [vmem:[%s3059 + $0x8] sm:$0xff]
        %v3062 = vld [vmem:[%s3059 + $0x10] sm:$0xff]
        %v3063 = vld [vmem:[%s3059 + $0x18] sm:$0xff]
        %v3065 = vsel %vm747, %v3057, 0
        %v3068 = vsel %vm747, %v3058, 0
        %3070 = vmatprep.subr.mxu0 0.0
        %3071 = vmatpush1.msra.mxu0 0.0
        %3072 = vmatprep.subr.mxu0 0.0
        %3073 = vmatpush1.msra.mxu0 0.0
        %3074 = vmatprep.subr.mxu0 0.0
        %3075 = vmatpush1.msra.mxu0 0.0
        %3076 = vmatprep.subr.mxu0 0.0
        %3077 = vmatpush1.msra.mxu0 0.0
        %3078 = vmatprep.subr.mxu0 0.0
        %3079 = vmatpush1.msra.mxu0 0.0
        %3080 = vmatprep.subr.mxu0 0.0
        %3081 = vmatpush1.msra.mxu0 0.0
        %3082 = vmatprep.subr.mxu0 0.0
        %3083 = vmatpush1.msra.mxu0 0.0
        %3084 = vmatprep.subr.mxu0 0.0
        %3085 = vmatpush1.msra.mxu0 0.0
        %3086 = vmatprep.subr.mxu0 0.0
        %3087 = vmatpush1.msra.mxu0 0.0
        %3088 = vmatprep.subr.mxu0 0.0
        %3089 = vmatpush1.msra.mxu0 0.0
        %3090 = vmatprep.subr.mxu0 0.0
        %3091 = vmatpush1.msra.mxu0 0.0
        %3092 = vmatprep.subr.mxu0 0.0
        %3093 = vmatpush1.msra.mxu0 0.0
        %3094 = vmatprep.subr.mxu0 0.0
        %3095 = vmatpush1.msra.mxu0 %v3063
        %3096 = vmatprep.subr.mxu0 0.0
        %3097 = vmatpush1.msra.mxu0 %v3062
        %3098 = vmatprep.subr.mxu0 0.0
        %3099 = vmatpush1.msra.mxu0 %v3061
        %3100 = vmatprep.subr.mxu0 0.0
        %3101 = vmatpush1.msra.mxu0 %v3060
        %3102 = vmatprep.subr.mxu0 0.0
        %3103 = vmatpush2.msra.mxu0 0.0
        %3104 = vmatprep.subr.mxu0 0.0
        %3105 = vmatpush2.msra.mxu0 0.0
        %3106 = vmatprep.subr.mxu0 0.0
        %3107 = vmatpush2.msra.mxu0 0.0
        %3108 = vmatprep.subr.mxu0 0.0
        %3109 = vmatpush2.msra.mxu0 0.0
        %3110 = vmatprep.subr.mxu0 0.0
        %3111 = vmatpush2.msra.mxu0 0.0
        %3112 = vmatprep.subr.mxu0 0.0
        %3113 = vmatpush2.msra.mxu0 0.0
        %3114 = vmatprep.subr.mxu0 0.0
        %3115 = vmatpush2.msra.mxu0 0.0
        %3116 = vmatprep.subr.mxu0 0.0
        %3117 = vmatpush2.msra.mxu0 0.0
        %3118 = vmatprep.subr.mxu0 0.0
        %3119 = vmatpush2.msra.mxu0 0.0
        %3120 = vmatprep.subr.mxu0 0.0
        %3121 = vmatpush2.msra.mxu0 0.0
        %3122 = vmatprep.subr.mxu0 0.0
        %3123 = vmatpush2.msra.mxu0 0.0
        %3124 = vmatprep.subr.mxu0 0.0
        %3125 = vmatpush2.msra.mxu0 0.0
        %3126 = vmatprep.subr.mxu0 0.0
        %3127 = vmatpush2.msra.mxu0 0.0
        %3128 = vmatprep.subr.mxu0 0.0
        %3129 = vmatpush2.msra.mxu0 0.0
        %3130 = vmatprep.subr.mxu0 0.0
        %3131 = vmatpush2.msra.mxu0 0.0
        %3132 = vmatprep.subr.mxu0 0.0
        %3133 = vmatpush2.msra.mxu0 0.0
        %3134 = vmatprep.mubr.f32.mxu0 0.0
        %3135 = vmatmul.mubr.f32.gmra.mxu0 %v3065
        %v3136 = vpop.f32.mrf.mxu0
        %v3137 = vadd.f32 0.0, %v3136
        %v3138 = vpop.f32.mrf.mxu0
        %3139 = vmatprep.mubr.f32.mxu0 0.0
        %3140 = vmatmul.mubr.f32.gmra.mxu0 %v3068
        %v3141 = vpop.f32.mrf.mxu0
        %v3142 = vadd.f32 0.0, %v3141
        %v3143 = vpop.f32.mrf.mxu0
        %3144 = vdwg.mxu0
        %v3145 = vadd.f32 %v2075, %v3137
        %v3146 = vadd.f32 %v2076, %v3142
        %s3147 = scalar_lea.vmem %s11, 1
        %v3148 = vld [vmem:[%s3147] sm:$0x1]
        %v3150 = vlaneseq
        %v3151 = vshrl.u32 %v3150, 7
        %v3152 = vsub.s32 0, %v3151
        %v3153 = vrot.slane %v3148, %v3152
        %v3155 = vadd.f32 %v3145, %v3153
        %v3156 = vadd.f32 %v3146, %v3153
        %s3157 = scalar_lea.vmem %s6, 1
        %v3158 = vld [vmem:[%s3157] sm:$0x1]
        %s3159 = scalar_lea.vmem %s7, 1
        %v3160 = vld [vmem:[%s3159] sm:$0x1]
        %v3161 = vsel %vm747, %v3155, 0.0
        %3162 = vadd.xlane.f32.xlu0 %v3161
        %v3163 = vpop.xlane.xlu0 %3162
        %v3164 = vsel %vm747, %v3156, 0.0
        %3165 = vadd.xlane.f32.xlu0 %v3164
        %v3166 = vpop.xlane.xlu0 %3165
        %v3167 = vmul.f32 %v3163, %v754
        %v3168 = vmul.f32 %v3166, %v754
        %v3169 = vsub.f32 %v3155, %v3167
        %v3170 = vsub.f32 %v3156, %v3168
        %v3171 = vmul.f32 %v3169, %v3169
        %v3172 = vmul.f32 %v3170, %v3170
        %v3173 = vsel %vm747, %v3171, 0.0
        %3174 = vadd.xlane.f32.xlu0 %v3173
        %v3175 = vpop.xlane.xlu0 %3174
        %v3176 = vsel %vm747, %v3172, 0.0
        %3177 = vadd.xlane.f32.xlu0 %v3176
        %v3178 = vpop.xlane.xlu0 %3177
        %v3179 = vmul.f32 %v3175, %v767
        %v3180 = vmul.f32 %v3178, %v767
        %v3181 = vrsqrt.pop %v3179
        %v3182 = vmul.f32 %v3179, %v3181
        %vm3183 = vcmp.eq.f32.partialorder %v3179, inf
        %v3184 = vsel %vm3183, %v3179, %v3182
        %vm3185 = vcmp.eq.f32.partialorder %v3179, 0.0
        %v3186 = vand.u32 %v3179, 2147483648
        %v3187 = vsel %vm3185, %v3186, %v3184
        %v3188 = vrsqrt.pop %v3180
        %v3189 = vmul.f32 %v3180, %v3188
        %vm3190 = vcmp.eq.f32.partialorder %v3180, inf
        %v3191 = vsel %vm3190, %v3180, %v3189
        %vm3192 = vcmp.eq.f32.partialorder %v3180, 0.0
        %v3193 = vand.u32 %v3180, 2147483648
        %v3194 = vsel %vm3192, %v3193, %v3191
        %v3195 = vadd.f32 %v3187, 1e-06
        %v3196 = vadd.f32 %v3194, 1e-06
        %v3197 = vrcp.pop %v3195
        %v3198 = vrcp.pop %v3196
        %v3199 = vmul.f32 %v3169, %v3197
        %v3200 = vmul.f32 %v3170, %v3198
        %v3202 = vlaneseq
        %v3203 = vshrl.u32 %v3202, 7
        %v3204 = vsub.s32 0, %v3203
        %v3205 = vrot.slane %v3158, %v3204
        %v3207 = vmul.f32 %v3199, %v3205
        %v3208 = vmul.f32 %v3200, %v3205
        %v3210 = vlaneseq
        %v3211 = vshrl.u32 %v3210, 7
        %v3212 = vsub.s32 0, %v3211
        %v3213 = vrot.slane %v3160, %v3212
        %v3215 = vadd.f32 %v3207, %v3213
        %v3216 = vadd.f32 %v3208, %v3213
        %s3217 = scalar_lea.vmem %s12, 32
        %v3218 = vld [vmem:[%s3217] sm:$0xff]
        %v3219 = vld [vmem:[%s3217 + $0x8] sm:$0xff]
        %v3220 = vld [vmem:[%s3217 + $0x10] sm:$0xff]
        %v3221 = vld [vmem:[%s3217 + $0x18] sm:$0xff]
        %s3222 = scalar_lea.vmem %s13, 1
        %v3223 = vld [vmem:[%s3222] sm:$0x1]
        %v3225 = vlaneseq
        %v3226 = vshrl.u32 %v3225, 7
        %v3227 = vsub.s32 0, %v3226
        %v3228 = vrot.slane %v3223, %v3227
        %v3231 = vsel %vm747, %v3215, 0
        %v3234 = vsel %vm747, %v3216, 0
        %3236 = vmatprep.subr.mxu0 0.0
        %3237 = vmatpush1.msra.mxu0 0.0
        %3238 = vmatprep.subr.mxu0 0.0
        %3239 = vmatpush1.msra.mxu0 0.0
        %3240 = vmatprep.subr.mxu0 0.0
        %3241 = vmatpush1.msra.mxu0 0.0
        %3242 = vmatprep.subr.mxu0 0.0
        %3243 = vmatpush1.msra.mxu0 0.0
        %3244 = vmatprep.subr.mxu0 0.0
        %3245 = vmatpush1.msra.mxu0 0.0
        %3246 = vmatprep.subr.mxu0 0.0
        %3247 = vmatpush1.msra.mxu0 0.0
        %3248 = vmatprep.subr.mxu0 0.0
        %3249 = vmatpush1.msra.mxu0 0.0
        %3250 = vmatprep.subr.mxu0 0.0
        %3251 = vmatpush1.msra.mxu0 0.0
        %3252 = vmatprep.subr.mxu0 0.0
        %3253 = vmatpush1.msra.mxu0 0.0
        %3254 = vmatprep.subr.mxu0 0.0
        %3255 = vmatpush1.msra.mxu0 0.0
        %3256 = vmatprep.subr.mxu0 0.0
        %3257 = vmatpush1.msra.mxu0 0.0
        %3258 = vmatprep.subr.mxu0 0.0
        %3259 = vmatpush1.msra.mxu0 0.0
        %3260 = vmatprep.subr.mxu0 0.0
        %3261 = vmatpush1.msra.mxu0 %v3221
        %3262 = vmatprep.subr.mxu0 0.0
        %3263 = vmatpush1.msra.mxu0 %v3220
        %3264 = vmatprep.subr.mxu0 0.0
        %3265 = vmatpush1.msra.mxu0 %v3219
        %3266 = vmatprep.subr.mxu0 0.0
        %3267 = vmatpush1.msra.mxu0 %v3218
        %3268 = vmatprep.subr.mxu0 0.0
        %3269 = vmatpush2.msra.mxu0 0.0
        %3270 = vmatprep.subr.mxu0 0.0
        %3271 = vmatpush2.msra.mxu0 0.0
        %3272 = vmatprep.subr.mxu0 0.0
        %3273 = vmatpush2.msra.mxu0 0.0
        %3274 = vmatprep.subr.mxu0 0.0
        %3275 = vmatpush2.msra.mxu0 0.0
        %3276 = vmatprep.subr.mxu0 0.0
        %3277 = vmatpush2.msra.mxu0 0.0
        %3278 = vmatprep.subr.mxu0 0.0
        %3279 = vmatpush2.msra.mxu0 0.0
        %3280 = vmatprep.subr.mxu0 0.0
        %3281 = vmatpush2.msra.mxu0 0.0
        %3282 = vmatprep.subr.mxu0 0.0
        %3283 = vmatpush2.msra.mxu0 0.0
        %3284 = vmatprep.subr.mxu0 0.0
        %3285 = vmatpush2.msra.mxu0 0.0
        %3286 = vmatprep.subr.mxu0 0.0
        %3287 = vmatpush2.msra.mxu0 0.0
        %3288 = vmatprep.subr.mxu0 0.0
        %3289 = vmatpush2.msra.mxu0 0.0
        %3290 = vmatprep.subr.mxu0 0.0
        %3291 = vmatpush2.msra.mxu0 0.0
        %3292 = vmatprep.subr.mxu0 0.0
        %3293 = vmatpush2.msra.mxu0 0.0
        %3294 = vmatprep.subr.mxu0 0.0
        %3295 = vmatpush2.msra.mxu0 0.0
        %3296 = vmatprep.subr.mxu0 0.0
        %3297 = vmatpush2.msra.mxu0 0.0
        %3298 = vmatprep.subr.mxu0 0.0
        %3299 = vmatpush2.msra.mxu0 0.0
        %3300 = vmatprep.mubr.f32.mxu0 0.0
        %3301 = vmatmul.mubr.f32.gmra.mxu0 %v3231
        %v3302 = vpop.f32.mrf.mxu0
        %v3303 = vadd.f32 %v3228, %v3302
        %v3304 = vpop.f32.mrf.mxu0
        %3305 = vmatprep.mubr.f32.mxu0 0.0
        %3306 = vmatmul.mubr.f32.gmra.mxu0 %v3234
        %v3307 = vpop.f32.mrf.mxu0
        %v3308 = vadd.f32 %v3228, %v3307
        %v3309 = vpop.f32.mrf.mxu0
        %3310 = vdwg.mxu0
        %v3311 = vmax.f32 %v3303, 0.0
        %v3312 = vmax.f32 %v3308, 0.0
        %s3313 = scalar_lea.vmem %s14, 64
        %v3314 = vld [vmem:[%s3313] sm:$0xff]
        %v3315 = vld [vmem:[%s3313 + $0x8] sm:$0xff]
        %v3316 = vld [vmem:[%s3313 + $0x10] sm:$0xff]
        %v3317 = vld [vmem:[%s3313 + $0x18] sm:$0xff]
        %v3318 = vld [vmem:[%s3313 + $0x20] sm:$0xff]
        %v3319 = vld [vmem:[%s3313 + $0x28] sm:$0xff]
        %v3320 = vld [vmem:[%s3313 + $0x30] sm:$0xff]
        %v3321 = vld [vmem:[%s3313 + $0x38] sm:$0xff]
        %v3323 = vsel %vm655, %v3311, 0
        %v3326 = vsel %vm655, %v3312, 0
        %3328 = vmatprep.subr.mxu0 0.0
        %3329 = vmatpush1.msra.mxu0 0.0
        %3330 = vmatprep.subr.mxu0 0.0
        %3331 = vmatpush1.msra.mxu0 0.0
        %3332 = vmatprep.subr.mxu0 0.0
        %3333 = vmatpush1.msra.mxu0 0.0
        %3334 = vmatprep.subr.mxu0 0.0
        %3335 = vmatpush1.msra.mxu0 0.0
        %3336 = vmatprep.subr.mxu0 0.0
        %3337 = vmatpush1.msra.mxu0 0.0
        %3338 = vmatprep.subr.mxu0 0.0
        %3339 = vmatpush1.msra.mxu0 0.0
        %3340 = vmatprep.subr.mxu0 0.0
        %3341 = vmatpush1.msra.mxu0 0.0
        %3342 = vmatprep.subr.mxu0 0.0
        %3343 = vmatpush1.msra.mxu0 0.0
        %3344 = vmatprep.subr.mxu0 0.0
        %3345 = vmatpush1.msra.mxu0 %v3321
        %3346 = vmatprep.subr.mxu0 0.0
        %3347 = vmatpush1.msra.mxu0 %v3320
        %3348 = vmatprep.subr.mxu0 0.0
        %3349 = vmatpush1.msra.mxu0 %v3319
        %3350 = vmatprep.subr.mxu0 0.0
        %3351 = vmatpush1.msra.mxu0 %v3318
        %3352 = vmatprep.subr.mxu0 0.0
        %3353 = vmatpush1.msra.mxu0 %v3317
        %3354 = vmatprep.subr.mxu0 0.0
        %3355 = vmatpush1.msra.mxu0 %v3316
        %3356 = vmatprep.subr.mxu0 0.0
        %3357 = vmatpush1.msra.mxu0 %v3315
        %3358 = vmatprep.subr.mxu0 0.0
        %3359 = vmatpush1.msra.mxu0 %v3314
        %3360 = vmatprep.subr.mxu0 0.0
        %3361 = vmatpush2.msra.mxu0 0.0
        %3362 = vmatprep.subr.mxu0 0.0
        %3363 = vmatpush2.msra.mxu0 0.0
        %3364 = vmatprep.subr.mxu0 0.0
        %3365 = vmatpush2.msra.mxu0 0.0
        %3366 = vmatprep.subr.mxu0 0.0
        %3367 = vmatpush2.msra.mxu0 0.0
        %3368 = vmatprep.subr.mxu0 0.0
        %3369 = vmatpush2.msra.mxu0 0.0
        %3370 = vmatprep.subr.mxu0 0.0
        %3371 = vmatpush2.msra.mxu0 0.0
        %3372 = vmatprep.subr.mxu0 0.0
        %3373 = vmatpush2.msra.mxu0 0.0
        %3374 = vmatprep.subr.mxu0 0.0
        %3375 = vmatpush2.msra.mxu0 0.0
        %3376 = vmatprep.subr.mxu0 0.0
        %3377 = vmatpush2.msra.mxu0 0.0
        %3378 = vmatprep.subr.mxu0 0.0
        %3379 = vmatpush2.msra.mxu0 0.0
        %3380 = vmatprep.subr.mxu0 0.0
        %3381 = vmatpush2.msra.mxu0 0.0
        %3382 = vmatprep.subr.mxu0 0.0
        %3383 = vmatpush2.msra.mxu0 0.0
        %3384 = vmatprep.subr.mxu0 0.0
        %3385 = vmatpush2.msra.mxu0 0.0
        %3386 = vmatprep.subr.mxu0 0.0
        %3387 = vmatpush2.msra.mxu0 0.0
        %3388 = vmatprep.subr.mxu0 0.0
        %3389 = vmatpush2.msra.mxu0 0.0
        %3390 = vmatprep.subr.mxu0 0.0
        %3391 = vmatpush2.msra.mxu0 0.0
        %3392 = vmatprep.mubr.f32.mxu0 0.0
        %3393 = vmatmul.mubr.f32.gmra.mxu0 %v3323
        %v3394 = vpop.f32.mrf.mxu0
        %v3395 = vadd.f32 0.0, %v3394
        %v3396 = vpop.f32.mrf.mxu0
        %3397 = vmatprep.mubr.f32.mxu0 0.0
        %3398 = vmatmul.mubr.f32.gmra.mxu0 %v3326
        %v3399 = vpop.f32.mrf.mxu0
        %v3400 = vadd.f32 0.0, %v3399
        %v3401 = vpop.f32.mrf.mxu0
        %3402 = vdwg.mxu0
        %v3403 = vadd.f32 %v3155, %v3395
        %v3404 = vadd.f32 %v3156, %v3400
        %s3405 = scalar_lea.vmem %s15, 1
        %v3406 = vld [vmem:[%s3405] sm:$0x1]
        %v3408 = vlaneseq
        %v3409 = vshrl.u32 %v3408, 7
        %v3410 = vsub.s32 0, %v3409
        %v3411 = vrot.slane %v3406, %v3410
        %v3413 = vadd.f32 %v3403, %v3411
        %v3414 = vadd.f32 %v3404, %v3411
        %v3415 = vld [vmem:[%s16] sm:$0x1]
        %v3416 = vld [vmem:[%s17] sm:$0x1]
        %v3417 = vsel %vm747, %v3413, 0.0
        %3418 = vadd.xlane.f32.xlu0 %v3417
        %v3419 = vpop.xlane.xlu0 %3418
        %v3420 = vsel %vm747, %v3414, 0.0
        %3421 = vadd.xlane.f32.xlu0 %v3420
        %v3422 = vpop.xlane.xlu0 %3421
        %v3423 = vmul.f32 %v3419, %v754
        %v3424 = vmul.f32 %v3422, %v754
        %v3425 = vsub.f32 %v3413, %v3423
        %v3426 = vsub.f32 %v3414, %v3424
        %v3427 = vmul.f32 %v3425, %v3425
        %v3428 = vmul.f32 %v3426, %v3426
        %v3429 = vsel %vm747, %v3427, 0.0
        %3430 = vadd.xlane.f32.xlu0 %v3429
        %v3431 = vpop.xlane.xlu0 %3430
        %v3432 = vsel %vm747, %v3428, 0.0
        %3433 = vadd.xlane.f32.xlu0 %v3432
        %v3434 = vpop.xlane.xlu0 %3433
        %v3435 = vmul.f32 %v3431, %v767
        %v3436 = vmul.f32 %v3434, %v767
        %v3437 = vrsqrt.pop %v3435
        %v3438 = vmul.f32 %v3435, %v3437
        %vm3439 = vcmp.eq.f32.partialorder %v3435, inf
        %v3440 = vsel %vm3439, %v3435, %v3438
        %vm3441 = vcmp.eq.f32.partialorder %v3435, 0.0
        %v3442 = vand.u32 %v3435, 2147483648
        %v3443 = vsel %vm3441, %v3442, %v3440
        %v3444 = vrsqrt.pop %v3436
        %v3445 = vmul.f32 %v3436, %v3444
        %vm3446 = vcmp.eq.f32.partialorder %v3436, inf
        %v3447 = vsel %vm3446, %v3436, %v3445
        %vm3448 = vcmp.eq.f32.partialorder %v3436, 0.0
        %v3449 = vand.u32 %v3436, 2147483648
        %v3450 = vsel %vm3448, %v3449, %v3447
        %v3451 = vadd.f32 %v3443, 1e-06
        %v3452 = vadd.f32 %v3450, 1e-06
        %v3453 = vrcp.pop %v3451
        %v3454 = vrcp.pop %v3452
        %v3455 = vmul.f32 %v3425, %v3453
        %v3456 = vmul.f32 %v3426, %v3454
        %v3458 = vlaneseq
        %v3459 = vshrl.u32 %v3458, 7
        %v3460 = vsub.s32 0, %v3459
        %v3461 = vrot.slane %v3415, %v3460
        %v3463 = vmul.f32 %v3455, %v3461
        %v3464 = vmul.f32 %v3456, %v3461
        %v3466 = vlaneseq
        %v3467 = vshrl.u32 %v3466, 7
        %v3468 = vsub.s32 0, %v3467
        %v3469 = vrot.slane %v3416, %v3468
        %v3471 = vadd.f32 %v3463, %v3469
        %v3472 = vadd.f32 %v3464, %v3469
        %v3473 = vld [vmem:[%s18] sm:$0xff]
        %v3474 = vld [vmem:[%s18 + $0x8] sm:$0xff]
        %v3475 = vld [vmem:[%s18 + $0x10] sm:$0xff]
        %v3476 = vld [vmem:[%s18 + $0x18] sm:$0xff]
        %v3477 = vld [vmem:[%s19] sm:$0x1]
        %v3479 = vlaneseq
        %v3480 = vshrl.u32 %v3479, 7
        %v3481 = vsub.s32 0, %v3480
        %v3482 = vrot.slane %v3477, %v3481
        %v3485 = vsel %vm747, %v3471, 0
        %v3488 = vsel %vm747, %v3472, 0
        %3490 = vmatprep.subr.mxu0 0.0
        %3491 = vmatpush1.msra.mxu0 0.0
        %3492 = vmatprep.subr.mxu0 0.0
        %3493 = vmatpush1.msra.mxu0 0.0
        %3494 = vmatprep.subr.mxu0 0.0
        %3495 = vmatpush1.msra.mxu0 0.0
        %3496 = vmatprep.subr.mxu0 0.0
        %3497 = vmatpush1.msra.mxu0 0.0
        %3498 = vmatprep.subr.mxu0 0.0
        %3499 = vmatpush1.msra.mxu0 0.0
        %3500 = vmatprep.subr.mxu0 0.0
        %3501 = vmatpush1.msra.mxu0 0.0
        %3502 = vmatprep.subr.mxu0 0.0
        %3503 = vmatpush1.msra.mxu0 0.0
        %3504 = vmatprep.subr.mxu0 0.0
        %3505 = vmatpush1.msra.mxu0 0.0
        %3506 = vmatprep.subr.mxu0 0.0
        %3507 = vmatpush1.msra.mxu0 0.0
        %3508 = vmatprep.subr.mxu0 0.0
        %3509 = vmatpush1.msra.mxu0 0.0
        %3510 = vmatprep.subr.mxu0 0.0
        %3511 = vmatpush1.msra.mxu0 0.0
        %3512 = vmatprep.subr.mxu0 0.0
        %3513 = vmatpush1.msra.mxu0 0.0
        %3514 = vmatprep.subr.mxu0 0.0
        %3515 = vmatpush1.msra.mxu0 %v3476
        %3516 = vmatprep.subr.mxu0 0.0
        %3517 = vmatpush1.msra.mxu0 %v3475
        %3518 = vmatprep.subr.mxu0 0.0
        %3519 = vmatpush1.msra.mxu0 %v3474
        %3520 = vmatprep.subr.mxu0 0.0
        %3521 = vmatpush1.msra.mxu0 %v3473
        %3522 = vmatprep.subr.mxu0 0.0
        %3523 = vmatpush2.msra.mxu0 0.0
        %3524 = vmatprep.subr.mxu0 0.0
        %3525 = vmatpush2.msra.mxu0 0.0
        %3526 = vmatprep.subr.mxu0 0.0
        %3527 = vmatpush2.msra.mxu0 0.0
        %3528 = vmatprep.subr.mxu0 0.0
        %3529 = vmatpush2.msra.mxu0 0.0
        %3530 = vmatprep.subr.mxu0 0.0
        %3531 = vmatpush2.msra.mxu0 0.0
        %3532 = vmatprep.subr.mxu0 0.0
        %3533 = vmatpush2.msra.mxu0 0.0
        %3534 = vmatprep.subr.mxu0 0.0
        %3535 = vmatpush2.msra.mxu0 0.0
        %3536 = vmatprep.subr.mxu0 0.0
        %3537 = vmatpush2.msra.mxu0 0.0
        %3538 = vmatprep.subr.mxu0 0.0
        %3539 = vmatpush2.msra.mxu0 0.0
        %3540 = vmatprep.subr.mxu0 0.0
        %3541 = vmatpush2.msra.mxu0 0.0
        %3542 = vmatprep.subr.mxu0 0.0
        %3543 = vmatpush2.msra.mxu0 0.0
        %3544 = vmatprep.subr.mxu0 0.0
        %3545 = vmatpush2.msra.mxu0 0.0
        %3546 = vmatprep.subr.mxu0 0.0
        %3547 = vmatpush2.msra.mxu0 0.0
        %3548 = vmatprep.subr.mxu0 0.0
        %3549 = vmatpush2.msra.mxu0 0.0
        %3550 = vmatprep.subr.mxu0 0.0
        %3551 = vmatpush2.msra.mxu0 0.0
        %3552 = vmatprep.subr.mxu0 0.0
        %3553 = vmatpush2.msra.mxu0 0.0
        %3554 = vmatprep.mubr.f32.mxu0 0.0
        %3555 = vmatmul.mubr.f32.gmra.mxu0 %v3485
        %v3556 = vpop.f32.mrf.mxu0
        %v3557 = vadd.f32 %v3482, %v3556
        %v3558 = vpop.f32.mrf.mxu0
        %3559 = vmatprep.mubr.f32.mxu0 0.0
        %3560 = vmatmul.mubr.f32.gmra.mxu0 %v3488
        %v3561 = vpop.f32.mrf.mxu0
        %v3562 = vadd.f32 %v3482, %v3561
        %v3563 = vpop.f32.mrf.mxu0
        %3564 = vdwg.mxu0
        %3565 = vmax.xlane.f32.xlu0 %v3557
        %v3566 = vpop.xlane.xlu0 %3565
        %3567 = vmax.xlane.f32.xlu0 %v3562
        %v3568 = vpop.xlane.xlu0 %3567
        %v3569 = vsub.f32 %v3557, %v3566
        %v3570 = vsub.f32 %v3562, %v3568
        %v3571 = vmul.f32 %v3569, 1.442695
        %v3572 = vpow.pop %v3571
        %v3573 = vmul.f32 %v3570, 1.442695
        %v3574 = vpow.pop %v3573
        %3575 = vadd.xlane.f32.xlu0 %v3572
        %v3576 = vpop.xlane.xlu0 %3575
        %3577 = vadd.xlane.f32.xlu0 %v3574
        %v3578 = vpop.xlane.xlu0 %3577
        %v3579 = vlog2.pop %v3576
        %v3580 = vmul.f32 %v3579, 0.6931472
        %v3581 = vlog2.pop %v3578
        %v3582 = vmul.f32 %v3581, 0.6931472
        %v3583 = vsub.f32 %v3569, %v3580
        %v3584 = vsub.f32 %v3570, %v3582
        %3585 = vst [vmem:[%s623] sm:$0xff] %v3583
        %3586 = vst [vmem:[%s623 + $0x8] sm:$0xff] %v3584
        %s3587 = sand.u32 %s467, 1
        %s3588 = scalar_lea.sflag [#allocation3], %s3587
        %s3589 = sand.u32 %s467, 1
        %s3590 = smul.addr %s3589, 16
        %s3591 = scalar_lea.vmem [#allocation2], %s3590
        // Predicated region
        $region101: #{forward.1} parent=99 // pred_check
          %p3592 = pneg %p477
        $region102: #{forward.1} parent=99 // pred_check_branch
          %3594 = sbr.rel (%p3592) target = $region104
        $region103: #{forward.1} parent=99 // pred_region
          %s3595 = smul.u32 2, %s34
          %s3597 = ssub.s32 256, 256
          %3598 = vsyncadd %s3588, %s3597
          %s3599 = smul.addr %s3595, 128
          %s3600 = scalar_lea.hbm %s20, %s3599
          %s3601 = sshll.u32 %s3591, 4
          %s3602 = int_to_ptr.vmem [resolvable:$true] %s3601
          %3607 = dma.vmem_to_hbm [thread:$0]  %s3602, 256, %s3600, %s3588, 128, 128, 8
        $region104: #{forward.1} parent=99 // pred_fallthru
          _
      $region100: #{forward.1} parent=5 // pred_fallthru
        _
      %p3608 = scmp.le.s32.totalorder 2, %s29
      // Predicated region
      $region105: #{forward.1} parent=5 // pred_check
        %p3609 = pneg %p3608
      $region106: #{forward.1} parent=5 // pred_check_branch
        %3611 = sbr.rel (%p3609) target = $region108
      $region107: #{forward.1} parent=5 // pred_region
        %s3612 = ssub.s32 %s29, 2
        // Predicated region
        $region109: #{forward.1} parent=107 // pred_check
          %p3613 = pneg %p483
        $region110: #{forward.1} parent=107 // pred_check_branch
          %3615 = sbr.rel (%p3613) target = $region112
        $region111: #{forward.1} parent=107 // pred_region
          %s3616 = sand.u32 %s468, 1
          %s3617 = scalar_lea.sflag [#allocation3], %s3616
          %s3618 = sand.u32 %s468, 1
          %s3619 = smul.addr %s3618, 16
          %s3620 = scalar_lea.vmem [#allocation2], %s3619
          %3621 = dma.done %s3617, 256
        $region112: #{forward.1} parent=107 // pred_fallthru
          _
      $region108: #{forward.1} parent=5 // pred_fallthru
        _
    $region6: #{forward.1} parent=1 // loop_footer
      %s33 = sadd.s32 1, %s29
    $region7: #{forward.1} parent=1 // loop_footer_branch
      %28 = sbr.rel target = $region3
    $region8: #{forward.1} parent=1 // loop_exit
      _
    %3622 = vsyncpa [#allocation3], 1
    %s3623 = scalar_lea.sflag [#allocation3], 1
    %3624 = vsyncpa %s3623, 1

</llo_original>
